<compile_context>
chip_gen: v6e
topology: v6e:2x2x1
jax: 0.10.0
libtpu: 0.0.40
codegen_flags: <defaults>
</compile_context>

<pallas_src>
import functools

import numpy as np

import jax
import jax.numpy as jnp
from jax.experimental import pallas as pl
from jax.experimental.pallas import tpu as pltpu

_M0 = 24      # zero margin (rows) above/below the padded conv2 input grid
_PG = 8       # padded conv2 input grid is 8x8 = 64 rows per image
_CP = 128     # channel lane padding


# --------------------------- host-side constant tables ---------------------------

@functools.lru_cache(maxsize=None)
def _conv1_patch_indices(C, H, W):
    """Index table for the conv1 im2col gather.

    Rows are ordered (pool-phase t=dy*2+dx, image b, pooled position py*4+px);
    columns follow PyTorch's (c, i, j) weight flatten order.
    """
    idx = np.zeros((4, 16, C * 144), np.int32)
    for dy in range(2):
        for dx in range(2):
            t = dy * 2 + dx
            for py in range(4):
                for px in range(4):
                    r = py * 4 + px
                    oy, ox = 2 * py + dy, 2 * px + dx      # conv1 output position
                    k = 0
                    for c in range(C):
                        for i in range(12):
                            for j in range(12):
                                idx[t, r, k] = (c * H + (2 * oy + i)) * W + (2 * ox + j)
                                k += 1
    return idx


# --------------------------------- Pallas kernel ---------------------------------

def _cnn_kernel(patches_ref, w1_ref, b1_ref, w2_ref, b2_ref,
                wfc1_hbm, bfc1_ref, wfc2_hbm, bfc2_ref,
                out_ref, pad_ref, padw_ref, wfc1_vmem, wfc2_vmem, dma_sem, *, batch):
    B = batch
    n = B * 16                 # pooled conv1 positions (4x4 per image)
    R = B * _PG * _PG          # rows of the padded conv2 grid (8x8 per image)
    Wrows = R + 16             # rows of the K-packed conv2 LHS buffer

    # Kick off the fc-weight DMAs immediately; they overlap with conv compute.
    cp1 = pltpu.make_async_copy(wfc1_hbm, wfc1_vmem, dma_sem.at[0])
    cp2 = pltpu.make_async_copy(wfc2_hbm, wfc2_vmem, dma_sem.at[1])
    cp1.start()
    cp2.start()

    # conv1 + bias + ReLU; the four 2x2-pool phases are stacked along rows.
    y1 = jnp.dot(patches_ref[...], w1_ref[...], preferred_element_type=jnp.float32)
    y1 = jnp.maximum(y1 + b1_ref[...], 0.0)                          # [4n, 128] f32

    # MaxPool1 == max over the four phase row-blocks.
    p1 = jnp.maximum(jnp.maximum(y1[0:n], y1[n:2 * n]),
                     jnp.maximum(y1[2 * n:3 * n], y1[3 * n:4 * n]))  # [n, 128] f32

    # Scatter pooled rows into the zero-padded 8x8 spatial grid: direct row
    # writes (4*B copies of 4 consecutive rows) instead of an O(B^2) 0/1 matmul.
    pad_ref[...] = jnp.zeros_like(pad_ref)
    for b in range(B):
        for py in range(4):
            dst = b * 64 + 8 * py + 42        # _M0 + b*64 + (py+2)*8 + 2
            src = b * 16 + 4 * py
            pad_ref[dst:dst + 4, :] = p1[src:src + 4, :]

    # Build the K-packed conv2 LHS: padw[t, 25*i + c] = pad[t + 8*i, c]
    # (5 kh-taps x 25 cin = 125 dense K lanes).  Lane placement is done with
    # pltpu.roll on whole slabs (lanes >= 25 of pad are exactly zero).
    packed = pad_ref[0:Wrows, :]
    for i in range(1, 5):
        packed = packed + pltpu.roll(pad_ref[8 * i:8 * i + Wrows, :],
                                     shift=25 * i, axis=1)
    padw_ref[...] = packed.astype(jnp.bfloat16)

    # conv2 (5x5, pad=2): 5 matmuls, one per kw tap, each with dense 125-lane K.
    acc = jnp.dot(padw_ref[6:6 + R, :], w2_ref[0],
                  preferred_element_type=jnp.float32)
    for j in range(1, 5):
        acc = acc + jnp.dot(padw_ref[6 + j:6 + j + R, :], w2_ref[j],
                            preferred_element_type=jnp.float32)
    y2 = jnp.maximum(acc + b2_ref[...], 0.0)                         # [R, 128] f32

    # MaxPool2 via strided row reads (reuse pad_ref as the y2 store).
    pad_ref[0:R, :] = y2
    slabs = []
    for qy in range(2):
        for qx in range(2):
            base = 16 * qy + 2 * qx + 18
            w = None
            for off in (0, 1, 8, 9):          # the 2x2 window positions
                v = pad_ref[pl.ds(base + off, B, stride=64), :]      # [B, 128]
                w = v if w is None else jnp.maximum(w, v)
            slabs.append(w)
    pooled_cat = jnp.concatenate(slabs, axis=1)                      # [B, 512] f32

    # fc1 + ReLU: single matmul; the NCHW flatten is folded into the wfc1 layout.
    cp1.wait()
    h = jnp.dot(pooled_cat.astype(jnp.bfloat16), wfc1_vmem[...],
                preferred_element_type=jnp.float32)
    h = jnp.maximum(h + bfc1_ref[...], 0.0)                          # [B, 1024]

    # fc2 + LogSoftmax epilogue (padded class lanes carry a -1e30 f32 bias, so
    # the max/sum reductions over the full 128 lanes are exact for the real ones).
    cp2.wait()
    logits = jnp.dot(h.astype(jnp.bfloat16), wfc2_vmem[...],
                     preferred_element_type=jnp.float32)
    logits = logits + bfc2_ref[...]
    m = jnp.max(logits, axis=-1, keepdims=True)
    shifted = logits - m
    lse = jnp.log(jnp.sum(jnp.exp(shifted), axis=-1, keepdims=True))
    out_ref[...] = (shifted - lse).astype(out_ref.dtype)


# ------------------------------ parameter handling -------------------------------

def init_params(key, n_channels, classes):
    """Parameters in PyTorch layouts (Conv: [out,in,kh,kw], Linear: [out,in])."""
    ks = jax.random.split(key, 8)

    def u(k, shape, fan_in):
        bound = 1.0 / np.sqrt(fan_in)
        return jax.random.uniform(k, shape, jnp.float32, -bound, bound)

    return {
        "conv1_w": u(ks[0], (25, n_channels, 12, 12), n_channels * 144),
        "conv1_b": u(ks[1], (25,), n_channels * 144),
        "conv2_w": u(ks[2], (64, 25, 5, 5), 25 * 25),
        "conv2_b": u(ks[3], (64,), 25 * 25),
        "fc1_w":   u(ks[4], (1024, 64 * 2 * 2), 256),
        "fc1_b":   u(ks[5], (1024,), 256),
        "fc2_w":   u(ks[6], (classes, 1024), 1024),
        "fc2_b":   u(ks[7], (classes,), 1024),
    }


def pack_params(params, n_channels, classes):
    """One-time repack of PyTorch-layout weights into lane-dense bf16 operands."""
    assert classes <= 128
    C = n_channels
    # conv1: [25, C, 12, 12] -> [C*144, 128]   (k = c*144 + i*12 + j)
    w1 = params["conv1_w"].reshape(25, C * 144).T
    w1k = jnp.zeros((C * 144, _CP), jnp.float32).at[:, :25].set(w1)
    b1k = jnp.zeros((1, _CP), jnp.float32).at[0, :25].set(params["conv1_b"])
    # conv2: [64, 25, 5(kh=i), 5(kw=j)] -> [5 (j), 128 (25*i + cin), 128 (cout)]
    w2t = jnp.transpose(params["conv2_w"], (3, 2, 1, 0)).reshape(5, 125, 64)
    w2k = jnp.zeros((5, _CP, _CP), jnp.float32).at[:, :125, :64].set(w2t)
    b2k = jnp.zeros((1, _CP), jnp.float32).at[0, :64].set(params["conv2_b"])
    # fc1: [1024, 256] with in-index ch*4 + q  ->  [512 (128*q + ch), 1024]
    wfc1 = jnp.transpose(params["fc1_w"].T.reshape(64, 4, 1024), (1, 0, 2))
    wfc1k = jnp.zeros((4, _CP, 1024), jnp.float32).at[:, :64, :].set(wfc1)
    wfc1k = wfc1k.reshape(4 * _CP, 1024)
    bfc1k = params["fc1_b"].reshape(1, 1024)
    # fc2: [classes, 1024] -> [1024, 128]; padded class lanes get a -1e30 f32 bias.
    wfc2k = jnp.zeros((1024, _CP), jnp.float32).at[:, :classes].set(params["fc2_w"].T)
    bfc2k = jnp.full((1, _CP), -1e30, jnp.float32).at[0, :classes].set(params["fc2_b"])
    return {"w1": w1k.astype(jnp.bfloat16), "b1": b1k,
            "w2": w2k.astype(jnp.bfloat16), "b2": b2k,
            "wfc1": wfc1k.astype(jnp.bfloat16), "bfc1": bfc1k,
            "wfc2": wfc2k.astype(jnp.bfloat16), "bfc2": bfc2k}


# ---------------------------------- forward pass ----------------------------------

@functools.partial(jax.jit, static_argnames=("classes",))
def cnn_forward(packed, x, *, classes):
    B, C, H, W = x.shape
    assert H == 28 and W == 28, "this CNN (fc1 = Linear(64*2*2, 1024)) implies 28x28 inputs"
    # conv1 im2col: one gather with a precomputed index table, rows grouped by
    # pooling phase so MaxPool1 becomes a row-block max inside the kernel.
    idx = _conv1_patch_indices(C, H, W)                      # [4, 16, C*144]
    patches = x.reshape(B, C * H * W)[:, idx]                # [B, 4, 16, C*144]
    patches = jnp.transpose(patches, (1, 0, 2, 3)).reshape(4 * B * 16, C * 144)
    patches = patches.astype(jnp.bfloat16)

    kernel = functools.partial(_cnn_kernel, batch=B)
    out = pl.pallas_call(
        kernel,
        out_shape=jax.ShapeDtypeStruct((B, _CP), jnp.float32),
        grid=(1,),
        in_specs=[
            pl.BlockSpec(patches.shape, lambda i: (0, 0)),
            pl.BlockSpec(packed["w1"].shape, lambda i: (0, 0)),
            pl.BlockSpec(packed["b1"].shape, lambda i: (0, 0)),
            pl.BlockSpec(packed["w2"].shape, lambda i: (0, 0, 0)),
            pl.BlockSpec(packed["b2"].shape, lambda i: (0, 0)),
            pl.BlockSpec(memory_space=pl.ANY),               # wfc1: manual DMA
            pl.BlockSpec(packed["bfc1"].shape, lambda i: (0, 0)),
            pl.BlockSpec(memory_space=pl.ANY),               # wfc2: manual DMA
            pl.BlockSpec(packed["bfc2"].shape, lambda i: (0, 0)),
        ],
        out_specs=pl.BlockSpec((B, _CP), lambda i: (0, 0)),
        scratch_shapes=[
            pltpu.VMEM((B * 64 + 2 * _M0, _CP), jnp.float32),   # padded grid / y2 store
            pltpu.VMEM((B * 64 + 16, _CP), jnp.bfloat16),       # K-packed conv2 LHS
            pltpu.VMEM((4 * _CP, 1024), jnp.bfloat16),          # fc1 weights (DMA dst)
            pltpu.VMEM((1024, _CP), jnp.bfloat16),              # fc2 weights (DMA dst)
            pltpu.SemaphoreType.DMA((2,)),
        ],
        compiler_params=pltpu.CompilerParams(dimension_semantics=("arbitrary",)),
    )(patches, packed["w1"], packed["b1"], packed["w2"], packed["b2"],
      packed["wfc1"], packed["bfc1"], packed["wfc2"], packed["bfc2"])

    # Drop the zero-padded class lanes (they hold -inf-ish log-probs).
    return out[:, :classes]


if __name__ == "__main__":
    key = jax.random.PRNGKey(0)
    k_x, k_p = jax.random.split(key)

    n_channels, classes, batch = 1, 10, 2
    # 28x28 input is what fc1 = Linear(64*2*2, 1024) implies for this stack.
    x = jax.random.normal(k_x, (batch, n_channels, 28, 28), jnp.float32)
    params = init_params(k_p, n_channels, classes)
    packed = pack_params(params, n_channels, classes)

    out = cnn_forward(packed, x, classes=classes)
    jax.block_until_ready(out)
    assert out.shape == (batch, classes)
    assert bool(jnp.all(jnp.isfinite(out)))
    # LogSoftmax rows must exponentiate to a proper distribution.
    assert bool(jnp.allclose(jnp.exp(out).sum(-1), 1.0, atol=1e-3))
    print("KERNEL_OK")
</pallas_src>

<mosaic_0001>
module attributes {stable_mosaic.version = 11 : i64} {
  func.func @_cnn_kernel(%arg0: i32, %arg1: memref<128x144xbf16, #tpu.memory_space<vmem>>, %arg2: memref<144x128xbf16, #tpu.memory_space<vmem>>, %arg3: memref<1x128xf32, #tpu.memory_space<vmem>>, %arg4: memref<5x128x128xbf16, #tpu.memory_space<vmem>>, %arg5: memref<1x128xf32, #tpu.memory_space<vmem>>, %arg6: memref<512x1024xbf16, #tpu.memory_space<any>>, %arg7: memref<1x1024xf32, #tpu.memory_space<vmem>>, %arg8: memref<1024x128xbf16, #tpu.memory_space<any>>, %arg9: memref<1x128xf32, #tpu.memory_space<vmem>>, %arg10: memref<2x128xf32, #tpu.memory_space<vmem>>, %arg11: memref<176x128xf32, #tpu.memory_space<vmem>>, %arg12: memref<144x128xbf16, #tpu.memory_space<vmem>>, %arg13: memref<512x1024xbf16, #tpu.memory_space<vmem>>, %arg14: memref<1024x128xbf16, #tpu.memory_space<vmem>>, %arg15: memref<2x!tpu.dma_semaphore, #tpu.memory_space<semaphore_mem>>) attributes {dimension_semantics = [#tpu.dimension_semantics<arbitrary>], iteration_bounds = array<i64: 1>, scalar_prefetch = 0 : i64, scratch_operands = 5 : i64, tpu.core_type = #tpu.core_type<tc>, window_params = [{pipeline_mode = #tpu.pipeline_mode<synchronous>, transform_indices = @transform_0, window_bounds = array<i64: 128, 144>}, {pipeline_mode = #tpu.pipeline_mode<synchronous>, transform_indices = @transform_1, window_bounds = array<i64: 144, 128>}, {pipeline_mode = #tpu.pipeline_mode<synchronous>, transform_indices = @transform_2, window_bounds = array<i64: 1, 128>}, {pipeline_mode = #tpu.pipeline_mode<synchronous>, transform_indices = @transform_3, window_bounds = array<i64: 5, 128, 128>}, {pipeline_mode = #tpu.pipeline_mode<synchronous>, transform_indices = @transform_4, window_bounds = array<i64: 1, 128>}, {}, {pipeline_mode = #tpu.pipeline_mode<synchronous>, transform_indices = @transform_6, window_bounds = array<i64: 1, 1024>}, {}, {pipeline_mode = #tpu.pipeline_mode<synchronous>, transform_indices = @transform_8, window_bounds = array<i64: 1, 128>}, {pipeline_mode = #tpu.pipeline_mode<synchronous>, transform_indices = @transform_9, window_bounds = array<i64: 2, 128>}]} {
    %c0_i32 = arith.constant 0 : i32
    %0 = tpu.memref_slice %arg15[%c0_i32] : memref<2x!tpu.dma_semaphore, #tpu.memory_space<semaphore_mem>> -> memref<1x!tpu.dma_semaphore, #tpu.memory_space<semaphore_mem>>
    %1 = tpu.memref_squeeze %0 : memref<1x!tpu.dma_semaphore, #tpu.memory_space<semaphore_mem>> -> memref<!tpu.dma_semaphore, #tpu.memory_space<semaphore_mem>>
    tpu.enqueue_dma source(%arg6 : memref<512x1024xbf16, #tpu.memory_space<any>>) target(%arg13 : memref<512x1024xbf16, #tpu.memory_space<vmem>>) target_semaphore(%1 : memref<!tpu.dma_semaphore, #tpu.memory_space<semaphore_mem>>)
    %c1_i32 = arith.constant 1 : i32
    %2 = tpu.memref_slice %arg15[%c1_i32] : memref<2x!tpu.dma_semaphore, #tpu.memory_space<semaphore_mem>> -> memref<1x!tpu.dma_semaphore, #tpu.memory_space<semaphore_mem>>
    %3 = tpu.memref_squeeze %2 : memref<1x!tpu.dma_semaphore, #tpu.memory_space<semaphore_mem>> -> memref<!tpu.dma_semaphore, #tpu.memory_space<semaphore_mem>>
    tpu.enqueue_dma source(%arg8 : memref<1024x128xbf16, #tpu.memory_space<any>>) target(%arg14 : memref<1024x128xbf16, #tpu.memory_space<vmem>>) target_semaphore(%3 : memref<!tpu.dma_semaphore, #tpu.memory_space<semaphore_mem>>)
    %c0 = arith.constant 0 : index
    %c0_0 = arith.constant 0 : index
    %4 = vector.load %arg1[%c0, %c0_0] : memref<128x144xbf16, #tpu.memory_space<vmem>>, vector<128x144xbf16>
    %c0_1 = arith.constant 0 : index
    %c0_2 = arith.constant 0 : index
    %5 = vector.load %arg2[%c0_1, %c0_2] : memref<144x128xbf16, #tpu.memory_space<vmem>>, vector<144x128xbf16>
    %cst = arith.constant dense<0.000000e+00> : vector<128x128xf32>
    %6 = tpu.matmul %4, %5, %cst {dimension_numbers = #tpu.dot_dimension_numbers<[1], [0], [0], [1], [0, 0, 1, 1], [], []>} : vector<128x144xbf16>, vector<144x128xbf16>, vector<128x128xf32> -> vector<128x128xf32>
    %c0_3 = arith.constant 0 : index
    %c0_4 = arith.constant 0 : index
    %7 = vector.load %arg3[%c0_3, %c0_4] : memref<1x128xf32, #tpu.memory_space<vmem>>, vector<1x128xf32>
    %8 = vector.broadcast %7 : vector<1x128xf32> to vector<128x128xf32>
    %9 = arith.addf %6, %8 : vector<128x128xf32>
    %cst_5 = arith.constant 0.000000e+00 : f32
    %10 = vector.broadcast %cst_5 : f32 to vector<128x128xf32>
    %11 = arith.maximumf %9, %10 : vector<128x128xf32>
    %12 = vector.extract_strided_slice %11 {offsets = [0, 0], sizes = [32, 128], strides = [1, 1]} : vector<128x128xf32> to vector<32x128xf32>
    %13 = vector.extract_strided_slice %11 {offsets = [32, 0], sizes = [32, 128], strides = [1, 1]} : vector<128x128xf32> to vector<32x128xf32>
    %14 = arith.maximumf %12, %13 : vector<32x128xf32>
    %15 = vector.extract_strided_slice %11 {offsets = [64, 0], sizes = [32, 128], strides = [1, 1]} : vector<128x128xf32> to vector<32x128xf32>
    %16 = vector.extract_strided_slice %11 {offsets = [96, 0], sizes = [32, 128], strides = [1, 1]} : vector<128x128xf32> to vector<32x128xf32>
    %17 = arith.maximumf %15, %16 : vector<32x128xf32>
    %18 = arith.maximumf %14, %17 : vector<32x128xf32>
    %cst_6 = arith.constant 0.000000e+00 : f32
    %19 = vector.broadcast %cst_6 : f32 to vector<176x128xf32>
    %c0_7 = arith.constant 0 : index
    %c0_8 = arith.constant 0 : index
    %20 = vector.load %arg11[%c0_7, %c0_8] : memref<176x128xf32, #tpu.memory_space<vmem>>, vector<176x128xf32>
    tpu.vector_store %arg11[%c0_7, %c0_8], %19 {strides = array<i32>} : memref<176x128xf32, #tpu.memory_space<vmem>>, vector<176x128xf32>,
    %21 = vector.extract_strided_slice %18 {offsets = [0, 0], sizes = [4, 128], strides = [1, 1]} : vector<32x128xf32> to vector<4x128xf32>
    %c42 = arith.constant 42 : index
    %c0_9 = arith.constant 0 : index
    %22 = vector.load %arg11[%c42, %c0_9] : memref<176x128xf32, #tpu.memory_space<vmem>>, vector<4x128xf32>
    tpu.vector_store %arg11[%c42, %c0_9], %21 {strides = array<i32>} : memref<176x128xf32, #tpu.memory_space<vmem>>, vector<4x128xf32>,
    %23 = vector.extract_strided_slice %18 {offsets = [4, 0], sizes = [4, 128], strides = [1, 1]} : vector<32x128xf32> to vector<4x128xf32>
    %c50 = arith.constant 50 : index
    %c0_10 = arith.constant 0 : index
    %24 = vector.load %arg11[%c50, %c0_10] : memref<176x128xf32, #tpu.memory_space<vmem>>, vector<4x128xf32>
    tpu.vector_store %arg11[%c50, %c0_10], %23 {strides = array<i32>} : memref<176x128xf32, #tpu.memory_space<vmem>>, vector<4x128xf32>,
    %25 = vector.extract_strided_slice %18 {offsets = [8, 0], sizes = [4, 128], strides = [1, 1]} : vector<32x128xf32> to vector<4x128xf32>
    %c58 = arith.constant 58 : index
    %c0_11 = arith.constant 0 : index
    %26 = vector.load %arg11[%c58, %c0_11] : memref<176x128xf32, #tpu.memory_space<vmem>>, vector<4x128xf32>
    tpu.vector_store %arg11[%c58, %c0_11], %25 {strides = array<i32>} : memref<176x128xf32, #tpu.memory_space<vmem>>, vector<4x128xf32>,
    %27 = vector.extract_strided_slice %18 {offsets = [12, 0], sizes = [4, 128], strides = [1, 1]} : vector<32x128xf32> to vector<4x128xf32>
    %c66 = arith.constant 66 : index
    %c0_12 = arith.constant 0 : index
    %28 = vector.load %arg11[%c66, %c0_12] : memref<176x128xf32, #tpu.memory_space<vmem>>, vector<4x128xf32>
    tpu.vector_store %arg11[%c66, %c0_12], %27 {strides = array<i32>} : memref<176x128xf32, #tpu.memory_space<vmem>>, vector<4x128xf32>,
    %29 = vector.extract_strided_slice %18 {offsets = [16, 0], sizes = [4, 128], strides = [1, 1]} : vector<32x128xf32> to vector<4x128xf32>
    %c106 = arith.constant 106 : index
    %c0_13 = arith.constant 0 : index
    %30 = vector.load %arg11[%c106, %c0_13] : memref<176x128xf32, #tpu.memory_space<vmem>>, vector<4x128xf32>
    tpu.vector_store %arg11[%c106, %c0_13], %29 {strides = array<i32>} : memref<176x128xf32, #tpu.memory_space<vmem>>, vector<4x128xf32>,
    %31 = vector.extract_strided_slice %18 {offsets = [20, 0], sizes = [4, 128], strides = [1, 1]} : vector<32x128xf32> to vector<4x128xf32>
    %c114 = arith.constant 114 : index
    %c0_14 = arith.constant 0 : index
    %32 = vector.load %arg11[%c114, %c0_14] : memref<176x128xf32, #tpu.memory_space<vmem>>, vector<4x128xf32>
    tpu.vector_store %arg11[%c114, %c0_14], %31 {strides = array<i32>} : memref<176x128xf32, #tpu.memory_space<vmem>>, vector<4x128xf32>,
    %33 = vector.extract_strided_slice %18 {offsets = [24, 0], sizes = [4, 128], strides = [1, 1]} : vector<32x128xf32> to vector<4x128xf32>
    %c122 = arith.constant 122 : index
    %c0_15 = arith.constant 0 : index
    %34 = vector.load %arg11[%c122, %c0_15] : memref<176x128xf32, #tpu.memory_space<vmem>>, vector<4x128xf32>
    tpu.vector_store %arg11[%c122, %c0_15], %33 {strides = array<i32>} : memref<176x128xf32, #tpu.memory_space<vmem>>, vector<4x128xf32>,
    %35 = vector.extract_strided_slice %18 {offsets = [28, 0], sizes = [4, 128], strides = [1, 1]} : vector<32x128xf32> to vector<4x128xf32>
    %c130 = arith.constant 130 : index
    %c0_16 = arith.constant 0 : index
    %36 = vector.load %arg11[%c130, %c0_16] : memref<176x128xf32, #tpu.memory_space<vmem>>, vector<4x128xf32>
    tpu.vector_store %arg11[%c130, %c0_16], %35 {strides = array<i32>} : memref<176x128xf32, #tpu.memory_space<vmem>>, vector<4x128xf32>,
    %c0_17 = arith.constant 0 : index
    %c0_18 = arith.constant 0 : index
    %37 = vector.load %arg11[%c0_17, %c0_18] : memref<176x128xf32, #tpu.memory_space<vmem>>, vector<144x128xf32>
    %c8 = arith.constant 8 : index
    %c0_19 = arith.constant 0 : index
    %38 = vector.load %arg11[%c8, %c0_19] : memref<176x128xf32, #tpu.memory_space<vmem>>, vector<144x128xf32>
    %c25_i32 = arith.constant 25 : i32
    %39 = tpu.dynamic_rotate %38 by %c25_i32 dim 1 : vector<144x128xf32>, i32 -> vector<144x128xf32>
    %40 = arith.addf %37, %39 : vector<144x128xf32>
    %c16 = arith.constant 16 : index
    %c0_20 = arith.constant 0 : index
    %41 = vector.load %arg11[%c16, %c0_20] : memref<176x128xf32, #tpu.memory_space<vmem>>, vector<144x128xf32>
    %c50_i32 = arith.constant 50 : i32
    %42 = tpu.dynamic_rotate %41 by %c50_i32 dim 1 : vector<144x128xf32>, i32 -> vector<144x128xf32>
    %43 = arith.addf %40, %42 : vector<144x128xf32>
    %c24 = arith.constant 24 : index
    %c0_21 = arith.constant 0 : index
    %44 = vector.load %arg11[%c24, %c0_21] : memref<176x128xf32, #tpu.memory_space<vmem>>, vector<144x128xf32>
    %c75_i32 = arith.constant 75 : i32
    %45 = tpu.dynamic_rotate %44 by %c75_i32 dim 1 : vector<144x128xf32>, i32 -> vector<144x128xf32>
    %46 = arith.addf %43, %45 : vector<144x128xf32>
    %c32 = arith.constant 32 : index
    %c0_22 = arith.constant 0 : index
    %47 = vector.load %arg11[%c32, %c0_22] : memref<176x128xf32, #tpu.memory_space<vmem>>, vector<144x128xf32>
    %c100_i32 = arith.constant 100 : i32
    %48 = tpu.dynamic_rotate %47 by %c100_i32 dim 1 : vector<144x128xf32>, i32 -> vector<144x128xf32>
    %49 = arith.addf %46, %48 : vector<144x128xf32>
    %50 = arith.truncf %49 : vector<144x128xf32> to vector<144x128xbf16>
    %c0_23 = arith.constant 0 : index
    %c0_24 = arith.constant 0 : index
    %51 = vector.load %arg12[%c0_23, %c0_24] : memref<144x128xbf16, #tpu.memory_space<vmem>>, vector<144x128xbf16>
    tpu.vector_store %arg12[%c0_23, %c0_24], %50 {strides = array<i32>} : memref<144x128xbf16, #tpu.memory_space<vmem>>, vector<144x128xbf16>,
    %c6 = arith.constant 6 : index
    %c0_25 = arith.constant 0 : index
    %52 = vector.load %arg12[%c6, %c0_25] : memref<144x128xbf16, #tpu.memory_space<vmem>>, vector<128x128xbf16>
    %c0_26 = arith.constant 0 : index
    %c0_27 = arith.constant 0 : index
    %c0_28 = arith.constant 0 : index
    %53 = vector.load %arg4[%c0_26, %c0_27, %c0_28] : memref<5x128x128xbf16, #tpu.memory_space<vmem>>, vector<1x128x128xbf16>
    %54 = vector.shape_cast %53 : vector<1x128x128xbf16> to vector<128x128xbf16>
    %cst_29 = arith.constant dense<0.000000e+00> : vector<128x128xf32>
    %55 = tpu.matmul %52, %54, %cst_29 {dimension_numbers = #tpu.dot_dimension_numbers<[1], [0], [0], [1], [0, 0, 1, 1], [], []>} : vector<128x128xbf16>, vector<128x128xbf16>, vector<128x128xf32> -> vector<128x128xf32>
    %c7 = arith.constant 7 : index
    %c0_30 = arith.constant 0 : index
    %56 = vector.load %arg12[%c7, %c0_30] : memref<144x128xbf16, #tpu.memory_space<vmem>>, vector<128x128xbf16>
    %c1 = arith.constant 1 : index
    %c0_31 = arith.constant 0 : index
    %c0_32 = arith.constant 0 : index
    %57 = vector.load %arg4[%c1, %c0_31, %c0_32] : memref<5x128x128xbf16, #tpu.memory_space<vmem>>, vector<1x128x128xbf16>
    %58 = vector.shape_cast %57 : vector<1x128x128xbf16> to vector<128x128xbf16>
    %cst_33 = arith.constant dense<0.000000e+00> : vector<128x128xf32>
    %59 = tpu.matmul %56, %58, %cst_33 {dimension_numbers = #tpu.dot_dimension_numbers<[1], [0], [0], [1], [0, 0, 1, 1], [], []>} : vector<128x128xbf16>, vector<128x128xbf16>, vector<128x128xf32> -> vector<128x128xf32>
    %60 = arith.addf %55, %59 : vector<128x128xf32>
    %c8_34 = arith.constant 8 : index
    %c0_35 = arith.constant 0 : index
    %61 = vector.load %arg12[%c8_34, %c0_35] : memref<144x128xbf16, #tpu.memory_space<vmem>>, vector<128x128xbf16>
    %c2 = arith.constant 2 : index
    %c0_36 = arith.constant 0 : index
    %c0_37 = arith.constant 0 : index
    %62 = vector.load %arg4[%c2, %c0_36, %c0_37] : memref<5x128x128xbf16, #tpu.memory_space<vmem>>, vector<1x128x128xbf16>
    %63 = vector.shape_cast %62 : vector<1x128x128xbf16> to vector<128x128xbf16>
    %cst_38 = arith.constant dense<0.000000e+00> : vector<128x128xf32>
    %64 = tpu.matmul %61, %63, %cst_38 {dimension_numbers = #tpu.dot_dimension_numbers<[1], [0], [0], [1], [0, 0, 1, 1], [], []>} : vector<128x128xbf16>, vector<128x128xbf16>, vector<128x128xf32> -> vector<128x128xf32>
    %65 = arith.addf %60, %64 : vector<128x128xf32>
    %c9 = arith.constant 9 : index
    %c0_39 = arith.constant 0 : index
    %66 = vector.load %arg12[%c9, %c0_39] : memref<144x128xbf16, #tpu.memory_space<vmem>>, vector<128x128xbf16>
    %c3 = arith.constant 3 : index
    %c0_40 = arith.constant 0 : index
    %c0_41 = arith.constant 0 : index
    %67 = vector.load %arg4[%c3, %c0_40, %c0_41] : memref<5x128x128xbf16, #tpu.memory_space<vmem>>, vector<1x128x128xbf16>
    %68 = vector.shape_cast %67 : vector<1x128x128xbf16> to vector<128x128xbf16>
    %cst_42 = arith.constant dense<0.000000e+00> : vector<128x128xf32>
    %69 = tpu.matmul %66, %68, %cst_42 {dimension_numbers = #tpu.dot_dimension_numbers<[1], [0], [0], [1], [0, 0, 1, 1], [], []>} : vector<128x128xbf16>, vector<128x128xbf16>, vector<128x128xf32> -> vector<128x128xf32>
    %70 = arith.addf %65, %69 : vector<128x128xf32>
    %c10 = arith.constant 10 : index
    %c0_43 = arith.constant 0 : index
    %71 = vector.load %arg12[%c10, %c0_43] : memref<144x128xbf16, #tpu.memory_space<vmem>>, vector<128x128xbf16>
    %c4 = arith.constant 4 : index
    %c0_44 = arith.constant 0 : index
    %c0_45 = arith.constant 0 : index
    %72 = vector.load %arg4[%c4, %c0_44, %c0_45] : memref<5x128x128xbf16, #tpu.memory_space<vmem>>, vector<1x128x128xbf16>
    %73 = vector.shape_cast %72 : vector<1x128x128xbf16> to vector<128x128xbf16>
    %cst_46 = arith.constant dense<0.000000e+00> : vector<128x128xf32>
    %74 = tpu.matmul %71, %73, %cst_46 {dimension_numbers = #tpu.dot_dimension_numbers<[1], [0], [0], [1], [0, 0, 1, 1], [], []>} : vector<128x128xbf16>, vector<128x128xbf16>, vector<128x128xf32> -> vector<128x128xf32>
    %75 = arith.addf %70, %74 : vector<128x128xf32>
    %c0_47 = arith.constant 0 : index
    %c0_48 = arith.constant 0 : index
    %76 = vector.load %arg5[%c0_47, %c0_48] : memref<1x128xf32, #tpu.memory_space<vmem>>, vector<1x128xf32>
    %77 = vector.broadcast %76 : vector<1x128xf32> to vector<128x128xf32>
    %78 = arith.addf %75, %77 : vector<128x128xf32>
    %cst_49 = arith.constant 0.000000e+00 : f32
    %79 = vector.broadcast %cst_49 : f32 to vector<128x128xf32>
    %80 = arith.maximumf %78, %79 : vector<128x128xf32>
    %c0_50 = arith.constant 0 : index
    %c0_51 = arith.constant 0 : index
    %81 = vector.load %arg11[%c0_50, %c0_51] : memref<176x128xf32, #tpu.memory_space<vmem>>, vector<128x128xf32>
    tpu.vector_store %arg11[%c0_50, %c0_51], %80 {strides = array<i32>} : memref<176x128xf32, #tpu.memory_space<vmem>>, vector<128x128xf32>,
    %c18 = arith.constant 18 : index
    %c0_52 = arith.constant 0 : index
    %82 = tpu.strided_load %arg11[%c18, %c0_52] {strides = array<i32: 64, 1>} : memref<176x128xf32, #tpu.memory_space<vmem>>, vector<2x128xf32>
    %c19 = arith.constant 19 : index
    %c0_53 = arith.constant 0 : index
    %83 = tpu.strided_load %arg11[%c19, %c0_53] {strides = array<i32: 64, 1>} : memref<176x128xf32, #tpu.memory_space<vmem>>, vector<2x128xf32>
    %84 = arith.maximumf %82, %83 : vector<2x128xf32>
    %c26 = arith.constant 26 : index
    %c0_54 = arith.constant 0 : index
    %85 = tpu.strided_load %arg11[%c26, %c0_54] {strides = array<i32: 64, 1>} : memref<176x128xf32, #tpu.memory_space<vmem>>, vector<2x128xf32>
    %86 = arith.maximumf %84, %85 : vector<2x128xf32>
    %c27 = arith.constant 27 : index
    %c0_55 = arith.constant 0 : index
    %87 = tpu.strided_load %arg11[%c27, %c0_55] {strides = array<i32: 64, 1>} : memref<176x128xf32, #tpu.memory_space<vmem>>, vector<2x128xf32>
    %88 = arith.maximumf %86, %87 : vector<2x128xf32>
    %c20 = arith.constant 20 : index
    %c0_56 = arith.constant 0 : index
    %89 = tpu.strided_load %arg11[%c20, %c0_56] {strides = array<i32: 64, 1>} : memref<176x128xf32, #tpu.memory_space<vmem>>, vector<2x128xf32>
    %c21 = arith.constant 21 : index
    %c0_57 = arith.constant 0 : index
    %90 = tpu.strided_load %arg11[%c21, %c0_57] {strides = array<i32: 64, 1>} : memref<176x128xf32, #tpu.memory_space<vmem>>, vector<2x128xf32>
    %91 = arith.maximumf %89, %90 : vector<2x128xf32>
    %c28 = arith.constant 28 : index
    %c0_58 = arith.constant 0 : index
    %92 = tpu.strided_load %arg11[%c28, %c0_58] {strides = array<i32: 64, 1>} : memref<176x128xf32, #tpu.memory_space<vmem>>, vector<2x128xf32>
    %93 = arith.maximumf %91, %92 : vector<2x128xf32>
    %c29 = arith.constant 29 : index
    %c0_59 = arith.constant 0 : index
    %94 = tpu.strided_load %arg11[%c29, %c0_59] {strides = array<i32: 64, 1>} : memref<176x128xf32, #tpu.memory_space<vmem>>, vector<2x128xf32>
    %95 = arith.maximumf %93, %94 : vector<2x128xf32>
    %c34 = arith.constant 34 : index
    %c0_60 = arith.constant 0 : index
    %96 = tpu.strided_load %arg11[%c34, %c0_60] {strides = array<i32: 64, 1>} : memref<176x128xf32, #tpu.memory_space<vmem>>, vector<2x128xf32>
    %c35 = arith.constant 35 : index
    %c0_61 = arith.constant 0 : index
    %97 = tpu.strided_load %arg11[%c35, %c0_61] {strides = array<i32: 64, 1>} : memref<176x128xf32, #tpu.memory_space<vmem>>, vector<2x128xf32>
    %98 = arith.maximumf %96, %97 : vector<2x128xf32>
    %c42_62 = arith.constant 42 : index
    %c0_63 = arith.constant 0 : index
    %99 = tpu.strided_load %arg11[%c42_62, %c0_63] {strides = array<i32: 64, 1>} : memref<176x128xf32, #tpu.memory_space<vmem>>, vector<2x128xf32>
    %100 = arith.maximumf %98, %99 : vector<2x128xf32>
    %c43 = arith.constant 43 : index
    %c0_64 = arith.constant 0 : index
    %101 = tpu.strided_load %arg11[%c43, %c0_64] {strides = array<i32: 64, 1>} : memref<176x128xf32, #tpu.memory_space<vmem>>, vector<2x128xf32>
    %102 = arith.maximumf %100, %101 : vector<2x128xf32>
    %c36 = arith.constant 36 : index
    %c0_65 = arith.constant 0 : index
    %103 = tpu.strided_load %arg11[%c36, %c0_65] {strides = array<i32: 64, 1>} : memref<176x128xf32, #tpu.memory_space<vmem>>, vector<2x128xf32>
    %c37 = arith.constant 37 : index
    %c0_66 = arith.constant 0 : index
    %104 = tpu.strided_load %arg11[%c37, %c0_66] {strides = array<i32: 64, 1>} : memref<176x128xf32, #tpu.memory_space<vmem>>, vector<2x128xf32>
    %105 = arith.maximumf %103, %104 : vector<2x128xf32>
    %c44 = arith.constant 44 : index
    %c0_67 = arith.constant 0 : index
    %106 = tpu.strided_load %arg11[%c44, %c0_67] {strides = array<i32: 64, 1>} : memref<176x128xf32, #tpu.memory_space<vmem>>, vector<2x128xf32>
    %107 = arith.maximumf %105, %106 : vector<2x128xf32>
    %c45 = arith.constant 45 : index
    %c0_68 = arith.constant 0 : index
    %108 = tpu.strided_load %arg11[%c45, %c0_68] {strides = array<i32: 64, 1>} : memref<176x128xf32, #tpu.memory_space<vmem>>, vector<2x128xf32>
    %109 = arith.maximumf %107, %108 : vector<2x128xf32>
    %110 = tpu.concatenate %88, %95, %102, %109 in 1 : vector<2x128xf32>, vector<2x128xf32>, vector<2x128xf32>, vector<2x128xf32> -> vector<2x512xf32>
    %c0_i32_69 = arith.constant 0 : i32
    %111 = tpu.memref_slice %arg15[%c0_i32_69] : memref<2x!tpu.dma_semaphore, #tpu.memory_space<semaphore_mem>> -> memref<1x!tpu.dma_semaphore, #tpu.memory_space<semaphore_mem>>
    %112 = tpu.memref_squeeze %111 : memref<1x!tpu.dma_semaphore, #tpu.memory_space<semaphore_mem>> -> memref<!tpu.dma_semaphore, #tpu.memory_space<semaphore_mem>>
    tpu.wait_dma2 semaphore(%112 : memref<!tpu.dma_semaphore, #tpu.memory_space<semaphore_mem>>) src(%arg6 : memref<512x1024xbf16, #tpu.memory_space<any>>) dst(%arg13 : memref<512x1024xbf16, #tpu.memory_space<vmem>>)
    %113 = arith.truncf %110 : vector<2x512xf32> to vector<2x512xbf16>
    %c0_70 = arith.constant 0 : index
    %c0_71 = arith.constant 0 : index
    %114 = vector.load %arg13[%c0_70, %c0_71] : memref<512x1024xbf16, #tpu.memory_space<vmem>>, vector<512x1024xbf16>
    %cst_72 = arith.constant dense<0.000000e+00> : vector<2x1024xf32>
    %115 = tpu.matmul %113, %114, %cst_72 {dimension_numbers = #tpu.dot_dimension_numbers<[1], [0], [0], [1], [0, 0, 1, 1], [], []>} : vector<2x512xbf16>, vector<512x1024xbf16>, vector<2x1024xf32> -> vector<2x1024xf32>
    %c0_73 = arith.constant 0 : index
    %c0_74 = arith.constant 0 : index
    %116 = vector.load %arg7[%c0_73, %c0_74] : memref<1x1024xf32, #tpu.memory_space<vmem>>, vector<1x1024xf32>
    %117 = vector.broadcast %116 : vector<1x1024xf32> to vector<2x1024xf32>
    %118 = arith.addf %115, %117 : vector<2x1024xf32>
    %cst_75 = arith.constant 0.000000e+00 : f32
    %119 = vector.broadcast %cst_75 : f32 to vector<2x1024xf32>
    %120 = arith.maximumf %118, %119 : vector<2x1024xf32>
    %c1_i32_76 = arith.constant 1 : i32
    %121 = tpu.memref_slice %arg15[%c1_i32_76] : memref<2x!tpu.dma_semaphore, #tpu.memory_space<semaphore_mem>> -> memref<1x!tpu.dma_semaphore, #tpu.memory_space<semaphore_mem>>
    %122 = tpu.memref_squeeze %121 : memref<1x!tpu.dma_semaphore, #tpu.memory_space<semaphore_mem>> -> memref<!tpu.dma_semaphore, #tpu.memory_space<semaphore_mem>>
    tpu.wait_dma2 semaphore(%122 : memref<!tpu.dma_semaphore, #tpu.memory_space<semaphore_mem>>) src(%arg8 : memref<1024x128xbf16, #tpu.memory_space<any>>) dst(%arg14 : memref<1024x128xbf16, #tpu.memory_space<vmem>>)
    %123 = arith.truncf %120 : vector<2x1024xf32> to vector<2x1024xbf16>
    %c0_77 = arith.constant 0 : index
    %c0_78 = arith.constant 0 : index
    %124 = vector.load %arg14[%c0_77, %c0_78] : memref<1024x128xbf16, #tpu.memory_space<vmem>>, vector<1024x128xbf16>
    %cst_79 = arith.constant dense<0.000000e+00> : vector<2x128xf32>
    %125 = tpu.matmul %123, %124, %cst_79 {dimension_numbers = #tpu.dot_dimension_numbers<[1], [0], [0], [1], [0, 0, 1, 1], [], []>} : vector<2x1024xbf16>, vector<1024x128xbf16>, vector<2x128xf32> -> vector<2x128xf32>
    %c0_80 = arith.constant 0 : index
    %c0_81 = arith.constant 0 : index
    %126 = vector.load %arg9[%c0_80, %c0_81] : memref<1x128xf32, #tpu.memory_space<vmem>>, vector<1x128xf32>
    %127 = vector.broadcast %126 : vector<1x128xf32> to vector<2x128xf32>
    %128 = arith.addf %125, %127 : vector<2x128xf32>
    %cst_82 = arith.constant dense<0xFF800000> : vector<2xf32>
    %129 = vector.multi_reduction <maximumf>, %128, %cst_82 [1] : vector<2x128xf32> to vector<2xf32>
    %130 = vector.shape_cast %129 : vector<2xf32> to vector<2x1xf32>
    %131 = vector.broadcast %130 : vector<2x1xf32> to vector<2x128xf32>
    %132 = arith.subf %128, %131 : vector<2x128xf32>
    %133 = math.exp %132 : vector<2x128xf32>
    %cst_83 = arith.constant dense<0.000000e+00> : vector<2xf32>
    %134 = vector.multi_reduction <add>, %133, %cst_83 [1] : vector<2x128xf32> to vector<2xf32>
    %135 = vector.shape_cast %134 : vector<2xf32> to vector<2x1xf32>
    %136 = math.log %135 : vector<2x1xf32>
    %137 = vector.broadcast %136 : vector<2x1xf32> to vector<2x128xf32>
    %138 = arith.subf %132, %137 : vector<2x128xf32>
    %c0_84 = arith.constant 0 : index
    %c0_85 = arith.constant 0 : index
    %139 = vector.load %arg10[%c0_84, %c0_85] : memref<2x128xf32, #tpu.memory_space<vmem>>, vector<2x128xf32>
    tpu.vector_store %arg10[%c0_84, %c0_85], %138 {strides = array<i32>} : memref<2x128xf32, #tpu.memory_space<vmem>>, vector<2x128xf32>,
    return
  }
  func.func @transform_0(%arg0: i32) -> (i32, i32) {
    %c0_i32 = arith.constant 0 : i32
    %c0_i32_0 = arith.constant 0 : i32
    %c0_i32_1 = arith.constant 0 : i32
    return %c0_i32, %c0_i32_0 : i32, i32
  }
  func.func @transform_1(%arg0: i32) -> (i32, i32) {
    %c0_i32 = arith.constant 0 : i32
    %c0_i32_0 = arith.constant 0 : i32
    %c0_i32_1 = arith.constant 0 : i32
    return %c0_i32, %c0_i32_0 : i32, i32
  }
  func.func @transform_2(%arg0: i32) -> (i32, i32) {
    %c0_i32 = arith.constant 0 : i32
    %c0_i32_0 = arith.constant 0 : i32
    %c0_i32_1 = arith.constant 0 : i32
    return %c0_i32, %c0_i32_0 : i32, i32
  }
  func.func @transform_3(%arg0: i32) -> (i32, i32, i32) {
    %c0_i32 = arith.constant 0 : i32
    %c0_i32_0 = arith.constant 0 : i32
    %c0_i32_1 = arith.constant 0 : i32
    %c0_i32_2 = arith.constant 0 : i32
    return %c0_i32, %c0_i32_0, %c0_i32_1 : i32, i32, i32
  }
  func.func @transform_4(%arg0: i32) -> (i32, i32) {
    %c0_i32 = arith.constant 0 : i32
    %c0_i32_0 = arith.constant 0 : i32
    %c0_i32_1 = arith.constant 0 : i32
    return %c0_i32, %c0_i32_0 : i32, i32
  }
  func.func @transform_6(%arg0: i32) -> (i32, i32) {
    %c0_i32 = arith.constant 0 : i32
    %c0_i32_0 = arith.constant 0 : i32
    %c0_i32_1 = arith.constant 0 : i32
    return %c0_i32, %c0_i32_0 : i32, i32
  }
  func.func @transform_8(%arg0: i32) -> (i32, i32) {
    %c0_i32 = arith.constant 0 : i32
    %c0_i32_0 = arith.constant 0 : i32
    %c0_i32_1 = arith.constant 0 : i32
    return %c0_i32, %c0_i32_0 : i32, i32
  }
  func.func @transform_9(%arg0: i32) -> (i32, i32) {
    %c0_i32 = arith.constant 0 : i32
    %c0_i32_0 = arith.constant 0 : i32
    %c0_i32_1 = arith.constant 0 : i32
    return %c0_i32, %c0_i32_0 : i32, i32
  }
}

</mosaic_0001>

<llo_original>
// kernel: cnn_forward.1
$region0: #{cnn_forward.1}
  #allocation0 [shape = 'u32[]', space=smem, size = 0x4, offset = 0x4, fixed_abs, tag = 'smem constant byte address 0x4 - core index']
  #allocation1 [shape = 'u32[144,128]{1,0:T(1,128)}', space=vmem, size = 0x12000, scoped, tag = 'internal scratch']
  #allocation2 [shape = 'f32[176,128]{1,0:T(8,128)}', space=vmem, size = 0x16000, scoped, tag = 'scratch operand']
  #allocation3 [shape = 'bf16[144,128]{1,0:T(8,128)(2,1)}', space=vmem, size = 0x9000, scoped, tag = 'scratch operand']
  #allocation4 [shape = 'bf16[512,1024]{1,0:T(8,128)(2,1)}', space=vmem, size = 0x100000, scoped, tag = 'scratch operand']
  #allocation5 [shape = 'bf16[1024,128]{1,0:T(8,128)(2,1)}', space=vmem, size = 0x40000, scoped, tag = 'scratch operand']
  #allocation6 [shape = 's32[2]{0}', space=sflag, size = 0x8, scoped, tag = 'scratch operand']
  #allocation9 [shape = 's32[]', space=sflag, size = 0x4, offset = 0, fixed_abs, tag = 'sflag constant byte address 0x0 - dummy sync flag']
  #allocation10 [shape = 's32[]', space=sflag, size = 0x4, offset = 0, fixed_abs, tag = 'sflag constant byte address 0x0 - dummy sync flag']
  %s0 = inlined_call_operand.vmem [shape: bf16[128,144], index: 0, kind: input, shape index: {}]
  %s1 = inlined_call_operand.vmem [shape: bf16[144,128], index: 1, kind: input, shape index: {}]
  %s2 = inlined_call_operand.vmem [shape: f32[1,128], index: 2, kind: input, shape index: {}]
  %s3 = inlined_call_operand.vmem [shape: bf16[5,128,128], index: 3, kind: input, shape index: {}]
  %s4 = inlined_call_operand.vmem [shape: f32[1,128], index: 4, kind: input, shape index: {}]
  %s5 = inlined_call_operand.vmem [shape: bf16[512,1024], index: 5, kind: input, shape index: {}]
  %s6 = inlined_call_operand.vmem [shape: f32[1,1024], index: 6, kind: input, shape index: {}]
  %s7 = inlined_call_operand.vmem [shape: bf16[1024,128], index: 7, kind: input, shape index: {}]
  %s8 = inlined_call_operand.vmem [shape: f32[1,128], index: 8, kind: input, shape index: {}]
  %s9 = inlined_call_operand.hbm [shape: f32[2,128], index: 9, kind: output, shape index: {}]
  %s10 = sld [smem:[#allocation0]]
  $region106: #{cnn_forward.1} parent=0
    _
  %s12 = ssub.s32 1, %s10
  %s13 = scalar_select 0, %s12, %s10
  $region1: #{cnn_forward.1} parent=0
    #allocation7 [shape = 'u8[1024]{0}', space=vmem, size = 0x400, scoped, tag = 'output window, operand 0, single buffered']
    #allocation8 [shape = 's32[1]{0}', space=sflag, size = 0x4, scoped, tag = 'scoped memory for cnn_forward.1']
    %14 = vsyncpa [#allocation8], 0
    // Predicated region
    $region2: #{cnn_forward.1} parent=1 // pred_check
      _
    $region3: #{cnn_forward.1} parent=1 // pred_check_branch
      %16 = sbr.rel (0) target = $region5
    $region4: #{cnn_forward.1} parent=1 // pred_region
      _
    $region5: #{cnn_forward.1} parent=1 // pred_fallthru
      _
    // Predicated region
    $region6: #{cnn_forward.1} parent=1 // pred_check
      _
    $region7: #{cnn_forward.1} parent=1 // pred_check_branch
      %18 = sbr.rel (0) target = $region9
    $region8: #{cnn_forward.1} parent=1 // pred_region
      _
    $region9: #{cnn_forward.1} parent=1 // pred_fallthru
      _
    // Predicated region
    $region10: #{cnn_forward.1} parent=1 // pred_check
      _
    $region11: #{cnn_forward.1} parent=1 // pred_check_branch
      %20 = sbr.rel (0) target = $region13
    $region12: #{cnn_forward.1} parent=1 // pred_region
      _
    $region13: #{cnn_forward.1} parent=1 // pred_fallthru
      _
    // Predicated region
    $region14: #{cnn_forward.1} parent=1 // pred_check
      _
    $region15: #{cnn_forward.1} parent=1 // pred_check_branch
      %22 = sbr.rel (0) target = $region17
    $region16: #{cnn_forward.1} parent=1 // pred_region
      _
    $region17: #{cnn_forward.1} parent=1 // pred_fallthru
      _
    // Predicated region
    $region18: #{cnn_forward.1} parent=1 // pred_check
      _
    $region19: #{cnn_forward.1} parent=1 // pred_check_branch
      %24 = sbr.rel (0) target = $region21
    $region20: #{cnn_forward.1} parent=1 // pred_region
      _
    $region21: #{cnn_forward.1} parent=1 // pred_fallthru
      _
    // Predicated region
    $region22: #{cnn_forward.1} parent=1 // pred_check
      _
    $region23: #{cnn_forward.1} parent=1 // pred_check_branch
      %26 = sbr.rel (0) target = $region25
    $region24: #{cnn_forward.1} parent=1 // pred_region
      _
    $region25: #{cnn_forward.1} parent=1 // pred_fallthru
      _
    // Predicated region
    $region26: #{cnn_forward.1} parent=1 // pred_check
      _
    $region27: #{cnn_forward.1} parent=1 // pred_check_branch
      %28 = sbr.rel (0) target = $region29
    $region28: #{cnn_forward.1} parent=1 // pred_region
      _
    $region29: #{cnn_forward.1} parent=1 // pred_fallthru
      _
    %p31 = scmp.lt.u32.totalorder 2048, 8
    %p32 = pneg %p31
    // Predicated region
    $region30: #{cnn_forward.1} parent=1 // pred_check
      _
    $region31: #{cnn_forward.1} parent=1 // pred_check_branch
      %34 = sbr.rel (%p31) target = $region33
    $region32: #{cnn_forward.1} parent=1 // pred_region
      %s50 = sand.u32 2048, 7
      %p51 = scmp.eq.s32.totalorder %s50, 0
      // Predicated region
      $region45: #{cnn_forward.1} parent=32 // pred_check
        %p52 = pneg %p51
      $region46: #{cnn_forward.1} parent=32 // pred_check_branch
        %54 = sbr.rel (%p52) target = $region48
      $region47: #{cnn_forward.1} parent=32 // pred_region
        loop: start=0, step=1, limit=1
        $region49: #{cnn_forward.1} parent=47 // loop_pre_header
          _
        $region50: #{cnn_forward.1} parent=47 // loop_header
          %s56 = sphi 0, %s60
          %p57 = scmp.ge.s32.totalorder %s56, 1
          %s61 = sphi %s5, %s5
          %s62 = sphi [#allocation4], [#allocation4]
        $region51: #{cnn_forward.1} parent=47 // loop_header_branch
          %59 = sbr.rel (%p57) target = $region55
        $region52: #{cnn_forward.1} parent=47 // loop_body
          %v63 = vld [vmem:[%s61] sm:$0xff]
          %64 = vst [vmem:[%s62] sm:$0xff] %v63
          %v65 = vld [vmem:[%s61 + $0x8] sm:$0xff]
          %66 = vst [vmem:[%s62 + $0x8] sm:$0xff] %v65
          %v67 = vld [vmem:[%s61 + $0x10] sm:$0xff]
          %68 = vst [vmem:[%s62 + $0x10] sm:$0xff] %v67
          %v69 = vld [vmem:[%s61 + $0x18] sm:$0xff]
          %70 = vst [vmem:[%s62 + $0x18] sm:$0xff] %v69
          %v71 = vld [vmem:[%s61 + $0x20] sm:$0xff]
          %72 = vst [vmem:[%s62 + $0x20] sm:$0xff] %v71
          %v73 = vld [vmem:[%s61 + $0x28] sm:$0xff]
          %74 = vst [vmem:[%s62 + $0x28] sm:$0xff] %v73
          %v75 = vld [vmem:[%s61 + $0x30] sm:$0xff]
          %76 = vst [vmem:[%s62 + $0x30] sm:$0xff] %v75
          %v77 = vld [vmem:[%s61 + $0x38] sm:$0xff]
          %78 = vst [vmem:[%s62 + $0x38] sm:$0xff] %v77
          %v79 = vld [vmem:[%s61 + $0x40] sm:$0xff]
          %80 = vst [vmem:[%s62 + $0x40] sm:$0xff] %v79
          %v81 = vld [vmem:[%s61 + $0x48] sm:$0xff]
          %82 = vst [vmem:[%s62 + $0x48] sm:$0xff] %v81
          %v83 = vld [vmem:[%s61 + $0x50] sm:$0xff]
          %84 = vst [vmem:[%s62 + $0x50] sm:$0xff] %v83
          %v85 = vld [vmem:[%s61 + $0x58] sm:$0xff]
          %86 = vst [vmem:[%s62 + $0x58] sm:$0xff] %v85
          %v87 = vld [vmem:[%s61 + $0x60] sm:$0xff]
          %88 = vst [vmem:[%s62 + $0x60] sm:$0xff] %v87
          %v89 = vld [vmem:[%s61 + $0x68] sm:$0xff]
          %90 = vst [vmem:[%s62 + $0x68] sm:$0xff] %v89
          %v91 = vld [vmem:[%s61 + $0x70] sm:$0xff]
          %92 = vst [vmem:[%s62 + $0x70] sm:$0xff] %v91
          %v93 = vld [vmem:[%s61 + $0x78] sm:$0xff]
          %94 = vst [vmem:[%s62 + $0x78] sm:$0xff] %v93
          %v95 = vld [vmem:[%s61 + $0x80] sm:$0xff]
          %96 = vst [vmem:[%s62 + $0x80] sm:$0xff] %v95
          %v97 = vld [vmem:[%s61 + $0x88] sm:$0xff]
          %98 = vst [vmem:[%s62 + $0x88] sm:$0xff] %v97
          %v99 = vld [vmem:[%s61 + $0x90] sm:$0xff]
          %100 = vst [vmem:[%s62 + $0x90] sm:$0xff] %v99
          %v101 = vld [vmem:[%s61 + $0x98] sm:$0xff]
          %102 = vst [vmem:[%s62 + $0x98] sm:$0xff] %v101
          %v103 = vld [vmem:[%s61 + $0xa0] sm:$0xff]
          %104 = vst [vmem:[%s62 + $0xa0] sm:$0xff] %v103
          %v105 = vld [vmem:[%s61 + $0xa8] sm:$0xff]
          %106 = vst [vmem:[%s62 + $0xa8] sm:$0xff] %v105
          %v107 = vld [vmem:[%s61 + $0xb0] sm:$0xff]
          %108 = vst [vmem:[%s62 + $0xb0] sm:$0xff] %v107
          %v109 = vld [vmem:[%s61 + $0xb8] sm:$0xff]
          %110 = vst [vmem:[%s62 + $0xb8] sm:$0xff] %v109
          %v111 = vld [vmem:[%s61 + $0xc0] sm:$0xff]
          %112 = vst [vmem:[%s62 + $0xc0] sm:$0xff] %v111
          %v113 = vld [vmem:[%s61 + $0xc8] sm:$0xff]
          %114 = vst [vmem:[%s62 + $0xc8] sm:$0xff] %v113
          %v115 = vld [vmem:[%s61 + $0xd0] sm:$0xff]
          %116 = vst [vmem:[%s62 + $0xd0] sm:$0xff] %v115
          %v117 = vld [vmem:[%s61 + $0xd8] sm:$0xff]
          %118 = vst [vmem:[%s62 + $0xd8] sm:$0xff] %v117
          %v119 = vld [vmem:[%s61 + $0xe0] sm:$0xff]
          %120 = vst [vmem:[%s62 + $0xe0] sm:$0xff] %v119
          %v121 = vld [vmem:[%s61 + $0xe8] sm:$0xff]
          %122 = vst [vmem:[%s62 + $0xe8] sm:$0xff] %v121
          %v123 = vld [vmem:[%s61 + $0xf0] sm:$0xff]
          %124 = vst [vmem:[%s62 + $0xf0] sm:$0xff] %v123
          %v125 = vld [vmem:[%s61 + $0xf8] sm:$0xff]
          %126 = vst [vmem:[%s62 + $0xf8] sm:$0xff] %v125
          %v127 = vld [vmem:[%s61 + $0x100] sm:$0xff]
          %128 = vst [vmem:[%s62 + $0x100] sm:$0xff] %v127
          %v129 = vld [vmem:[%s61 + $0x108] sm:$0xff]
          %130 = vst [vmem:[%s62 + $0x108] sm:$0xff] %v129
          %v131 = vld [vmem:[%s61 + $0x110] sm:$0xff]
          %132 = vst [vmem:[%s62 + $0x110] sm:$0xff] %v131
          %v133 = vld [vmem:[%s61 + $0x118] sm:$0xff]
          %134 = vst [vmem:[%s62 + $0x118] sm:$0xff] %v133
          %v135 = vld [vmem:[%s61 + $0x120] sm:$0xff]
          %136 = vst [vmem:[%s62 + $0x120] sm:$0xff] %v135
          %v137 = vld [vmem:[%s61 + $0x128] sm:$0xff]
          %138 = vst [vmem:[%s62 + $0x128] sm:$0xff] %v137
          %v139 = vld [vmem:[%s61 + $0x130] sm:$0xff]
          %140 = vst [vmem:[%s62 + $0x130] sm:$0xff] %v139
          %v141 = vld [vmem:[%s61 + $0x138] sm:$0xff]
          %142 = vst [vmem:[%s62 + $0x138] sm:$0xff] %v141
          %v143 = vld [vmem:[%s61 + $0x140] sm:$0xff]
          %144 = vst [vmem:[%s62 + $0x140] sm:$0xff] %v143
          %v145 = vld [vmem:[%s61 + $0x148] sm:$0xff]
          %146 = vst [vmem:[%s62 + $0x148] sm:$0xff] %v145
          %v147 = vld [vmem:[%s61 + $0x150] sm:$0xff]
          %148 = vst [vmem:[%s62 + $0x150] sm:$0xff] %v147
          %v149 = vld [vmem:[%s61 + $0x158] sm:$0xff]
          %150 = vst [vmem:[%s62 + $0x158] sm:$0xff] %v149
          %v151 = vld [vmem:[%s61 + $0x160] sm:$0xff]
          %152 = vst [vmem:[%s62 + $0x160] sm:$0xff] %v151
          %v153 = vld [vmem:[%s61 + $0x168] sm:$0xff]
          %154 = vst [vmem:[%s62 + $0x168] sm:$0xff] %v153
          %v155 = vld [vmem:[%s61 + $0x170] sm:$0xff]
          %156 = vst [vmem:[%s62 + $0x170] sm:$0xff] %v155
          %v157 = vld [vmem:[%s61 + $0x178] sm:$0xff]
          %158 = vst [vmem:[%s62 + $0x178] sm:$0xff] %v157
          %v159 = vld [vmem:[%s61 + $0x180] sm:$0xff]
          %160 = vst [vmem:[%s62 + $0x180] sm:$0xff] %v159
          %v161 = vld [vmem:[%s61 + $0x188] sm:$0xff]
          %162 = vst [vmem:[%s62 + $0x188] sm:$0xff] %v161
          %v163 = vld [vmem:[%s61 + $0x190] sm:$0xff]
          %164 = vst [vmem:[%s62 + $0x190] sm:$0xff] %v163
          %v165 = vld [vmem:[%s61 + $0x198] sm:$0xff]
          %166 = vst [vmem:[%s62 + $0x198] sm:$0xff] %v165
          %v167 = vld [vmem:[%s61 + $0x1a0] sm:$0xff]
          %168 = vst [vmem:[%s62 + $0x1a0] sm:$0xff] %v167
          %v169 = vld [vmem:[%s61 + $0x1a8] sm:$0xff]
          %170 = vst [vmem:[%s62 + $0x1a8] sm:$0xff] %v169
          %v171 = vld [vmem:[%s61 + $0x1b0] sm:$0xff]
          %172 = vst [vmem:[%s62 + $0x1b0] sm:$0xff] %v171
          %v173 = vld [vmem:[%s61 + $0x1b8] sm:$0xff]
          %174 = vst [vmem:[%s62 + $0x1b8] sm:$0xff] %v173
          %v175 = vld [vmem:[%s61 + $0x1c0] sm:$0xff]
          %176 = vst [vmem:[%s62 + $0x1c0] sm:$0xff] %v175
          %v177 = vld [vmem:[%s61 + $0x1c8] sm:$0xff]
          %178 = vst [vmem:[%s62 + $0x1c8] sm:$0xff] %v177
          %v179 = vld [vmem:[%s61 + $0x1d0] sm:$0xff]
          %180 = vst [vmem:[%s62 + $0x1d0] sm:$0xff] %v179
          %v181 = vld [vmem:[%s61 + $0x1d8] sm:$0xff]
          %182 = vst [vmem:[%s62 + $0x1d8] sm:$0xff] %v181
          %v183 = vld [vmem:[%s61 + $0x1e0] sm:$0xff]
          %184 = vst [vmem:[%s62 + $0x1e0] sm:$0xff] %v183
          %v185 = vld [vmem:[%s61 + $0x1e8] sm:$0xff]
          %186 = vst [vmem:[%s62 + $0x1e8] sm:$0xff] %v185
          %v187 = vld [vmem:[%s61 + $0x1f0] sm:$0xff]
          %188 = vst [vmem:[%s62 + $0x1f0] sm:$0xff] %v187
          %v189 = vld [vmem:[%s61 + $0x1f8] sm:$0xff]
          %190 = vst [vmem:[%s62 + $0x1f8] sm:$0xff] %v189
          %v191 = vld [vmem:[%s61 + $0x200] sm:$0xff]
          %192 = vst [vmem:[%s62 + $0x200] sm:$0xff] %v191
          %v193 = vld [vmem:[%s61 + $0x208] sm:$0xff]
          %194 = vst [vmem:[%s62 + $0x208] sm:$0xff] %v193
          %v195 = vld [vmem:[%s61 + $0x210] sm:$0xff]
          %196 = vst [vmem:[%s62 + $0x210] sm:$0xff] %v195
          %v197 = vld [vmem:[%s61 + $0x218] sm:$0xff]
          %198 = vst [vmem:[%s62 + $0x218] sm:$0xff] %v197
          %v199 = vld [vmem:[%s61 + $0x220] sm:$0xff]
          %200 = vst [vmem:[%s62 + $0x220] sm:$0xff] %v199
          %v201 = vld [vmem:[%s61 + $0x228] sm:$0xff]
          %202 = vst [vmem:[%s62 + $0x228] sm:$0xff] %v201
          %v203 = vld [vmem:[%s61 + $0x230] sm:$0xff]
          %204 = vst [vmem:[%s62 + $0x230] sm:$0xff] %v203
          %v205 = vld [vmem:[%s61 + $0x238] sm:$0xff]
          %206 = vst [vmem:[%s62 + $0x238] sm:$0xff] %v205
          %v207 = vld [vmem:[%s61 + $0x240] sm:$0xff]
          %208 = vst [vmem:[%s62 + $0x240] sm:$0xff] %v207
          %v209 = vld [vmem:[%s61 + $0x248] sm:$0xff]
          %210 = vst [vmem:[%s62 + $0x248] sm:$0xff] %v209
          %v211 = vld [vmem:[%s61 + $0x250] sm:$0xff]
          %212 = vst [vmem:[%s62 + $0x250] sm:$0xff] %v211
          %v213 = vld [vmem:[%s61 + $0x258] sm:$0xff]
          %214 = vst [vmem:[%s62 + $0x258] sm:$0xff] %v213
          %v215 = vld [vmem:[%s61 + $0x260] sm:$0xff]
          %216 = vst [vmem:[%s62 + $0x260] sm:$0xff] %v215
          %v217 = vld [vmem:[%s61 + $0x268] sm:$0xff]
          %218 = vst [vmem:[%s62 + $0x268] sm:$0xff] %v217
          %v219 = vld [vmem:[%s61 + $0x270] sm:$0xff]
          %220 = vst [vmem:[%s62 + $0x270] sm:$0xff] %v219
          %v221 = vld [vmem:[%s61 + $0x278] sm:$0xff]
          %222 = vst [vmem:[%s62 + $0x278] sm:$0xff] %v221
          %v223 = vld [vmem:[%s61 + $0x280] sm:$0xff]
          %224 = vst [vmem:[%s62 + $0x280] sm:$0xff] %v223
          %v225 = vld [vmem:[%s61 + $0x288] sm:$0xff]
          %226 = vst [vmem:[%s62 + $0x288] sm:$0xff] %v225
          %v227 = vld [vmem:[%s61 + $0x290] sm:$0xff]
          %228 = vst [vmem:[%s62 + $0x290] sm:$0xff] %v227
          %v229 = vld [vmem:[%s61 + $0x298] sm:$0xff]
          %230 = vst [vmem:[%s62 + $0x298] sm:$0xff] %v229
          %v231 = vld [vmem:[%s61 + $0x2a0] sm:$0xff]
          %232 = vst [vmem:[%s62 + $0x2a0] sm:$0xff] %v231
          %v233 = vld [vmem:[%s61 + $0x2a8] sm:$0xff]
          %234 = vst [vmem:[%s62 + $0x2a8] sm:$0xff] %v233
          %v235 = vld [vmem:[%s61 + $0x2b0] sm:$0xff]
          %236 = vst [vmem:[%s62 + $0x2b0] sm:$0xff] %v235
          %v237 = vld [vmem:[%s61 + $0x2b8] sm:$0xff]
          %238 = vst [vmem:[%s62 + $0x2b8] sm:$0xff] %v237
          %v239 = vld [vmem:[%s61 + $0x2c0] sm:$0xff]
          %240 = vst [vmem:[%s62 + $0x2c0] sm:$0xff] %v239
          %v241 = vld [vmem:[%s61 + $0x2c8] sm:$0xff]
          %242 = vst [vmem:[%s62 + $0x2c8] sm:$0xff] %v241
          %v243 = vld [vmem:[%s61 + $0x2d0] sm:$0xff]
          %244 = vst [vmem:[%s62 + $0x2d0] sm:$0xff] %v243
          %v245 = vld [vmem:[%s61 + $0x2d8] sm:$0xff]
          %246 = vst [vmem:[%s62 + $0x2d8] sm:$0xff] %v245
          %v247 = vld [vmem:[%s61 + $0x2e0] sm:$0xff]
          %248 = vst [vmem:[%s62 + $0x2e0] sm:$0xff] %v247
          %v249 = vld [vmem:[%s61 + $0x2e8] sm:$0xff]
          %250 = vst [vmem:[%s62 + $0x2e8] sm:$0xff] %v249
          %v251 = vld [vmem:[%s61 + $0x2f0] sm:$0xff]
          %252 = vst [vmem:[%s62 + $0x2f0] sm:$0xff] %v251
          %v253 = vld [vmem:[%s61 + $0x2f8] sm:$0xff]
          %254 = vst [vmem:[%s62 + $0x2f8] sm:$0xff] %v253
          %v255 = vld [vmem:[%s61 + $0x300] sm:$0xff]
          %256 = vst [vmem:[%s62 + $0x300] sm:$0xff] %v255
          %v257 = vld [vmem:[%s61 + $0x308] sm:$0xff]
          %258 = vst [vmem:[%s62 + $0x308] sm:$0xff] %v257
          %v259 = vld [vmem:[%s61 + $0x310] sm:$0xff]
          %260 = vst [vmem:[%s62 + $0x310] sm:$0xff] %v259
          %v261 = vld [vmem:[%s61 + $0x318] sm:$0xff]
          %262 = vst [vmem:[%s62 + $0x318] sm:$0xff] %v261
          %v263 = vld [vmem:[%s61 + $0x320] sm:$0xff]
          %264 = vst [vmem:[%s62 + $0x320] sm:$0xff] %v263
          %v265 = vld [vmem:[%s61 + $0x328] sm:$0xff]
          %266 = vst [vmem:[%s62 + $0x328] sm:$0xff] %v265
          %v267 = vld [vmem:[%s61 + $0x330] sm:$0xff]
          %268 = vst [vmem:[%s62 + $0x330] sm:$0xff] %v267
          %v269 = vld [vmem:[%s61 + $0x338] sm:$0xff]
          %270 = vst [vmem:[%s62 + $0x338] sm:$0xff] %v269
          %v271 = vld [vmem:[%s61 + $0x340] sm:$0xff]
          %272 = vst [vmem:[%s62 + $0x340] sm:$0xff] %v271
          %v273 = vld [vmem:[%s61 + $0x348] sm:$0xff]
          %274 = vst [vmem:[%s62 + $0x348] sm:$0xff] %v273
          %v275 = vld [vmem:[%s61 + $0x350] sm:$0xff]
          %276 = vst [vmem:[%s62 + $0x350] sm:$0xff] %v275
          %v277 = vld [vmem:[%s61 + $0x358] sm:$0xff]
          %278 = vst [vmem:[%s62 + $0x358] sm:$0xff] %v277
          %v279 = vld [vmem:[%s61 + $0x360] sm:$0xff]
          %280 = vst [vmem:[%s62 + $0x360] sm:$0xff] %v279
          %v281 = vld [vmem:[%s61 + $0x368] sm:$0xff]
          %282 = vst [vmem:[%s62 + $0x368] sm:$0xff] %v281
          %v283 = vld [vmem:[%s61 + $0x370] sm:$0xff]
          %284 = vst [vmem:[%s62 + $0x370] sm:$0xff] %v283
          %v285 = vld [vmem:[%s61 + $0x378] sm:$0xff]
          %286 = vst [vmem:[%s62 + $0x378] sm:$0xff] %v285
          %v287 = vld [vmem:[%s61 + $0x380] sm:$0xff]
          %288 = vst [vmem:[%s62 + $0x380] sm:$0xff] %v287
          %v289 = vld [vmem:[%s61 + $0x388] sm:$0xff]
          %290 = vst [vmem:[%s62 + $0x388] sm:$0xff] %v289
          %v291 = vld [vmem:[%s61 + $0x390] sm:$0xff]
          %292 = vst [vmem:[%s62 + $0x390] sm:$0xff] %v291
          %v293 = vld [vmem:[%s61 + $0x398] sm:$0xff]
          %294 = vst [vmem:[%s62 + $0x398] sm:$0xff] %v293
          %v295 = vld [vmem:[%s61 + $0x3a0] sm:$0xff]
          %296 = vst [vmem:[%s62 + $0x3a0] sm:$0xff] %v295
          %v297 = vld [vmem:[%s61 + $0x3a8] sm:$0xff]
          %298 = vst [vmem:[%s62 + $0x3a8] sm:$0xff] %v297
          %v299 = vld [vmem:[%s61 + $0x3b0] sm:$0xff]
          %300 = vst [vmem:[%s62 + $0x3b0] sm:$0xff] %v299
          %v301 = vld [vmem:[%s61 + $0x3b8] sm:$0xff]
          %302 = vst [vmem:[%s62 + $0x3b8] sm:$0xff] %v301
          %v303 = vld [vmem:[%s61 + $0x3c0] sm:$0xff]
          %304 = vst [vmem:[%s62 + $0x3c0] sm:$0xff] %v303
          %v305 = vld [vmem:[%s61 + $0x3c8] sm:$0xff]
          %306 = vst [vmem:[%s62 + $0x3c8] sm:$0xff] %v305
          %v307 = vld [vmem:[%s61 + $0x3d0] sm:$0xff]
          %308 = vst [vmem:[%s62 + $0x3d0] sm:$0xff] %v307
          %v309 = vld [vmem:[%s61 + $0x3d8] sm:$0xff]
          %310 = vst [vmem:[%s62 + $0x3d8] sm:$0xff] %v309
          %v311 = vld [vmem:[%s61 + $0x3e0] sm:$0xff]
          %312 = vst [vmem:[%s62 + $0x3e0] sm:$0xff] %v311
          %v313 = vld [vmem:[%s61 + $0x3e8] sm:$0xff]
          %314 = vst [vmem:[%s62 + $0x3e8] sm:$0xff] %v313
          %v315 = vld [vmem:[%s61 + $0x3f0] sm:$0xff]
          %316 = vst [vmem:[%s62 + $0x3f0] sm:$0xff] %v315
          %v317 = vld [vmem:[%s61 + $0x3f8] sm:$0xff]
          %318 = vst [vmem:[%s62 + $0x3f8] sm:$0xff] %v317
          %v319 = vld [vmem:[%s61 + $0x400] sm:$0xff]
          %320 = vst [vmem:[%s62 + $0x400] sm:$0xff] %v319
          %v321 = vld [vmem:[%s61 + $0x408] sm:$0xff]
          %322 = vst [vmem:[%s62 + $0x408] sm:$0xff] %v321
          %v323 = vld [vmem:[%s61 + $0x410] sm:$0xff]
          %324 = vst [vmem:[%s62 + $0x410] sm:$0xff] %v323
          %v325 = vld [vmem:[%s61 + $0x418] sm:$0xff]
          %326 = vst [vmem:[%s62 + $0x418] sm:$0xff] %v325
          %v327 = vld [vmem:[%s61 + $0x420] sm:$0xff]
          %328 = vst [vmem:[%s62 + $0x420] sm:$0xff] %v327
          %v329 = vld [vmem:[%s61 + $0x428] sm:$0xff]
          %330 = vst [vmem:[%s62 + $0x428] sm:$0xff] %v329
          %v331 = vld [vmem:[%s61 + $0x430] sm:$0xff]
          %332 = vst [vmem:[%s62 + $0x430] sm:$0xff] %v331
          %v333 = vld [vmem:[%s61 + $0x438] sm:$0xff]
          %334 = vst [vmem:[%s62 + $0x438] sm:$0xff] %v333
          %v335 = vld [vmem:[%s61 + $0x440] sm:$0xff]
          %336 = vst [vmem:[%s62 + $0x440] sm:$0xff] %v335
          %v337 = vld [vmem:[%s61 + $0x448] sm:$0xff]
          %338 = vst [vmem:[%s62 + $0x448] sm:$0xff] %v337
          %v339 = vld [vmem:[%s61 + $0x450] sm:$0xff]
          %340 = vst [vmem:[%s62 + $0x450] sm:$0xff] %v339
          %v341 = vld [vmem:[%s61 + $0x458] sm:$0xff]
          %342 = vst [vmem:[%s62 + $0x458] sm:$0xff] %v341
          %v343 = vld [vmem:[%s61 + $0x460] sm:$0xff]
          %344 = vst [vmem:[%s62 + $0x460] sm:$0xff] %v343
          %v345 = vld [vmem:[%s61 + $0x468] sm:$0xff]
          %346 = vst [vmem:[%s62 + $0x468] sm:$0xff] %v345
          %v347 = vld [vmem:[%s61 + $0x470] sm:$0xff]
          %348 = vst [vmem:[%s62 + $0x470] sm:$0xff] %v347
          %v349 = vld [vmem:[%s61 + $0x478] sm:$0xff]
          %350 = vst [vmem:[%s62 + $0x478] sm:$0xff] %v349
          %v351 = vld [vmem:[%s61 + $0x480] sm:$0xff]
          %352 = vst [vmem:[%s62 + $0x480] sm:$0xff] %v351
          %v353 = vld [vmem:[%s61 + $0x488] sm:$0xff]
          %354 = vst [vmem:[%s62 + $0x488] sm:$0xff] %v353
          %v355 = vld [vmem:[%s61 + $0x490] sm:$0xff]
          %356 = vst [vmem:[%s62 + $0x490] sm:$0xff] %v355
          %v357 = vld [vmem:[%s61 + $0x498] sm:$0xff]
          %358 = vst [vmem:[%s62 + $0x498] sm:$0xff] %v357
          %v359 = vld [vmem:[%s61 + $0x4a0] sm:$0xff]
          %360 = vst [vmem:[%s62 + $0x4a0] sm:$0xff] %v359
          %v361 = vld [vmem:[%s61 + $0x4a8] sm:$0xff]
          %362 = vst [vmem:[%s62 + $0x4a8] sm:$0xff] %v361
          %v363 = vld [vmem:[%s61 + $0x4b0] sm:$0xff]
          %364 = vst [vmem:[%s62 + $0x4b0] sm:$0xff] %v363
          %v365 = vld [vmem:[%s61 + $0x4b8] sm:$0xff]
          %366 = vst [vmem:[%s62 + $0x4b8] sm:$0xff] %v365
          %v367 = vld [vmem:[%s61 + $0x4c0] sm:$0xff]
          %368 = vst [vmem:[%s62 + $0x4c0] sm:$0xff] %v367
          %v369 = vld [vmem:[%s61 + $0x4c8] sm:$0xff]
          %370 = vst [vmem:[%s62 + $0x4c8] sm:$0xff] %v369
          %v371 = vld [vmem:[%s61 + $0x4d0] sm:$0xff]
          %372 = vst [vmem:[%s62 + $0x4d0] sm:$0xff] %v371
          %v373 = vld [vmem:[%s61 + $0x4d8] sm:$0xff]
          %374 = vst [vmem:[%s62 + $0x4d8] sm:$0xff] %v373
          %v375 = vld [vmem:[%s61 + $0x4e0] sm:$0xff]
          %376 = vst [vmem:[%s62 + $0x4e0] sm:$0xff] %v375
          %v377 = vld [vmem:[%s61 + $0x4e8] sm:$0xff]
          %378 = vst [vmem:[%s62 + $0x4e8] sm:$0xff] %v377
          %v379 = vld [vmem:[%s61 + $0x4f0] sm:$0xff]
          %380 = vst [vmem:[%s62 + $0x4f0] sm:$0xff] %v379
          %v381 = vld [vmem:[%s61 + $0x4f8] sm:$0xff]
          %382 = vst [vmem:[%s62 + $0x4f8] sm:$0xff] %v381
          %v383 = vld [vmem:[%s61 + $0x500] sm:$0xff]
          %384 = vst [vmem:[%s62 + $0x500] sm:$0xff] %v383
          %v385 = vld [vmem:[%s61 + $0x508] sm:$0xff]
          %386 = vst [vmem:[%s62 + $0x508] sm:$0xff] %v385
          %v387 = vld [vmem:[%s61 + $0x510] sm:$0xff]
          %388 = vst [vmem:[%s62 + $0x510] sm:$0xff] %v387
          %v389 = vld [vmem:[%s61 + $0x518] sm:$0xff]
          %390 = vst [vmem:[%s62 + $0x518] sm:$0xff] %v389
          %v391 = vld [vmem:[%s61 + $0x520] sm:$0xff]
          %392 = vst [vmem:[%s62 + $0x520] sm:$0xff] %v391
          %v393 = vld [vmem:[%s61 + $0x528] sm:$0xff]
          %394 = vst [vmem:[%s62 + $0x528] sm:$0xff] %v393
          %v395 = vld [vmem:[%s61 + $0x530] sm:$0xff]
          %396 = vst [vmem:[%s62 + $0x530] sm:$0xff] %v395
          %v397 = vld [vmem:[%s61 + $0x538] sm:$0xff]
          %398 = vst [vmem:[%s62 + $0x538] sm:$0xff] %v397
          %v399 = vld [vmem:[%s61 + $0x540] sm:$0xff]
          %400 = vst [vmem:[%s62 + $0x540] sm:$0xff] %v399
          %v401 = vld [vmem:[%s61 + $0x548] sm:$0xff]
          %402 = vst [vmem:[%s62 + $0x548] sm:$0xff] %v401
          %v403 = vld [vmem:[%s61 + $0x550] sm:$0xff]
          %404 = vst [vmem:[%s62 + $0x550] sm:$0xff] %v403
          %v405 = vld [vmem:[%s61 + $0x558] sm:$0xff]
          %406 = vst [vmem:[%s62 + $0x558] sm:$0xff] %v405
          %v407 = vld [vmem:[%s61 + $0x560] sm:$0xff]
          %408 = vst [vmem:[%s62 + $0x560] sm:$0xff] %v407
          %v409 = vld [vmem:[%s61 + $0x568] sm:$0xff]
          %410 = vst [vmem:[%s62 + $0x568] sm:$0xff] %v409
          %v411 = vld [vmem:[%s61 + $0x570] sm:$0xff]
          %412 = vst [vmem:[%s62 + $0x570] sm:$0xff] %v411
          %v413 = vld [vmem:[%s61 + $0x578] sm:$0xff]
          %414 = vst [vmem:[%s62 + $0x578] sm:$0xff] %v413
          %v415 = vld [vmem:[%s61 + $0x580] sm:$0xff]
          %416 = vst [vmem:[%s62 + $0x580] sm:$0xff] %v415
          %v417 = vld [vmem:[%s61 + $0x588] sm:$0xff]
          %418 = vst [vmem:[%s62 + $0x588] sm:$0xff] %v417
          %v419 = vld [vmem:[%s61 + $0x590] sm:$0xff]
          %420 = vst [vmem:[%s62 + $0x590] sm:$0xff] %v419
          %v421 = vld [vmem:[%s61 + $0x598] sm:$0xff]
          %422 = vst [vmem:[%s62 + $0x598] sm:$0xff] %v421
          %v423 = vld [vmem:[%s61 + $0x5a0] sm:$0xff]
          %424 = vst [vmem:[%s62 + $0x5a0] sm:$0xff] %v423
          %v425 = vld [vmem:[%s61 + $0x5a8] sm:$0xff]
          %426 = vst [vmem:[%s62 + $0x5a8] sm:$0xff] %v425
          %v427 = vld [vmem:[%s61 + $0x5b0] sm:$0xff]
          %428 = vst [vmem:[%s62 + $0x5b0] sm:$0xff] %v427
          %v429 = vld [vmem:[%s61 + $0x5b8] sm:$0xff]
          %430 = vst [vmem:[%s62 + $0x5b8] sm:$0xff] %v429
          %v431 = vld [vmem:[%s61 + $0x5c0] sm:$0xff]
          %432 = vst [vmem:[%s62 + $0x5c0] sm:$0xff] %v431
          %v433 = vld [vmem:[%s61 + $0x5c8] sm:$0xff]
          %434 = vst [vmem:[%s62 + $0x5c8] sm:$0xff] %v433
          %v435 = vld [vmem:[%s61 + $0x5d0] sm:$0xff]
          %436 = vst [vmem:[%s62 + $0x5d0] sm:$0xff] %v435
          %v437 = vld [vmem:[%s61 + $0x5d8] sm:$0xff]
          %438 = vst [vmem:[%s62 + $0x5d8] sm:$0xff] %v437
          %v439 = vld [vmem:[%s61 + $0x5e0] sm:$0xff]
          %440 = vst [vmem:[%s62 + $0x5e0] sm:$0xff] %v439
          %v441 = vld [vmem:[%s61 + $0x5e8] sm:$0xff]
          %442 = vst [vmem:[%s62 + $0x5e8] sm:$0xff] %v441
          %v443 = vld [vmem:[%s61 + $0x5f0] sm:$0xff]
          %444 = vst [vmem:[%s62 + $0x5f0] sm:$0xff] %v443
          %v445 = vld [vmem:[%s61 + $0x5f8] sm:$0xff]
          %446 = vst [vmem:[%s62 + $0x5f8] sm:$0xff] %v445
          %v447 = vld [vmem:[%s61 + $0x600] sm:$0xff]
          %448 = vst [vmem:[%s62 + $0x600] sm:$0xff] %v447
          %v449 = vld [vmem:[%s61 + $0x608] sm:$0xff]
          %450 = vst [vmem:[%s62 + $0x608] sm:$0xff] %v449
          %v451 = vld [vmem:[%s61 + $0x610] sm:$0xff]
          %452 = vst [vmem:[%s62 + $0x610] sm:$0xff] %v451
          %v453 = vld [vmem:[%s61 + $0x618] sm:$0xff]
          %454 = vst [vmem:[%s62 + $0x618] sm:$0xff] %v453
          %v455 = vld [vmem:[%s61 + $0x620] sm:$0xff]
          %456 = vst [vmem:[%s62 + $0x620] sm:$0xff] %v455
          %v457 = vld [vmem:[%s61 + $0x628] sm:$0xff]
          %458 = vst [vmem:[%s62 + $0x628] sm:$0xff] %v457
          %v459 = vld [vmem:[%s61 + $0x630] sm:$0xff]
          %460 = vst [vmem:[%s62 + $0x630] sm:$0xff] %v459
          %v461 = vld [vmem:[%s61 + $0x638] sm:$0xff]
          %462 = vst [vmem:[%s62 + $0x638] sm:$0xff] %v461
          %v463 = vld [vmem:[%s61 + $0x640] sm:$0xff]
          %464 = vst [vmem:[%s62 + $0x640] sm:$0xff] %v463
          %v465 = vld [vmem:[%s61 + $0x648] sm:$0xff]
          %466 = vst [vmem:[%s62 + $0x648] sm:$0xff] %v465
          %v467 = vld [vmem:[%s61 + $0x650] sm:$0xff]
          %468 = vst [vmem:[%s62 + $0x650] sm:$0xff] %v467
          %v469 = vld [vmem:[%s61 + $0x658] sm:$0xff]
          %470 = vst [vmem:[%s62 + $0x658] sm:$0xff] %v469
          %v471 = vld [vmem:[%s61 + $0x660] sm:$0xff]
          %472 = vst [vmem:[%s62 + $0x660] sm:$0xff] %v471
          %v473 = vld [vmem:[%s61 + $0x668] sm:$0xff]
          %474 = vst [vmem:[%s62 + $0x668] sm:$0xff] %v473
          %v475 = vld [vmem:[%s61 + $0x670] sm:$0xff]
          %476 = vst [vmem:[%s62 + $0x670] sm:$0xff] %v475
          %v477 = vld [vmem:[%s61 + $0x678] sm:$0xff]
          %478 = vst [vmem:[%s62 + $0x678] sm:$0xff] %v477
          %v479 = vld [vmem:[%s61 + $0x680] sm:$0xff]
          %480 = vst [vmem:[%s62 + $0x680] sm:$0xff] %v479
          %v481 = vld [vmem:[%s61 + $0x688] sm:$0xff]
          %482 = vst [vmem:[%s62 + $0x688] sm:$0xff] %v481
          %v483 = vld [vmem:[%s61 + $0x690] sm:$0xff]
          %484 = vst [vmem:[%s62 + $0x690] sm:$0xff] %v483
          %v485 = vld [vmem:[%s61 + $0x698] sm:$0xff]
          %486 = vst [vmem:[%s62 + $0x698] sm:$0xff] %v485
          %v487 = vld [vmem:[%s61 + $0x6a0] sm:$0xff]
          %488 = vst [vmem:[%s62 + $0x6a0] sm:$0xff] %v487
          %v489 = vld [vmem:[%s61 + $0x6a8] sm:$0xff]
          %490 = vst [vmem:[%s62 + $0x6a8] sm:$0xff] %v489
          %v491 = vld [vmem:[%s61 + $0x6b0] sm:$0xff]
          %492 = vst [vmem:[%s62 + $0x6b0] sm:$0xff] %v491
          %v493 = vld [vmem:[%s61 + $0x6b8] sm:$0xff]
          %494 = vst [vmem:[%s62 + $0x6b8] sm:$0xff] %v493
          %v495 = vld [vmem:[%s61 + $0x6c0] sm:$0xff]
          %496 = vst [vmem:[%s62 + $0x6c0] sm:$0xff] %v495
          %v497 = vld [vmem:[%s61 + $0x6c8] sm:$0xff]
          %498 = vst [vmem:[%s62 + $0x6c8] sm:$0xff] %v497
          %v499 = vld [vmem:[%s61 + $0x6d0] sm:$0xff]
          %500 = vst [vmem:[%s62 + $0x6d0] sm:$0xff] %v499
          %v501 = vld [vmem:[%s61 + $0x6d8] sm:$0xff]
          %502 = vst [vmem:[%s62 + $0x6d8] sm:$0xff] %v501
          %v503 = vld [vmem:[%s61 + $0x6e0] sm:$0xff]
          %504 = vst [vmem:[%s62 + $0x6e0] sm:$0xff] %v503
          %v505 = vld [vmem:[%s61 + $0x6e8] sm:$0xff]
          %506 = vst [vmem:[%s62 + $0x6e8] sm:$0xff] %v505
          %v507 = vld [vmem:[%s61 + $0x6f0] sm:$0xff]
          %508 = vst [vmem:[%s62 + $0x6f0] sm:$0xff] %v507
          %v509 = vld [vmem:[%s61 + $0x6f8] sm:$0xff]
          %510 = vst [vmem:[%s62 + $0x6f8] sm:$0xff] %v509
          %v511 = vld [vmem:[%s61 + $0x700] sm:$0xff]
          %512 = vst [vmem:[%s62 + $0x700] sm:$0xff] %v511
          %v513 = vld [vmem:[%s61 + $0x708] sm:$0xff]
          %514 = vst [vmem:[%s62 + $0x708] sm:$0xff] %v513
          %v515 = vld [vmem:[%s61 + $0x710] sm:$0xff]
          %516 = vst [vmem:[%s62 + $0x710] sm:$0xff] %v515
          %v517 = vld [vmem:[%s61 + $0x718] sm:$0xff]
          %518 = vst [vmem:[%s62 + $0x718] sm:$0xff] %v517
          %v519 = vld [vmem:[%s61 + $0x720] sm:$0xff]
          %520 = vst [vmem:[%s62 + $0x720] sm:$0xff] %v519
          %v521 = vld [vmem:[%s61 + $0x728] sm:$0xff]
          %522 = vst [vmem:[%s62 + $0x728] sm:$0xff] %v521
          %v523 = vld [vmem:[%s61 + $0x730] sm:$0xff]
          %524 = vst [vmem:[%s62 + $0x730] sm:$0xff] %v523
          %v525 = vld [vmem:[%s61 + $0x738] sm:$0xff]
          %526 = vst [vmem:[%s62 + $0x738] sm:$0xff] %v525
          %v527 = vld [vmem:[%s61 + $0x740] sm:$0xff]
          %528 = vst [vmem:[%s62 + $0x740] sm:$0xff] %v527
          %v529 = vld [vmem:[%s61 + $0x748] sm:$0xff]
          %530 = vst [vmem:[%s62 + $0x748] sm:$0xff] %v529
          %v531 = vld [vmem:[%s61 + $0x750] sm:$0xff]
          %532 = vst [vmem:[%s62 + $0x750] sm:$0xff] %v531
          %v533 = vld [vmem:[%s61 + $0x758] sm:$0xff]
          %534 = vst [vmem:[%s62 + $0x758] sm:$0xff] %v533
          %v535 = vld [vmem:[%s61 + $0x760] sm:$0xff]
          %536 = vst [vmem:[%s62 + $0x760] sm:$0xff] %v535
          %v537 = vld [vmem:[%s61 + $0x768] sm:$0xff]
          %538 = vst [vmem:[%s62 + $0x768] sm:$0xff] %v537
          %v539 = vld [vmem:[%s61 + $0x770] sm:$0xff]
          %540 = vst [vmem:[%s62 + $0x770] sm:$0xff] %v539
          %v541 = vld [vmem:[%s61 + $0x778] sm:$0xff]
          %542 = vst [vmem:[%s62 + $0x778] sm:$0xff] %v541
          %v543 = vld [vmem:[%s61 + $0x780] sm:$0xff]
          %544 = vst [vmem:[%s62 + $0x780] sm:$0xff] %v543
          %v545 = vld [vmem:[%s61 + $0x788] sm:$0xff]
          %546 = vst [vmem:[%s62 + $0x788] sm:$0xff] %v545
          %v547 = vld [vmem:[%s61 + $0x790] sm:$0xff]
          %548 = vst [vmem:[%s62 + $0x790] sm:$0xff] %v547
          %v549 = vld [vmem:[%s61 + $0x798] sm:$0xff]
          %550 = vst [vmem:[%s62 + $0x798] sm:$0xff] %v549
          %v551 = vld [vmem:[%s61 + $0x7a0] sm:$0xff]
          %552 = vst [vmem:[%s62 + $0x7a0] sm:$0xff] %v551
          %v553 = vld [vmem:[%s61 + $0x7a8] sm:$0xff]
          %554 = vst [vmem:[%s62 + $0x7a8] sm:$0xff] %v553
          %v555 = vld [vmem:[%s61 + $0x7b0] sm:$0xff]
          %556 = vst [vmem:[%s62 + $0x7b0] sm:$0xff] %v555
          %v557 = vld [vmem:[%s61 + $0x7b8] sm:$0xff]
          %558 = vst [vmem:[%s62 + $0x7b8] sm:$0xff] %v557
          %v559 = vld [vmem:[%s61 + $0x7c0] sm:$0xff]
          %560 = vst [vmem:[%s62 + $0x7c0] sm:$0xff] %v559
          %v561 = vld [vmem:[%s61 + $0x7c8] sm:$0xff]
          %562 = vst [vmem:[%s62 + $0x7c8] sm:$0xff] %v561
          %v563 = vld [vmem:[%s61 + $0x7d0] sm:$0xff]
          %564 = vst [vmem:[%s62 + $0x7d0] sm:$0xff] %v563
          %v565 = vld [vmem:[%s61 + $0x7d8] sm:$0xff]
          %566 = vst [vmem:[%s62 + $0x7d8] sm:$0xff] %v565
          %v567 = vld [vmem:[%s61 + $0x7e0] sm:$0xff]
          %568 = vst [vmem:[%s62 + $0x7e0] sm:$0xff] %v567
          %v569 = vld [vmem:[%s61 + $0x7e8] sm:$0xff]
          %570 = vst [vmem:[%s62 + $0x7e8] sm:$0xff] %v569
          %v571 = vld [vmem:[%s61 + $0x7f0] sm:$0xff]
          %572 = vst [vmem:[%s62 + $0x7f0] sm:$0xff] %v571
          %v573 = vld [vmem:[%s61 + $0x7f8] sm:$0xff]
          %574 = vst [vmem:[%s62 + $0x7f8] sm:$0xff] %v573
        $region53: #{cnn_forward.1} parent=47 // loop_footer
          %s60 = sadd.s32 1, %s56
        $region54: #{cnn_forward.1} parent=47 // loop_footer_branch
          %55 = sbr.rel target = $region50
        $region55: #{cnn_forward.1} parent=47 // loop_exit
          _
      $region48: #{cnn_forward.1} parent=32 // pred_fallthru
        _
      %p575 = pneg %p51
      // Predicated region
      $region56: #{cnn_forward.1} parent=32 // pred_check
        _
      $region57: #{cnn_forward.1} parent=32 // pred_check_branch
        %577 = sbr.rel (%p51) target = $region59
      $region58: #{cnn_forward.1} parent=32 // pred_region
        %s578 = sand.u32 2048, 7
      $region59: #{cnn_forward.1} parent=32 // pred_fallthru
        _
    $region33: #{cnn_forward.1} parent=1 // pred_fallthru
      _
    // Predicated region
    $region34: #{cnn_forward.1} parent=1 // pred_check
      %p35 = pneg %p31
    $region35: #{cnn_forward.1} parent=1 // pred_check_branch
      %37 = sbr.rel (%p35) target = $region37
    $region36: #{cnn_forward.1} parent=1 // pred_region
      %s38 = sshll.u32 1, 2048
      %s39 = ssub.s32 %s38, 1
      loop: start=0, step=1, limit=1
      $region38: #{cnn_forward.1} parent=36 // loop_pre_header
        _
      $region39: #{cnn_forward.1} parent=36 // loop_header
        %s41 = sphi 0, %s45
        %p42 = scmp.ge.s32.totalorder %s41, 1
        %s46 = sphi %s5, %s5
        %s47 = sphi [#allocation4], [#allocation4]
      $region40: #{cnn_forward.1} parent=36 // loop_header_branch
        %44 = sbr.rel (%p42) target = $region44
      $region41: #{cnn_forward.1} parent=36 // loop_body
        %v48 = vld [vmem:[%s46] sm:%s39]
        %49 = vst [vmem:[%s47] sm:%s39] %v48
      $region42: #{cnn_forward.1} parent=36 // loop_footer
        %s45 = sadd.s32 1, %s41
      $region43: #{cnn_forward.1} parent=36 // loop_footer_branch
        %40 = sbr.rel target = $region39
      $region44: #{cnn_forward.1} parent=36 // loop_exit
        _
    $region37: #{cnn_forward.1} parent=1 // pred_fallthru
      _
    // Predicated region
    $region60: #{cnn_forward.1} parent=1 // pred_check
      _
    $region61: #{cnn_forward.1} parent=1 // pred_check_branch
      %581 = sbr.rel (0) target = $region63
    $region62: #{cnn_forward.1} parent=1 // pred_region
      %582 = vsyncadd [#allocation6], 32768
    $region63: #{cnn_forward.1} parent=1 // pred_fallthru
      _
    %s583 = scalar_lea.sflag [#allocation6], 1
    %p585 = scmp.lt.u32.totalorder 512, 8
    %p586 = pneg %p585
    // Predicated region
    $region64: #{cnn_forward.1} parent=1 // pred_check
      _
    $region65: #{cnn_forward.1} parent=1 // pred_check_branch
      %588 = sbr.rel (%p585) target = $region67
    $region66: #{cnn_forward.1} parent=1 // pred_region
      %s604 = sand.u32 512, 7
      %p605 = scmp.eq.s32.totalorder %s604, 0
      // Predicated region
      $region79: #{cnn_forward.1} parent=66 // pred_check
        %p606 = pneg %p605
      $region80: #{cnn_forward.1} parent=66 // pred_check_branch
        %608 = sbr.rel (%p606) target = $region82
      $region81: #{cnn_forward.1} parent=66 // pred_region
        loop: start=0, step=1, limit=1
        $region83: #{cnn_forward.1} parent=81 // loop_pre_header
          _
        $region84: #{cnn_forward.1} parent=81 // loop_header
          %s610 = sphi 0, %s614
          %p611 = scmp.ge.s32.totalorder %s610, 1
          %s615 = sphi %s7, %s7
          %s616 = sphi [#allocation5], [#allocation5]
        $region85: #{cnn_forward.1} parent=81 // loop_header_branch
          %613 = sbr.rel (%p611) target = $region89
        $region86: #{cnn_forward.1} parent=81 // loop_body
          %v617 = vld [vmem:[%s615] sm:$0xff]
          %618 = vst [vmem:[%s616] sm:$0xff] %v617
          %v619 = vld [vmem:[%s615 + $0x8] sm:$0xff]
          %620 = vst [vmem:[%s616 + $0x8] sm:$0xff] %v619
          %v621 = vld [vmem:[%s615 + $0x10] sm:$0xff]
          %622 = vst [vmem:[%s616 + $0x10] sm:$0xff] %v621
          %v623 = vld [vmem:[%s615 + $0x18] sm:$0xff]
          %624 = vst [vmem:[%s616 + $0x18] sm:$0xff] %v623
          %v625 = vld [vmem:[%s615 + $0x20] sm:$0xff]
          %626 = vst [vmem:[%s616 + $0x20] sm:$0xff] %v625
          %v627 = vld [vmem:[%s615 + $0x28] sm:$0xff]
          %628 = vst [vmem:[%s616 + $0x28] sm:$0xff] %v627
          %v629 = vld [vmem:[%s615 + $0x30] sm:$0xff]
          %630 = vst [vmem:[%s616 + $0x30] sm:$0xff] %v629
          %v631 = vld [vmem:[%s615 + $0x38] sm:$0xff]
          %632 = vst [vmem:[%s616 + $0x38] sm:$0xff] %v631
          %v633 = vld [vmem:[%s615 + $0x40] sm:$0xff]
          %634 = vst [vmem:[%s616 + $0x40] sm:$0xff] %v633
          %v635 = vld [vmem:[%s615 + $0x48] sm:$0xff]
          %636 = vst [vmem:[%s616 + $0x48] sm:$0xff] %v635
          %v637 = vld [vmem:[%s615 + $0x50] sm:$0xff]
          %638 = vst [vmem:[%s616 + $0x50] sm:$0xff] %v637
          %v639 = vld [vmem:[%s615 + $0x58] sm:$0xff]
          %640 = vst [vmem:[%s616 + $0x58] sm:$0xff] %v639
          %v641 = vld [vmem:[%s615 + $0x60] sm:$0xff]
          %642 = vst [vmem:[%s616 + $0x60] sm:$0xff] %v641
          %v643 = vld [vmem:[%s615 + $0x68] sm:$0xff]
          %644 = vst [vmem:[%s616 + $0x68] sm:$0xff] %v643
          %v645 = vld [vmem:[%s615 + $0x70] sm:$0xff]
          %646 = vst [vmem:[%s616 + $0x70] sm:$0xff] %v645
          %v647 = vld [vmem:[%s615 + $0x78] sm:$0xff]
          %648 = vst [vmem:[%s616 + $0x78] sm:$0xff] %v647
          %v649 = vld [vmem:[%s615 + $0x80] sm:$0xff]
          %650 = vst [vmem:[%s616 + $0x80] sm:$0xff] %v649
          %v651 = vld [vmem:[%s615 + $0x88] sm:$0xff]
          %652 = vst [vmem:[%s616 + $0x88] sm:$0xff] %v651
          %v653 = vld [vmem:[%s615 + $0x90] sm:$0xff]
          %654 = vst [vmem:[%s616 + $0x90] sm:$0xff] %v653
          %v655 = vld [vmem:[%s615 + $0x98] sm:$0xff]
          %656 = vst [vmem:[%s616 + $0x98] sm:$0xff] %v655
          %v657 = vld [vmem:[%s615 + $0xa0] sm:$0xff]
          %658 = vst [vmem:[%s616 + $0xa0] sm:$0xff] %v657
          %v659 = vld [vmem:[%s615 + $0xa8] sm:$0xff]
          %660 = vst [vmem:[%s616 + $0xa8] sm:$0xff] %v659
          %v661 = vld [vmem:[%s615 + $0xb0] sm:$0xff]
          %662 = vst [vmem:[%s616 + $0xb0] sm:$0xff] %v661
          %v663 = vld [vmem:[%s615 + $0xb8] sm:$0xff]
          %664 = vst [vmem:[%s616 + $0xb8] sm:$0xff] %v663
          %v665 = vld [vmem:[%s615 + $0xc0] sm:$0xff]
          %666 = vst [vmem:[%s616 + $0xc0] sm:$0xff] %v665
          %v667 = vld [vmem:[%s615 + $0xc8] sm:$0xff]
          %668 = vst [vmem:[%s616 + $0xc8] sm:$0xff] %v667
          %v669 = vld [vmem:[%s615 + $0xd0] sm:$0xff]
          %670 = vst [vmem:[%s616 + $0xd0] sm:$0xff] %v669
          %v671 = vld [vmem:[%s615 + $0xd8] sm:$0xff]
          %672 = vst [vmem:[%s616 + $0xd8] sm:$0xff] %v671
          %v673 = vld [vmem:[%s615 + $0xe0] sm:$0xff]
          %674 = vst [vmem:[%s616 + $0xe0] sm:$0xff] %v673
          %v675 = vld [vmem:[%s615 + $0xe8] sm:$0xff]
          %676 = vst [vmem:[%s616 + $0xe8] sm:$0xff] %v675
          %v677 = vld [vmem:[%s615 + $0xf0] sm:$0xff]
          %678 = vst [vmem:[%s616 + $0xf0] sm:$0xff] %v677
          %v679 = vld [vmem:[%s615 + $0xf8] sm:$0xff]
          %680 = vst [vmem:[%s616 + $0xf8] sm:$0xff] %v679
          %v681 = vld [vmem:[%s615 + $0x100] sm:$0xff]
          %682 = vst [vmem:[%s616 + $0x100] sm:$0xff] %v681
          %v683 = vld [vmem:[%s615 + $0x108] sm:$0xff]
          %684 = vst [vmem:[%s616 + $0x108] sm:$0xff] %v683
          %v685 = vld [vmem:[%s615 + $0x110] sm:$0xff]
          %686 = vst [vmem:[%s616 + $0x110] sm:$0xff] %v685
          %v687 = vld [vmem:[%s615 + $0x118] sm:$0xff]
          %688 = vst [vmem:[%s616 + $0x118] sm:$0xff] %v687
          %v689 = vld [vmem:[%s615 + $0x120] sm:$0xff]
          %690 = vst [vmem:[%s616 + $0x120] sm:$0xff] %v689
          %v691 = vld [vmem:[%s615 + $0x128] sm:$0xff]
          %692 = vst [vmem:[%s616 + $0x128] sm:$0xff] %v691
          %v693 = vld [vmem:[%s615 + $0x130] sm:$0xff]
          %694 = vst [vmem:[%s616 + $0x130] sm:$0xff] %v693
          %v695 = vld [vmem:[%s615 + $0x138] sm:$0xff]
          %696 = vst [vmem:[%s616 + $0x138] sm:$0xff] %v695
          %v697 = vld [vmem:[%s615 + $0x140] sm:$0xff]
          %698 = vst [vmem:[%s616 + $0x140] sm:$0xff] %v697
          %v699 = vld [vmem:[%s615 + $0x148] sm:$0xff]
          %700 = vst [vmem:[%s616 + $0x148] sm:$0xff] %v699
          %v701 = vld [vmem:[%s615 + $0x150] sm:$0xff]
          %702 = vst [vmem:[%s616 + $0x150] sm:$0xff] %v701
          %v703 = vld [vmem:[%s615 + $0x158] sm:$0xff]
          %704 = vst [vmem:[%s616 + $0x158] sm:$0xff] %v703
          %v705 = vld [vmem:[%s615 + $0x160] sm:$0xff]
          %706 = vst [vmem:[%s616 + $0x160] sm:$0xff] %v705
          %v707 = vld [vmem:[%s615 + $0x168] sm:$0xff]
          %708 = vst [vmem:[%s616 + $0x168] sm:$0xff] %v707
          %v709 = vld [vmem:[%s615 + $0x170] sm:$0xff]
          %710 = vst [vmem:[%s616 + $0x170] sm:$0xff] %v709
          %v711 = vld [vmem:[%s615 + $0x178] sm:$0xff]
          %712 = vst [vmem:[%s616 + $0x178] sm:$0xff] %v711
          %v713 = vld [vmem:[%s615 + $0x180] sm:$0xff]
          %714 = vst [vmem:[%s616 + $0x180] sm:$0xff] %v713
          %v715 = vld [vmem:[%s615 + $0x188] sm:$0xff]
          %716 = vst [vmem:[%s616 + $0x188] sm:$0xff] %v715
          %v717 = vld [vmem:[%s615 + $0x190] sm:$0xff]
          %718 = vst [vmem:[%s616 + $0x190] sm:$0xff] %v717
          %v719 = vld [vmem:[%s615 + $0x198] sm:$0xff]
          %720 = vst [vmem:[%s616 + $0x198] sm:$0xff] %v719
          %v721 = vld [vmem:[%s615 + $0x1a0] sm:$0xff]
          %722 = vst [vmem:[%s616 + $0x1a0] sm:$0xff] %v721
          %v723 = vld [vmem:[%s615 + $0x1a8] sm:$0xff]
          %724 = vst [vmem:[%s616 + $0x1a8] sm:$0xff] %v723
          %v725 = vld [vmem:[%s615 + $0x1b0] sm:$0xff]
          %726 = vst [vmem:[%s616 + $0x1b0] sm:$0xff] %v725
          %v727 = vld [vmem:[%s615 + $0x1b8] sm:$0xff]
          %728 = vst [vmem:[%s616 + $0x1b8] sm:$0xff] %v727
          %v729 = vld [vmem:[%s615 + $0x1c0] sm:$0xff]
          %730 = vst [vmem:[%s616 + $0x1c0] sm:$0xff] %v729
          %v731 = vld [vmem:[%s615 + $0x1c8] sm:$0xff]
          %732 = vst [vmem:[%s616 + $0x1c8] sm:$0xff] %v731
          %v733 = vld [vmem:[%s615 + $0x1d0] sm:$0xff]
          %734 = vst [vmem:[%s616 + $0x1d0] sm:$0xff] %v733
          %v735 = vld [vmem:[%s615 + $0x1d8] sm:$0xff]
          %736 = vst [vmem:[%s616 + $0x1d8] sm:$0xff] %v735
          %v737 = vld [vmem:[%s615 + $0x1e0] sm:$0xff]
          %738 = vst [vmem:[%s616 + $0x1e0] sm:$0xff] %v737
          %v739 = vld [vmem:[%s615 + $0x1e8] sm:$0xff]
          %740 = vst [vmem:[%s616 + $0x1e8] sm:$0xff] %v739
          %v741 = vld [vmem:[%s615 + $0x1f0] sm:$0xff]
          %742 = vst [vmem:[%s616 + $0x1f0] sm:$0xff] %v741
          %v743 = vld [vmem:[%s615 + $0x1f8] sm:$0xff]
          %744 = vst [vmem:[%s616 + $0x1f8] sm:$0xff] %v743
        $region87: #{cnn_forward.1} parent=81 // loop_footer
          %s614 = sadd.s32 1, %s610
        $region88: #{cnn_forward.1} parent=81 // loop_footer_branch
          %609 = sbr.rel target = $region84
        $region89: #{cnn_forward.1} parent=81 // loop_exit
          _
      $region82: #{cnn_forward.1} parent=66 // pred_fallthru
        _
      %p745 = pneg %p605
      // Predicated region
      $region90: #{cnn_forward.1} parent=66 // pred_check
        _
      $region91: #{cnn_forward.1} parent=66 // pred_check_branch
        %747 = sbr.rel (%p605) target = $region93
      $region92: #{cnn_forward.1} parent=66 // pred_region
        %s748 = sand.u32 512, 7
      $region93: #{cnn_forward.1} parent=66 // pred_fallthru
        _
    $region67: #{cnn_forward.1} parent=1 // pred_fallthru
      _
    // Predicated region
    $region68: #{cnn_forward.1} parent=1 // pred_check
      %p589 = pneg %p585
    $region69: #{cnn_forward.1} parent=1 // pred_check_branch
      %591 = sbr.rel (%p589) target = $region71
    $region70: #{cnn_forward.1} parent=1 // pred_region
      %s592 = sshll.u32 1, 512
      %s593 = ssub.s32 %s592, 1
      loop: start=0, step=1, limit=1
      $region72: #{cnn_forward.1} parent=70 // loop_pre_header
        _
      $region73: #{cnn_forward.1} parent=70 // loop_header
        %s595 = sphi 0, %s599
        %p596 = scmp.ge.s32.totalorder %s595, 1
        %s600 = sphi %s7, %s7
        %s601 = sphi [#allocation5], [#allocation5]
      $region74: #{cnn_forward.1} parent=70 // loop_header_branch
        %598 = sbr.rel (%p596) target = $region78
      $region75: #{cnn_forward.1} parent=70 // loop_body
        %v602 = vld [vmem:[%s600] sm:%s593]
        %603 = vst [vmem:[%s601] sm:%s593] %v602
      $region76: #{cnn_forward.1} parent=70 // loop_footer
        %s599 = sadd.s32 1, %s595
      $region77: #{cnn_forward.1} parent=70 // loop_footer_branch
        %594 = sbr.rel target = $region73
      $region78: #{cnn_forward.1} parent=70 // loop_exit
        _
    $region71: #{cnn_forward.1} parent=1 // pred_fallthru
      _
    // Predicated region
    $region94: #{cnn_forward.1} parent=1 // pred_check
      _
    $region95: #{cnn_forward.1} parent=1 // pred_check_branch
      %751 = sbr.rel (0) target = $region97
    $region96: #{cnn_forward.1} parent=1 // pred_region
      %752 = vsyncadd %s583, 8192
    $region97: #{cnn_forward.1} parent=1 // pred_fallthru
      _
    %v753 = vld [vmem:[%s0] sm:$0xff]
    %v754 = vld [vmem:[%s0 + $0x8] sm:$0xff]
    %v755 = vld [vmem:[%s0 + $0x10] sm:$0xff]
    %v756 = vld [vmem:[%s0 + $0x18] sm:$0xff]
    %v757 = vld [vmem:[%s0 + $0x20] sm:$0xff]
    %v758 = vld [vmem:[%s0 + $0x28] sm:$0xff]
    %v759 = vld [vmem:[%s0 + $0x30] sm:$0xff]
    %v760 = vld [vmem:[%s0 + $0x38] sm:$0xff]
    %v761 = vld [vmem:[%s0 + $0x40] sm:$0xff]
    %v762 = vld [vmem:[%s0 + $0x48] sm:$0xff]
    %v763 = vld [vmem:[%s0 + $0x50] sm:$0xff]
    %v764 = vld [vmem:[%s0 + $0x58] sm:$0xff]
    %v765 = vld [vmem:[%s0 + $0x60] sm:$0xff]
    %v766 = vld [vmem:[%s0 + $0x68] sm:$0xff]
    %v767 = vld [vmem:[%s0 + $0x70] sm:$0xff]
    %v768 = vld [vmem:[%s0 + $0x78] sm:$0xff]
    %v769 = vld [vmem:[%s1] sm:$0xf]
    %v770 = vld [vmem:[%s1 + $0x4] sm:$0xf]
    %v771 = vld [vmem:[%s1 + $0x8] sm:$0xf]
    %v772 = vld [vmem:[%s1 + $0xc] sm:$0xf]
    %v773 = vld [vmem:[%s1 + $0x10] sm:$0xf]
    %v774 = vld [vmem:[%s1 + $0x14] sm:$0xf]
    %v775 = vld [vmem:[%s1 + $0x18] sm:$0xf]
    %v776 = vld [vmem:[%s1 + $0x1c] sm:$0xf]
    %v777 = vld [vmem:[%s1 + $0x20] sm:$0xf]
    %v778 = vld [vmem:[%s1 + $0x24] sm:$0xf]
    %v779 = vld [vmem:[%s1 + $0x28] sm:$0xf]
    %v780 = vld [vmem:[%s1 + $0x2c] sm:$0xf]
    %v781 = vld [vmem:[%s1 + $0x30] sm:$0xf]
    %v782 = vld [vmem:[%s1 + $0x34] sm:$0xf]
    %v783 = vld [vmem:[%s1 + $0x38] sm:$0xf]
    %v784 = vld [vmem:[%s1 + $0x3c] sm:$0xf]
    %v785 = vld [vmem:[%s1 + $0x40] sm:$0xf]
    %v786 = vld [vmem:[%s1 + $0x44] sm:$0xf]
    %v787 = vld [vmem:[%s2] sm:$0x1]
    %v789 = vlaneseq
    %v790 = vshrl.u32 %v789, 7
    %v791 = vsub.s32 0, %v790
    %v792 = vrot.slane %v787, %v791
    %v810 = vunpack.c.l.b16 %v753
    %v811 = vunpack.c.h.b16 %v753
    %v812 = vunpack.c.l.b16 %v754
    %v813 = vunpack.c.h.b16 %v754
    %v814 = vunpack.c.l.b16 %v755
    %v815 = vunpack.c.h.b16 %v755
    %v816 = vunpack.c.l.b16 %v756
    %v817 = vunpack.c.h.b16 %v756
    %v818 = vunpack.c.l.b16 %v757
    %v819 = vunpack.c.h.b16 %v757
    %v820 = vunpack.c.l.b16 %v758
    %v821 = vunpack.c.h.b16 %v758
    %v822 = vunpack.c.l.b16 %v759
    %v823 = vunpack.c.h.b16 %v759
    %v824 = vunpack.c.l.b16 %v760
    %v825 = vunpack.c.h.b16 %v760
    %v826 = vunpack.c.l.b16 %v761
    %v827 = vunpack.c.h.b16 %v761
    %v828 = vunpack.c.l.b16 %v762
    %v829 = vunpack.c.h.b16 %v762
    %v830 = vunpack.c.l.b16 %v763
    %v831 = vunpack.c.h.b16 %v763
    %v832 = vunpack.c.l.b16 %v764
    %v833 = vunpack.c.h.b16 %v764
    %v834 = vunpack.c.l.b16 %v765
    %v835 = vunpack.c.h.b16 %v765
    %v836 = vunpack.c.l.b16 %v766
    %v837 = vunpack.c.h.b16 %v766
    %v838 = vunpack.c.l.b16 %v767
    %v839 = vunpack.c.h.b16 %v767
    %v840 = vunpack.c.l.b16 %v768
    %v841 = vunpack.c.h.b16 %v768
    %v842 = vpack.c.b16 %v812, %v810
    %v843 = vpack.c.b16 %v813, %v811
    %v844 = vpack.c.b16 %v816, %v814
    %v845 = vpack.c.b16 %v817, %v815
    %v846 = vpack.c.b16 %v820, %v818
    %v847 = vpack.c.b16 %v821, %v819
    %v848 = vpack.c.b16 %v824, %v822
    %v849 = vpack.c.b16 %v825, %v823
    %v850 = vpack.c.b16 %v828, %v826
    %v851 = vpack.c.b16 %v829, %v827
    %v852 = vpack.c.b16 %v832, %v830
    %v853 = vpack.c.b16 %v833, %v831
    %v854 = vpack.c.b16 %v836, %v834
    %v855 = vpack.c.b16 %v837, %v835
    %v856 = vpack.c.b16 %v840, %v838
    %v857 = vpack.c.b16 %v841, %v839
    %v884 = vunpack.c.l.b16 %v769
    %v885 = vunpack.c.l.b16 %v770
    %v886 = vunpack.c.l.b16 %v771
    %v887 = vunpack.c.l.b16 %v772
    %v888 = vunpack.c.l.b16 %v773
    %v889 = vunpack.c.l.b16 %v774
    %v890 = vunpack.c.l.b16 %v775
    %v891 = vunpack.c.l.b16 %v776
    %v892 = vunpack.c.l.b16 %v777
    %v893 = vunpack.c.l.b16 %v778
    %v894 = vunpack.c.l.b16 %v779
    %v895 = vunpack.c.l.b16 %v780
    %v896 = vunpack.c.l.b16 %v781
    %v897 = vunpack.c.l.b16 %v782
    %v898 = vunpack.c.l.b16 %v783
    %v899 = vunpack.c.l.b16 %v784
    %v900 = vunpack.c.l.b16 %v785
    %v901 = vunpack.c.l.b16 %v786
    %v902 = vpack.c.b16 %v885, %v884
    %v903 = vpack.c.b16 %v887, %v886
    %v904 = vpack.c.b16 %v889, %v888
    %v905 = vpack.c.b16 %v891, %v890
    %v906 = vpack.c.b16 %v893, %v892
    %v907 = vpack.c.b16 %v895, %v894
    %v908 = vpack.c.b16 %v897, %v896
    %v909 = vpack.c.b16 %v899, %v898
    %v910 = vpack.c.b16 %v901, %v900
    %vm920 = vcmask 130048
    %v922 = vsel %vm920, %v843, 0
    %v925 = vsel %vm920, %v845, 0
    %v928 = vsel %vm920, %v847, 0
    %v931 = vsel %vm920, %v849, 0
    %v934 = vsel %vm920, %v851, 0
    %v937 = vsel %vm920, %v853, 0
    %v940 = vsel %vm920, %v855, 0
    %v943 = vsel %vm920, %v857, 0
    %945 = vmatprep.subr.bf16.mxu0 0
    %946 = vmatpush1.bf16.msra.mxu0 %v909
    %947 = vmatprep.subr.bf16.mxu0 0
    %948 = vmatpush1.bf16.msra.mxu0 %v908
    %949 = vmatprep.subr.bf16.mxu0 0
    %950 = vmatpush1.bf16.msra.mxu0 %v907
    %951 = vmatprep.subr.bf16.mxu0 0
    %952 = vmatpush1.bf16.msra.mxu0 %v906
    %953 = vmatprep.subr.bf16.mxu0 0
    %954 = vmatpush1.bf16.msra.mxu0 %v905
    %955 = vmatprep.subr.bf16.mxu0 0
    %956 = vmatpush1.bf16.msra.mxu0 %v904
    %957 = vmatprep.subr.bf16.mxu0 0
    %958 = vmatpush1.bf16.msra.mxu0 %v903
    %959 = vmatprep.subr.bf16.mxu0 0
    %960 = vmatpush1.bf16.msra.mxu0 %v902
    %961 = vmatprep.subr.bf16.mxu0 0
    %962 = vmatpush2.bf16.msra.mxu0 0
    %963 = vmatprep.subr.bf16.mxu0 0
    %964 = vmatpush2.bf16.msra.mxu0 0
    %965 = vmatprep.subr.bf16.mxu0 0
    %966 = vmatpush2.bf16.msra.mxu0 0
    %967 = vmatprep.subr.bf16.mxu0 0
    %968 = vmatpush2.bf16.msra.mxu0 0
    %969 = vmatprep.subr.bf16.mxu0 0
    %970 = vmatpush2.bf16.msra.mxu0 0
    %971 = vmatprep.subr.bf16.mxu0 0
    %972 = vmatpush2.bf16.msra.mxu0 0
    %973 = vmatprep.subr.bf16.mxu0 0
    %974 = vmatpush2.bf16.msra.mxu0 0
    %975 = vmatprep.subr.bf16.mxu0 0
    %976 = vmatpush2.bf16.msra.mxu0 %v910
    %977 = vmatprep.mubr.bf16.mxu0 %v922
    %978 = vmatmul.mubr.bf16.gmra.mxu0 %v842
    %v979 = vpop.f32.mrf.mxu0
    %v980 = vadd.f32 %v792, %v979
    %v981 = vpop.f32.mrf.mxu0
    %v982 = vpop.f32.mrf.mxu0
    %v983 = vadd.f32 %v792, %v982
    %v984 = vpop.f32.mrf.mxu0
    %985 = vmatprep.mubr.bf16.mxu0 %v925
    %986 = vmatmul.mubr.bf16.gmra.mxu0 %v844
    %v987 = vpop.f32.mrf.mxu0
    %v988 = vadd.f32 %v792, %v987
    %v989 = vpop.f32.mrf.mxu0
    %v990 = vpop.f32.mrf.mxu0
    %v991 = vadd.f32 %v792, %v990
    %v992 = vpop.f32.mrf.mxu0
    %993 = vmatprep.mubr.bf16.mxu0 %v928
    %994 = vmatmul.mubr.bf16.gmra.mxu0 %v846
    %v995 = vpop.f32.mrf.mxu0
    %v996 = vadd.f32 %v792, %v995
    %v997 = vpop.f32.mrf.mxu0
    %v998 = vpop.f32.mrf.mxu0
    %v999 = vadd.f32 %v792, %v998
    %v1000 = vpop.f32.mrf.mxu0
    %1001 = vmatprep.mubr.bf16.mxu0 %v931
    %1002 = vmatmul.mubr.bf16.gmra.mxu0 %v848
    %v1003 = vpop.f32.mrf.mxu0
    %v1004 = vadd.f32 %v792, %v1003
    %v1005 = vpop.f32.mrf.mxu0
    %v1006 = vpop.f32.mrf.mxu0
    %v1007 = vadd.f32 %v792, %v1006
    %v1008 = vpop.f32.mrf.mxu0
    %1009 = vmatprep.mubr.bf16.mxu0 %v934
    %1010 = vmatmul.mubr.bf16.gmra.mxu0 %v850
    %v1011 = vpop.f32.mrf.mxu0
    %v1012 = vadd.f32 %v792, %v1011
    %v1013 = vpop.f32.mrf.mxu0
    %v1014 = vpop.f32.mrf.mxu0
    %v1015 = vadd.f32 %v792, %v1014
    %v1016 = vpop.f32.mrf.mxu0
    %1017 = vmatprep.mubr.bf16.mxu0 %v937
    %1018 = vmatmul.mubr.bf16.gmra.mxu0 %v852
    %v1019 = vpop.f32.mrf.mxu0
    %v1020 = vadd.f32 %v792, %v1019
    %v1021 = vpop.f32.mrf.mxu0
    %v1022 = vpop.f32.mrf.mxu0
    %v1023 = vadd.f32 %v792, %v1022
    %v1024 = vpop.f32.mrf.mxu0
    %1025 = vmatprep.mubr.bf16.mxu0 %v940
    %1026 = vmatmul.mubr.bf16.gmra.mxu0 %v854
    %v1027 = vpop.f32.mrf.mxu0
    %v1028 = vadd.f32 %v792, %v1027
    %v1029 = vpop.f32.mrf.mxu0
    %v1030 = vpop.f32.mrf.mxu0
    %v1031 = vadd.f32 %v792, %v1030
    %v1032 = vpop.f32.mrf.mxu0
    %1033 = vmatprep.mubr.bf16.mxu0 %v943
    %1034 = vmatmul.mubr.bf16.gmra.mxu0 %v856
    %v1035 = vpop.f32.mrf.mxu0
    %v1036 = vadd.f32 %v792, %v1035
    %v1037 = vpop.f32.mrf.mxu0
    %v1038 = vpop.f32.mrf.mxu0
    %v1039 = vadd.f32 %v792, %v1038
    %v1040 = vpop.f32.mrf.mxu0
    %1041 = vdwg.mxu0
    %v1042 = vmax.f32 %v980, 0.0
    %v1043 = vmax.f32 %v983, 0.0
    %v1044 = vmax.f32 %v988, 0.0
    %v1045 = vmax.f32 %v991, 0.0
    %v1046 = vmax.f32 %v996, 0.0
    %v1047 = vmax.f32 %v999, 0.0
    %v1048 = vmax.f32 %v1004, 0.0
    %v1049 = vmax.f32 %v1007, 0.0
    %v1050 = vmax.f32 %v1012, 0.0
    %v1051 = vmax.f32 %v1015, 0.0
    %v1052 = vmax.f32 %v1020, 0.0
    %v1053 = vmax.f32 %v1023, 0.0
    %v1054 = vmax.f32 %v1028, 0.0
    %v1055 = vmax.f32 %v1031, 0.0
    %v1056 = vmax.f32 %v1036, 0.0
    %v1057 = vmax.f32 %v1039, 0.0
    %v1058 = vmax.f32 %v1042, %v1046
    %v1059 = vmax.f32 %v1043, %v1047
    %v1060 = vmax.f32 %v1044, %v1048
    %v1061 = vmax.f32 %v1045, %v1049
    %v1062 = vmax.f32 %v1050, %v1054
    %v1063 = vmax.f32 %v1051, %v1055
    %v1064 = vmax.f32 %v1052, %v1056
    %v1065 = vmax.f32 %v1053, %v1057
    %v1066 = vmax.f32 %v1058, %v1062
    %v1067 = vmax.f32 %v1059, %v1063
    %v1068 = vmax.f32 %v1060, %v1064
    %v1069 = vmax.f32 %v1061, %v1065
    %1070 = vst [vmem:[#allocation2] sm:$0xff] 0.0
    %1071 = vst [vmem:[#allocation2 + $0x8] sm:$0xff] 0.0
    %1072 = vst [vmem:[#allocation2 + $0x10] sm:$0xff] 0.0
    %1073 = vst [vmem:[#allocation2 + $0x18] sm:$0xff] 0.0
    %1074 = vst [vmem:[#allocation2 + $0x20] sm:$0xff] 0.0
    %1075 = vst [vmem:[#allocation2 + $0x28] sm:$0xff] 0.0
    %1076 = vst [vmem:[#allocation2 + $0x30] sm:$0xff] 0.0
    %1077 = vst [vmem:[#allocation2 + $0x38] sm:$0xff] 0.0
    %1078 = vst [vmem:[#allocation2 + $0x40] sm:$0xff] 0.0
    %1079 = vst [vmem:[#allocation2 + $0x48] sm:$0xff] 0.0
    %1080 = vst [vmem:[#allocation2 + $0x50] sm:$0xff] 0.0
    %1081 = vst [vmem:[#allocation2 + $0x58] sm:$0xff] 0.0
    %1082 = vst [vmem:[#allocation2 + $0x60] sm:$0xff] 0.0
    %1083 = vst [vmem:[#allocation2 + $0x68] sm:$0xff] 0.0
    %1084 = vst [vmem:[#allocation2 + $0x70] sm:$0xff] 0.0
    %1085 = vst [vmem:[#allocation2 + $0x78] sm:$0xff] 0.0
    %1086 = vst [vmem:[#allocation2 + $0x80] sm:$0xff] 0.0
    %1087 = vst [vmem:[#allocation2 + $0x88] sm:$0xff] 0.0
    %1088 = vst [vmem:[#allocation2 + $0x90] sm:$0xff] 0.0
    %1089 = vst [vmem:[#allocation2 + $0x98] sm:$0xff] 0.0
    %1090 = vst [vmem:[#allocation2 + $0xa0] sm:$0xff] 0.0
    %1091 = vst [vmem:[#allocation2 + $0xa8] sm:$0xff] 0.0
    %1092 = vst [vmem:[#allocation2 + $0x2a] sm:$0xf] %v1066
    %1093 = vst [vmem:[#allocation2 + $0x2e] sm:$0xf0] %v1066
    %1094 = vst [vmem:[#allocation2 + $0x3a] sm:$0xf] %v1067
    %1095 = vst [vmem:[#allocation2 + $0x3e] sm:$0xf0] %v1067
    %1096 = vst [vmem:[#allocation2 + $0x6a] sm:$0xf] %v1068
    %1097 = vst [vmem:[#allocation2 + $0x6e] sm:$0xf0] %v1068
    %1098 = vst [vmem:[#allocation2 + $0x7a] sm:$0xf] %v1069
    %1099 = vst [vmem:[#allocation2 + $0x7e] sm:$0xf0] %v1069
    %v1100 = vld [vmem:[#allocation2] sm:$0xff]
    %v1101 = vld [vmem:[#allocation2 + $0x8] sm:$0xff]
    %v1102 = vld [vmem:[#allocation2 + $0x10] sm:$0xff]
    %v1103 = vld [vmem:[#allocation2 + $0x18] sm:$0xff]
    %v1104 = vld [vmem:[#allocation2 + $0x20] sm:$0xff]
    %v1105 = vld [vmem:[#allocation2 + $0x28] sm:$0xff]
    %v1106 = vld [vmem:[#allocation2 + $0x30] sm:$0xff]
    %v1107 = vld [vmem:[#allocation2 + $0x38] sm:$0xff]
    %v1108 = vld [vmem:[#allocation2 + $0x40] sm:$0xff]
    %v1109 = vld [vmem:[#allocation2 + $0x48] sm:$0xff]
    %v1110 = vld [vmem:[#allocation2 + $0x50] sm:$0xff]
    %v1111 = vld [vmem:[#allocation2 + $0x58] sm:$0xff]
    %v1112 = vld [vmem:[#allocation2 + $0x60] sm:$0xff]
    %v1113 = vld [vmem:[#allocation2 + $0x68] sm:$0xff]
    %v1114 = vld [vmem:[#allocation2 + $0x70] sm:$0xff]
    %v1115 = vld [vmem:[#allocation2 + $0x78] sm:$0xff]
    %v1116 = vld [vmem:[#allocation2 + $0x80] sm:$0xff]
    %v1117 = vld [vmem:[#allocation2 + $0x88] sm:$0xff]
    %v1118 = vld [vmem:[#allocation2 + $0x90] sm:$0xff]
    %1119 = vrot.lane.b32.xlu0 %v1101, 25
    %v1120 = vpop.permute.xlu0 %1119
    %1121 = vrot.lane.b32.xlu0 %v1102, 25
    %v1122 = vpop.permute.xlu0 %1121
    %1123 = vrot.lane.b32.xlu0 %v1103, 25
    %v1124 = vpop.permute.xlu0 %1123
    %1125 = vrot.lane.b32.xlu0 %v1104, 25
    %v1126 = vpop.permute.xlu0 %1125
    %1127 = vrot.lane.b32.xlu0 %v1105, 25
    %v1128 = vpop.permute.xlu0 %1127
    %1129 = vrot.lane.b32.xlu0 %v1106, 25
    %v1130 = vpop.permute.xlu0 %1129
    %1131 = vrot.lane.b32.xlu0 %v1107, 25
    %v1132 = vpop.permute.xlu0 %1131
    %1133 = vrot.lane.b32.xlu0 %v1108, 25
    %v1134 = vpop.permute.xlu0 %1133
    %1135 = vrot.lane.b32.xlu0 %v1109, 25
    %v1136 = vpop.permute.xlu0 %1135
    %1137 = vrot.lane.b32.xlu0 %v1110, 25
    %v1138 = vpop.permute.xlu0 %1137
    %1139 = vrot.lane.b32.xlu0 %v1111, 25
    %v1140 = vpop.permute.xlu0 %1139
    %1141 = vrot.lane.b32.xlu0 %v1112, 25
    %v1142 = vpop.permute.xlu0 %1141
    %1143 = vrot.lane.b32.xlu0 %v1113, 25
    %v1144 = vpop.permute.xlu0 %1143
    %1145 = vrot.lane.b32.xlu0 %v1114, 25
    %v1146 = vpop.permute.xlu0 %1145
    %1147 = vrot.lane.b32.xlu0 %v1115, 25
    %v1148 = vpop.permute.xlu0 %1147
    %1149 = vrot.lane.b32.xlu0 %v1116, 25
    %v1150 = vpop.permute.xlu0 %1149
    %1151 = vrot.lane.b32.xlu0 %v1117, 25
    %v1152 = vpop.permute.xlu0 %1151
    %1153 = vrot.lane.b32.xlu0 %v1118, 25
    %v1154 = vpop.permute.xlu0 %1153
    %v1155 = vadd.f32 %v1100, %v1120
    %v1156 = vadd.f32 %v1101, %v1122
    %v1157 = vadd.f32 %v1102, %v1124
    %v1158 = vadd.f32 %v1103, %v1126
    %v1159 = vadd.f32 %v1104, %v1128
    %v1160 = vadd.f32 %v1105, %v1130
    %v1161 = vadd.f32 %v1106, %v1132
    %v1162 = vadd.f32 %v1107, %v1134
    %v1163 = vadd.f32 %v1108, %v1136
    %v1164 = vadd.f32 %v1109, %v1138
    %v1165 = vadd.f32 %v1110, %v1140
    %v1166 = vadd.f32 %v1111, %v1142
    %v1167 = vadd.f32 %v1112, %v1144
    %v1168 = vadd.f32 %v1113, %v1146
    %v1169 = vadd.f32 %v1114, %v1148
    %v1170 = vadd.f32 %v1115, %v1150
    %v1171 = vadd.f32 %v1116, %v1152
    %v1172 = vadd.f32 %v1117, %v1154
    %v1173 = vld [vmem:[#allocation2 + $0x98] sm:$0xff]
    %1174 = vrot.lane.b32.xlu0 %v1102, 50
    %v1175 = vpop.permute.xlu0 %1174
    %1176 = vrot.lane.b32.xlu0 %v1103, 50
    %v1177 = vpop.permute.xlu0 %1176
    %1178 = vrot.lane.b32.xlu0 %v1104, 50
    %v1179 = vpop.permute.xlu0 %1178
    %1180 = vrot.lane.b32.xlu0 %v1105, 50
    %v1181 = vpop.permute.xlu0 %1180
    %1182 = vrot.lane.b32.xlu0 %v1106, 50
    %v1183 = vpop.permute.xlu0 %1182
    %1184 = vrot.lane.b32.xlu0 %v1107, 50
    %v1185 = vpop.permute.xlu0 %1184
    %1186 = vrot.lane.b32.xlu0 %v1108, 50
    %v1187 = vpop.permute.xlu0 %1186
    %1188 = vrot.lane.b32.xlu0 %v1109, 50
    %v1189 = vpop.permute.xlu0 %1188
    %1190 = vrot.lane.b32.xlu0 %v1110, 50
    %v1191 = vpop.permute.xlu0 %1190
    %1192 = vrot.lane.b32.xlu0 %v1111, 50
    %v1193 = vpop.permute.xlu0 %1192
    %1194 = vrot.lane.b32.xlu0 %v1112, 50
    %v1195 = vpop.permute.xlu0 %1194
    %1196 = vrot.lane.b32.xlu0 %v1113, 50
    %v1197 = vpop.permute.xlu0 %1196
    %1198 = vrot.lane.b32.xlu0 %v1114, 50
    %v1199 = vpop.permute.xlu0 %1198
    %1200 = vrot.lane.b32.xlu0 %v1115, 50
    %v1201 = vpop.permute.xlu0 %1200
    %1202 = vrot.lane.b32.xlu0 %v1116, 50
    %v1203 = vpop.permute.xlu0 %1202
    %1204 = vrot.lane.b32.xlu0 %v1117, 50
    %v1205 = vpop.permute.xlu0 %1204
    %1206 = vrot.lane.b32.xlu0 %v1118, 50
    %v1207 = vpop.permute.xlu0 %1206
    %1208 = vrot.lane.b32.xlu0 %v1173, 50
    %v1209 = vpop.permute.xlu0 %1208
    %v1210 = vadd.f32 %v1155, %v1175
    %v1211 = vadd.f32 %v1156, %v1177
    %v1212 = vadd.f32 %v1157, %v1179
    %v1213 = vadd.f32 %v1158, %v1181
    %v1214 = vadd.f32 %v1159, %v1183
    %v1215 = vadd.f32 %v1160, %v1185
    %v1216 = vadd.f32 %v1161, %v1187
    %v1217 = vadd.f32 %v1162, %v1189
    %v1218 = vadd.f32 %v1163, %v1191
    %v1219 = vadd.f32 %v1164, %v1193
    %v1220 = vadd.f32 %v1165, %v1195
    %v1221 = vadd.f32 %v1166, %v1197
    %v1222 = vadd.f32 %v1167, %v1199
    %v1223 = vadd.f32 %v1168, %v1201
    %v1224 = vadd.f32 %v1169, %v1203
    %v1225 = vadd.f32 %v1170, %v1205
    %v1226 = vadd.f32 %v1171, %v1207
    %v1227 = vadd.f32 %v1172, %v1209
    %v1228 = vld [vmem:[#allocation2 + $0xa0] sm:$0xff]
    %1229 = vrot.lane.b32.xlu0 %v1103, 75
    %v1230 = vpop.permute.xlu0 %1229
    %1231 = vrot.lane.b32.xlu0 %v1104, 75
    %v1232 = vpop.permute.xlu0 %1231
    %1233 = vrot.lane.b32.xlu0 %v1105, 75
    %v1234 = vpop.permute.xlu0 %1233
    %1235 = vrot.lane.b32.xlu0 %v1106, 75
    %v1236 = vpop.permute.xlu0 %1235
    %1237 = vrot.lane.b32.xlu0 %v1107, 75
    %v1238 = vpop.permute.xlu0 %1237
    %1239 = vrot.lane.b32.xlu0 %v1108, 75
    %v1240 = vpop.permute.xlu0 %1239
    %1241 = vrot.lane.b32.xlu0 %v1109, 75
    %v1242 = vpop.permute.xlu0 %1241
    %1243 = vrot.lane.b32.xlu0 %v1110, 75
    %v1244 = vpop.permute.xlu0 %1243
    %1245 = vrot.lane.b32.xlu0 %v1111, 75
    %v1246 = vpop.permute.xlu0 %1245
    %1247 = vrot.lane.b32.xlu0 %v1112, 75
    %v1248 = vpop.permute.xlu0 %1247
    %1249 = vrot.lane.b32.xlu0 %v1113, 75
    %v1250 = vpop.permute.xlu0 %1249
    %1251 = vrot.lane.b32.xlu0 %v1114, 75
    %v1252 = vpop.permute.xlu0 %1251
    %1253 = vrot.lane.b32.xlu0 %v1115, 75
    %v1254 = vpop.permute.xlu0 %1253
    %1255 = vrot.lane.b32.xlu0 %v1116, 75
    %v1256 = vpop.permute.xlu0 %1255
    %1257 = vrot.lane.b32.xlu0 %v1117, 75
    %v1258 = vpop.permute.xlu0 %1257
    %1259 = vrot.lane.b32.xlu0 %v1118, 75
    %v1260 = vpop.permute.xlu0 %1259
    %1261 = vrot.lane.b32.xlu0 %v1173, 75
    %v1262 = vpop.permute.xlu0 %1261
    %1263 = vrot.lane.b32.xlu0 %v1228, 75
    %v1264 = vpop.permute.xlu0 %1263
    %v1265 = vadd.f32 %v1210, %v1230
    %v1266 = vadd.f32 %v1211, %v1232
    %v1267 = vadd.f32 %v1212, %v1234
    %v1268 = vadd.f32 %v1213, %v1236
    %v1269 = vadd.f32 %v1214, %v1238
    %v1270 = vadd.f32 %v1215, %v1240
    %v1271 = vadd.f32 %v1216, %v1242
    %v1272 = vadd.f32 %v1217, %v1244
    %v1273 = vadd.f32 %v1218, %v1246
    %v1274 = vadd.f32 %v1219, %v1248
    %v1275 = vadd.f32 %v1220, %v1250
    %v1276 = vadd.f32 %v1221, %v1252
    %v1277 = vadd.f32 %v1222, %v1254
    %v1278 = vadd.f32 %v1223, %v1256
    %v1279 = vadd.f32 %v1224, %v1258
    %v1280 = vadd.f32 %v1225, %v1260
    %v1281 = vadd.f32 %v1226, %v1262
    %v1282 = vadd.f32 %v1227, %v1264
    %v1283 = vld [vmem:[#allocation2 + $0x20] sm:$0xff]
    %v1284 = vld [vmem:[#allocation2 + $0x28] sm:$0xff]
    %v1285 = vld [vmem:[#allocation2 + $0x30] sm:$0xff]
    %v1286 = vld [vmem:[#allocation2 + $0x38] sm:$0xff]
    %v1287 = vld [vmem:[#allocation2 + $0x40] sm:$0xff]
    %v1288 = vld [vmem:[#allocation2 + $0x48] sm:$0xff]
    %v1289 = vld [vmem:[#allocation2 + $0x50] sm:$0xff]
    %v1290 = vld [vmem:[#allocation2 + $0x58] sm:$0xff]
    %v1291 = vld [vmem:[#allocation2 + $0x60] sm:$0xff]
    %v1292 = vld [vmem:[#allocation2 + $0x68] sm:$0xff]
    %v1293 = vld [vmem:[#allocation2 + $0x70] sm:$0xff]
    %v1294 = vld [vmem:[#allocation2 + $0x78] sm:$0xff]
    %v1295 = vld [vmem:[#allocation2 + $0x80] sm:$0xff]
    %v1296 = vld [vmem:[#allocation2 + $0x88] sm:$0xff]
    %v1297 = vld [vmem:[#allocation2 + $0x90] sm:$0xff]
    %v1298 = vld [vmem:[#allocation2 + $0x98] sm:$0xff]
    %v1299 = vld [vmem:[#allocation2 + $0xa0] sm:$0xff]
    %v1300 = vld [vmem:[#allocation2 + $0xa8] sm:$0xff]
    %1301 = vrot.lane.b32.xlu0 %v1283, 100
    %v1302 = vpop.permute.xlu0 %1301
    %1303 = vrot.lane.b32.xlu0 %v1284, 100
    %v1304 = vpop.permute.xlu0 %1303
    %1305 = vrot.lane.b32.xlu0 %v1285, 100
    %v1306 = vpop.permute.xlu0 %1305
    %1307 = vrot.lane.b32.xlu0 %v1286, 100
    %v1308 = vpop.permute.xlu0 %1307
    %1309 = vrot.lane.b32.xlu0 %v1287, 100
    %v1310 = vpop.permute.xlu0 %1309
    %1311 = vrot.lane.b32.xlu0 %v1288, 100
    %v1312 = vpop.permute.xlu0 %1311
    %1313 = vrot.lane.b32.xlu0 %v1289, 100
    %v1314 = vpop.permute.xlu0 %1313
    %1315 = vrot.lane.b32.xlu0 %v1290, 100
    %v1316 = vpop.permute.xlu0 %1315
    %1317 = vrot.lane.b32.xlu0 %v1291, 100
    %v1318 = vpop.permute.xlu0 %1317
    %1319 = vrot.lane.b32.xlu0 %v1292, 100
    %v1320 = vpop.permute.xlu0 %1319
    %1321 = vrot.lane.b32.xlu0 %v1293, 100
    %v1322 = vpop.permute.xlu0 %1321
    %1323 = vrot.lane.b32.xlu0 %v1294, 100
    %v1324 = vpop.permute.xlu0 %1323
    %1325 = vrot.lane.b32.xlu0 %v1295, 100
    %v1326 = vpop.permute.xlu0 %1325
    %1327 = vrot.lane.b32.xlu0 %v1296, 100
    %v1328 = vpop.permute.xlu0 %1327
    %1329 = vrot.lane.b32.xlu0 %v1297, 100
    %v1330 = vpop.permute.xlu0 %1329
    %1331 = vrot.lane.b32.xlu0 %v1298, 100
    %v1332 = vpop.permute.xlu0 %1331
    %1333 = vrot.lane.b32.xlu0 %v1299, 100
    %v1334 = vpop.permute.xlu0 %1333
    %1335 = vrot.lane.b32.xlu0 %v1300, 100
    %v1336 = vpop.permute.xlu0 %1335
    %v1337 = vadd.f32 %v1265, %v1302
    %v1338 = vadd.f32 %v1266, %v1304
    %v1339 = vadd.f32 %v1267, %v1306
    %v1340 = vadd.f32 %v1268, %v1308
    %v1341 = vadd.f32 %v1269, %v1310
    %v1342 = vadd.f32 %v1270, %v1312
    %v1343 = vadd.f32 %v1271, %v1314
    %v1344 = vadd.f32 %v1272, %v1316
    %v1345 = vadd.f32 %v1273, %v1318
    %v1346 = vadd.f32 %v1274, %v1320
    %v1347 = vadd.f32 %v1275, %v1322
    %v1348 = vadd.f32 %v1276, %v1324
    %v1349 = vadd.f32 %v1277, %v1326
    %v1350 = vadd.f32 %v1278, %v1328
    %v1351 = vadd.f32 %v1279, %v1330
    %v1352 = vadd.f32 %v1280, %v1332
    %v1353 = vadd.f32 %v1281, %v1334
    %v1354 = vadd.f32 %v1282, %v1336
    %v1355 = vpack.c.bf16 %v1338, %v1337
    %v1356 = vpack.c.bf16 %v1340, %v1339
    %v1357 = vpack.c.bf16 %v1342, %v1341
    %v1358 = vpack.c.bf16 %v1344, %v1343
    %v1359 = vpack.c.bf16 %v1346, %v1345
    %v1360 = vpack.c.bf16 %v1348, %v1347
    %v1361 = vpack.c.bf16 %v1350, %v1349
    %v1362 = vpack.c.bf16 %v1352, %v1351
    %v1363 = vpack.c.bf16 %v1354, %v1353
    %v1373 = vunpack.c.l.b16 %v1355
    %v1374 = vunpack.c.h.b16 %v1355
    %v1375 = vunpack.c.l.b16 %v1356
    %v1376 = vunpack.c.h.b16 %v1356
    %v1377 = vunpack.c.l.b16 %v1357
    %v1378 = vunpack.c.h.b16 %v1357
    %v1379 = vunpack.c.l.b16 %v1358
    %v1380 = vunpack.c.h.b16 %v1358
    %v1381 = vunpack.c.l.b16 %v1359
    %v1382 = vunpack.c.h.b16 %v1359
    %v1383 = vunpack.c.l.b16 %v1360
    %v1384 = vunpack.c.h.b16 %v1360
    %v1385 = vunpack.c.l.b16 %v1361
    %v1386 = vunpack.c.h.b16 %v1361
    %v1387 = vunpack.c.l.b16 %v1362
    %v1388 = vunpack.c.h.b16 %v1362
    %v1389 = vunpack.c.l.b16 %v1363
    %v1390 = vunpack.c.h.b16 %v1363
    %v1391 = vpack.c.b16 %v1373, %v1373
    %v1392 = vpack.c.b16 %v1374, %v1374
    %v1393 = vpack.c.b16 %v1375, %v1375
    %v1394 = vpack.c.b16 %v1376, %v1376
    %v1395 = vpack.c.b16 %v1377, %v1377
    %v1396 = vpack.c.b16 %v1378, %v1378
    %v1397 = vpack.c.b16 %v1379, %v1379
    %v1398 = vpack.c.b16 %v1380, %v1380
    %v1399 = vpack.c.b16 %v1381, %v1381
    %v1400 = vpack.c.b16 %v1382, %v1382
    %v1401 = vpack.c.b16 %v1383, %v1383
    %v1402 = vpack.c.b16 %v1384, %v1384
    %v1403 = vpack.c.b16 %v1385, %v1385
    %v1404 = vpack.c.b16 %v1386, %v1386
    %v1405 = vpack.c.b16 %v1387, %v1387
    %v1406 = vpack.c.b16 %v1388, %v1388
    %v1407 = vpack.c.b16 %v1389, %v1389
    %v1408 = vpack.c.b16 %v1390, %v1390
    %1427 = vst [vmem:[#allocation3] sm:$0xf] %v1391
    %1428 = vst [vmem:[#allocation3 + $0x4] sm:$0xf] %v1392
    %1429 = vst [vmem:[#allocation3 + $0x8] sm:$0xf] %v1393
    %1430 = vst [vmem:[#allocation3 + $0xc] sm:$0xf] %v1394
    %1431 = vst [vmem:[#allocation3 + $0x10] sm:$0xf] %v1395
    %1432 = vst [vmem:[#allocation3 + $0x14] sm:$0xf] %v1396
    %1433 = vst [vmem:[#allocation3 + $0x18] sm:$0xf] %v1397
    %1434 = vst [vmem:[#allocation3 + $0x1c] sm:$0xf] %v1398
    %1435 = vst [vmem:[#allocation3 + $0x20] sm:$0xf] %v1399
    %1436 = vst [vmem:[#allocation3 + $0x24] sm:$0xf] %v1400
    %1437 = vst [vmem:[#allocation3 + $0x28] sm:$0xf] %v1401
    %1438 = vst [vmem:[#allocation3 + $0x2c] sm:$0xf] %v1402
    %1439 = vst [vmem:[#allocation3 + $0x30] sm:$0xf] %v1403
    %1440 = vst [vmem:[#allocation3 + $0x34] sm:$0xf] %v1404
    %1441 = vst [vmem:[#allocation3 + $0x38] sm:$0xf] %v1405
    %1442 = vst [vmem:[#allocation3 + $0x3c] sm:$0xf] %v1406
    %1443 = vst [vmem:[#allocation3 + $0x40] sm:$0xf] %v1407
    %1444 = vst [vmem:[#allocation3 + $0x44] sm:$0xf] %v1408
    %v1445 = vld [vmem:[#allocation3] sm:$0x8]
    %v1446 = vld [vmem:[#allocation3 + $0x4] sm:$0xf]
    %v1447 = vld [vmem:[#allocation3 + $0x8] sm:$0xf]
    %v1448 = vld [vmem:[#allocation3 + $0xc] sm:$0xf]
    %v1449 = vld [vmem:[#allocation3 + $0x10] sm:$0xf]
    %v1450 = vld [vmem:[#allocation3 + $0x14] sm:$0xf]
    %v1451 = vld [vmem:[#allocation3 + $0x18] sm:$0xf]
    %v1452 = vld [vmem:[#allocation3 + $0x1c] sm:$0xf]
    %v1453 = vld [vmem:[#allocation3 + $0x20] sm:$0xf]
    %v1454 = vld [vmem:[#allocation3 + $0x24] sm:$0xf]
    %v1455 = vld [vmem:[#allocation3 + $0x28] sm:$0xf]
    %v1456 = vld [vmem:[#allocation3 + $0x2c] sm:$0xf]
    %v1457 = vld [vmem:[#allocation3 + $0x30] sm:$0xf]
    %v1458 = vld [vmem:[#allocation3 + $0x34] sm:$0xf]
    %v1459 = vld [vmem:[#allocation3 + $0x38] sm:$0xf]
    %v1460 = vld [vmem:[#allocation3 + $0x3c] sm:$0xf]
    %v1461 = vld [vmem:[#allocation3 + $0x40] sm:$0x7]
    %v1462 = vld [vmem:[%s3] sm:$0xf]
    %v1463 = vld [vmem:[%s3 + $0x4] sm:$0xf]
    %v1464 = vld [vmem:[%s3 + $0x8] sm:$0xf]
    %v1465 = vld [vmem:[%s3 + $0xc] sm:$0xf]
    %v1466 = vld [vmem:[%s3 + $0x10] sm:$0xf]
    %v1467 = vld [vmem:[%s3 + $0x14] sm:$0xf]
    %v1468 = vld [vmem:[%s3 + $0x18] sm:$0xf]
    %v1469 = vld [vmem:[%s3 + $0x1c] sm:$0xf]
    %v1470 = vld [vmem:[%s3 + $0x20] sm:$0xf]
    %v1471 = vld [vmem:[%s3 + $0x24] sm:$0xf]
    %v1472 = vld [vmem:[%s3 + $0x28] sm:$0xf]
    %v1473 = vld [vmem:[%s3 + $0x2c] sm:$0xf]
    %v1474 = vld [vmem:[%s3 + $0x30] sm:$0xf]
    %v1475 = vld [vmem:[%s3 + $0x34] sm:$0xf]
    %v1476 = vld [vmem:[%s3 + $0x38] sm:$0xf]
    %v1477 = vld [vmem:[%s3 + $0x3c] sm:$0xf]
    %v1478 = vld [vmem:[#allocation3 + $0x40] sm:$0xf]
    %s1479 = scalar_lea.vmem %s3, 64
    %v1480 = vld [vmem:[%s1479] sm:$0xf]
    %v1481 = vld [vmem:[%s1479 + $0x4] sm:$0xf]
    %v1482 = vld [vmem:[%s1479 + $0x8] sm:$0xf]
    %v1483 = vld [vmem:[%s1479 + $0xc] sm:$0xf]
    %v1484 = vld [vmem:[%s1479 + $0x10] sm:$0xf]
    %v1485 = vld [vmem:[%s1479 + $0x14] sm:$0xf]
    %v1486 = vld [vmem:[%s1479 + $0x18] sm:$0xf]
    %v1487 = vld [vmem:[%s1479 + $0x1c] sm:$0xf]
    %v1488 = vld [vmem:[%s1479 + $0x20] sm:$0xf]
    %v1489 = vld [vmem:[%s1479 + $0x24] sm:$0xf]
    %v1490 = vld [vmem:[%s1479 + $0x28] sm:$0xf]
    %v1491 = vld [vmem:[%s1479 + $0x2c] sm:$0xf]
    %v1492 = vld [vmem:[%s1479 + $0x30] sm:$0xf]
    %v1493 = vld [vmem:[%s1479 + $0x34] sm:$0xf]
    %v1494 = vld [vmem:[%s1479 + $0x38] sm:$0xf]
    %v1495 = vld [vmem:[%s1479 + $0x3c] sm:$0xf]
    %v1513 = vunpack.c.l.b16 %v1445
    %v1514 = vunpack.c.l.b16 %v1446
    %v1515 = vunpack.c.l.b16 %v1447
    %v1516 = vunpack.c.l.b16 %v1448
    %v1517 = vunpack.c.l.b16 %v1449
    %v1518 = vunpack.c.l.b16 %v1450
    %v1519 = vunpack.c.l.b16 %v1451
    %v1520 = vunpack.c.l.b16 %v1452
    %v1521 = vunpack.c.l.b16 %v1453
    %v1522 = vunpack.c.l.b16 %v1454
    %v1523 = vunpack.c.l.b16 %v1455
    %v1524 = vunpack.c.l.b16 %v1456
    %v1525 = vunpack.c.l.b16 %v1457
    %v1526 = vunpack.c.l.b16 %v1458
    %v1527 = vunpack.c.l.b16 %v1459
    %v1528 = vunpack.c.l.b16 %v1460
    %v1529 = vunpack.c.l.b16 %v1478
    %v1530 = vpack.c.b16 %v1514, %v1513
    %v1531 = vpack.c.b16 %v1516, %v1515
    %v1532 = vpack.c.b16 %v1518, %v1517
    %v1533 = vpack.c.b16 %v1520, %v1519
    %v1534 = vpack.c.b16 %v1522, %v1521
    %v1535 = vpack.c.b16 %v1524, %v1523
    %v1536 = vpack.c.b16 %v1526, %v1525
    %v1537 = vpack.c.b16 %v1528, %v1527
    %v1538 = vpack.c.b16 %v1529, %v1529
    %vm1539 = vsmask.f32 4352
    %v1541 = vshrl.u32 %v1530, 16
    %v1543 = vrot.slane %v1541, 3
    %v1544 = vshll.u32 %v1530, 16
    %v1546 = vrot.slane %v1544, 4
    %v1547 = vor.u32 %v1543, %v1546
    %v1549 = vshrl.u32 %v1531, 16
    %v1551 = vrot.slane %v1549, 3
    %v1552 = vshll.u32 %v1531, 16
    %v1554 = vrot.slane %v1552, 4
    %v1555 = vor.u32 %v1551, %v1554
    %v1556 = vsel %vm1539, %v1547, %v1555
    %v1558 = vshrl.u32 %v1532, 16
    %v1560 = vrot.slane %v1558, 3
    %v1561 = vshll.u32 %v1532, 16
    %v1563 = vrot.slane %v1561, 4
    %v1564 = vor.u32 %v1560, %v1563
    %v1565 = vsel %vm1539, %v1555, %v1564
    %v1567 = vshrl.u32 %v1533, 16
    %v1569 = vrot.slane %v1567, 3
    %v1570 = vshll.u32 %v1533, 16
    %v1572 = vrot.slane %v1570, 4
    %v1573 = vor.u32 %v1569, %v1572
    %v1574 = vsel %vm1539, %v1564, %v1573
    %v1576 = vshrl.u32 %v1534, 16
    %v1578 = vrot.slane %v1576, 3
    %v1579 = vshll.u32 %v1534, 16
    %v1581 = vrot.slane %v1579, 4
    %v1582 = vor.u32 %v1578, %v1581
    %v1583 = vsel %vm1539, %v1573, %v1582
    %v1585 = vshrl.u32 %v1535, 16
    %v1587 = vrot.slane %v1585, 3
    %v1588 = vshll.u32 %v1535, 16
    %v1590 = vrot.slane %v1588, 4
    %v1591 = vor.u32 %v1587, %v1590
    %v1592 = vsel %vm1539, %v1582, %v1591
    %v1594 = vshrl.u32 %v1536, 16
    %v1596 = vrot.slane %v1594, 3
    %v1597 = vshll.u32 %v1536, 16
    %v1599 = vrot.slane %v1597, 4
    %v1600 = vor.u32 %v1596, %v1599
    %v1601 = vsel %vm1539, %v1591, %v1600
    %v1603 = vshrl.u32 %v1537, 16
    %v1605 = vrot.slane %v1603, 3
    %v1606 = vshll.u32 %v1537, 16
    %v1608 = vrot.slane %v1606, 4
    %v1609 = vor.u32 %v1605, %v1608
    %v1610 = vsel %vm1539, %v1600, %v1609
    %v1612 = vshrl.u32 %v1538, 16
    %v1614 = vrot.slane %v1612, 3
    %v1615 = vshll.u32 %v1538, 16
    %v1617 = vrot.slane %v1615, 4
    %v1618 = vor.u32 %v1614, %v1617
    %v1619 = vsel %vm1539, %v1609, %v1618
    %v1644 = vunpack.c.l.b16 %v1480
    %v1645 = vunpack.c.l.b16 %v1481
    %v1646 = vunpack.c.l.b16 %v1482
    %v1647 = vunpack.c.l.b16 %v1483
    %v1648 = vunpack.c.l.b16 %v1484
    %v1649 = vunpack.c.l.b16 %v1485
    %v1650 = vunpack.c.l.b16 %v1486
    %v1651 = vunpack.c.l.b16 %v1487
    %v1652 = vunpack.c.l.b16 %v1488
    %v1653 = vunpack.c.l.b16 %v1489
    %v1654 = vunpack.c.l.b16 %v1490
    %v1655 = vunpack.c.l.b16 %v1491
    %v1656 = vunpack.c.l.b16 %v1492
    %v1657 = vunpack.c.l.b16 %v1493
    %v1658 = vunpack.c.l.b16 %v1494
    %v1659 = vunpack.c.l.b16 %v1495
    %v1660 = vpack.c.b16 %v1645, %v1644
    %v1661 = vpack.c.b16 %v1647, %v1646
    %v1662 = vpack.c.b16 %v1649, %v1648
    %v1663 = vpack.c.b16 %v1651, %v1650
    %v1664 = vpack.c.b16 %v1653, %v1652
    %v1665 = vpack.c.b16 %v1655, %v1654
    %v1666 = vpack.c.b16 %v1657, %v1656
    %v1667 = vpack.c.b16 %v1659, %v1658
    %1676 = vmatprep.subr.bf16.mxu0 0
    %1677 = vmatpush1.bf16.msra.mxu0 %v1667
    %1678 = vmatprep.subr.bf16.mxu0 0
    %1679 = vmatpush1.bf16.msra.mxu0 %v1666
    %1680 = vmatprep.subr.bf16.mxu0 0
    %1681 = vmatpush1.bf16.msra.mxu0 %v1665
    %1682 = vmatprep.subr.bf16.mxu0 0
    %1683 = vmatpush1.bf16.msra.mxu0 %v1664
    %1684 = vmatprep.subr.bf16.mxu0 0
    %1685 = vmatpush1.bf16.msra.mxu0 %v1663
    %1686 = vmatprep.subr.bf16.mxu0 0
    %1687 = vmatpush1.bf16.msra.mxu0 %v1662
    %1688 = vmatprep.subr.bf16.mxu0 0
    %1689 = vmatpush1.bf16.msra.mxu0 %v1661
    %1690 = vmatprep.subr.bf16.mxu0 0
    %1691 = vmatpush1.bf16.msra.mxu0 %v1660
    %1692 = vmatprep.subr.bf16.mxu0 0
    %1693 = vmatpush2.bf16.msra.mxu0 0
    %1694 = vmatprep.subr.bf16.mxu0 0
    %1695 = vmatpush2.bf16.msra.mxu0 0
    %1696 = vmatprep.subr.bf16.mxu0 0
    %1697 = vmatpush2.bf16.msra.mxu0 0
    %1698 = vmatprep.subr.bf16.mxu0 0
    %1699 = vmatpush2.bf16.msra.mxu0 0
    %1700 = vmatprep.subr.bf16.mxu0 0
    %1701 = vmatpush2.bf16.msra.mxu0 0
    %1702 = vmatprep.subr.bf16.mxu0 0
    %1703 = vmatpush2.bf16.msra.mxu0 0
    %1704 = vmatprep.subr.bf16.mxu0 0
    %1705 = vmatpush2.bf16.msra.mxu0 0
    %1706 = vmatprep.subr.bf16.mxu0 0
    %1707 = vmatpush2.bf16.msra.mxu0 0
    %1708 = vmatprep.mubr.bf16.mxu0 0
    %1709 = vmatmul.mubr.bf16.gmra.mxu0 %v1556
    %v1710 = vpop.f32.mrf.mxu0
    %v1711 = vadd.f32 0.0, %v1710
    %v1712 = vpop.f32.mrf.mxu0
    %v1713 = vpop.f32.mrf.mxu0
    %v1714 = vadd.f32 0.0, %v1713
    %v1715 = vpop.f32.mrf.mxu0
    %1716 = vmatprep.mubr.bf16.mxu0 0
    %1717 = vmatmul.mubr.bf16.gmra.mxu0 %v1565
    %v1718 = vpop.f32.mrf.mxu0
    %v1719 = vadd.f32 0.0, %v1718
    %v1720 = vpop.f32.mrf.mxu0
    %v1721 = vpop.f32.mrf.mxu0
    %v1722 = vadd.f32 0.0, %v1721
    %v1723 = vpop.f32.mrf.mxu0
    %1724 = vmatprep.mubr.bf16.mxu0 0
    %1725 = vmatmul.mubr.bf16.gmra.mxu0 %v1574
    %v1726 = vpop.f32.mrf.mxu0
    %v1727 = vadd.f32 0.0, %v1726
    %v1728 = vpop.f32.mrf.mxu0
    %v1729 = vpop.f32.mrf.mxu0
    %v1730 = vadd.f32 0.0, %v1729
    %v1731 = vpop.f32.mrf.mxu0
    %1732 = vmatprep.mubr.bf16.mxu0 0
    %1733 = vmatmul.mubr.bf16.gmra.mxu0 %v1583
    %v1734 = vpop.f32.mrf.mxu0
    %v1735 = vadd.f32 0.0, %v1734
    %v1736 = vpop.f32.mrf.mxu0
    %v1737 = vpop.f32.mrf.mxu0
    %v1738 = vadd.f32 0.0, %v1737
    %v1739 = vpop.f32.mrf.mxu0
    %1740 = vmatprep.mubr.bf16.mxu0 0
    %1741 = vmatmul.mubr.bf16.gmra.mxu0 %v1592
    %v1742 = vpop.f32.mrf.mxu0
    %v1743 = vadd.f32 0.0, %v1742
    %v1744 = vpop.f32.mrf.mxu0
    %v1745 = vpop.f32.mrf.mxu0
    %v1746 = vadd.f32 0.0, %v1745
    %v1747 = vpop.f32.mrf.mxu0
    %1748 = vmatprep.mubr.bf16.mxu0 0
    %1749 = vmatmul.mubr.bf16.gmra.mxu0 %v1601
    %v1750 = vpop.f32.mrf.mxu0
    %v1751 = vadd.f32 0.0, %v1750
    %v1752 = vpop.f32.mrf.mxu0
    %v1753 = vpop.f32.mrf.mxu0
    %v1754 = vadd.f32 0.0, %v1753
    %v1755 = vpop.f32.mrf.mxu0
    %1756 = vmatprep.mubr.bf16.mxu0 0
    %1757 = vmatmul.mubr.bf16.gmra.mxu0 %v1610
    %v1758 = vpop.f32.mrf.mxu0
    %v1759 = vadd.f32 0.0, %v1758
    %v1760 = vpop.f32.mrf.mxu0
    %v1761 = vpop.f32.mrf.mxu0
    %v1762 = vadd.f32 0.0, %v1761
    %v1763 = vpop.f32.mrf.mxu0
    %1764 = vmatprep.mubr.bf16.mxu0 0
    %1765 = vmatmul.mubr.bf16.gmra.mxu0 %v1619
    %v1766 = vpop.f32.mrf.mxu0
    %v1767 = vadd.f32 0.0, %v1766
    %v1768 = vpop.f32.mrf.mxu0
    %v1769 = vpop.f32.mrf.mxu0
    %v1770 = vadd.f32 0.0, %v1769
    %v1771 = vpop.f32.mrf.mxu0
    %1772 = vdwg.mxu0
    %v1774 = vunpack.c.l.b16 %v1461
    %v1775 = vpack.c.b16 %v1774, %v1774
    %vm1776 = vcmask 1044480
    %v1777 = vrot.slane %v1530, 3
    %v1778 = vrot.slane %v1531, 3
    %v1779 = vsel %vm1776, %v1777, %v1778
    %v1780 = vrot.slane %v1532, 3
    %v1781 = vsel %vm1776, %v1778, %v1780
    %v1782 = vrot.slane %v1533, 3
    %v1783 = vsel %vm1776, %v1780, %v1782
    %v1784 = vrot.slane %v1534, 3
    %v1785 = vsel %vm1776, %v1782, %v1784
    %v1786 = vrot.slane %v1535, 3
    %v1787 = vsel %vm1776, %v1784, %v1786
    %v1788 = vrot.slane %v1536, 3
    %v1789 = vsel %vm1776, %v1786, %v1788
    %v1790 = vrot.slane %v1537, 3
    %v1791 = vsel %vm1776, %v1788, %v1790
    %v1792 = vrot.slane %v1775, 3
    %v1793 = vsel %vm1776, %v1790, %v1792
    %v1818 = vunpack.c.l.b16 %v1462
    %v1819 = vunpack.c.l.b16 %v1463
    %v1820 = vunpack.c.l.b16 %v1464
    %v1821 = vunpack.c.l.b16 %v1465
    %v1822 = vunpack.c.l.b16 %v1466
    %v1823 = vunpack.c.l.b16 %v1467
    %v1824 = vunpack.c.l.b16 %v1468
    %v1825 = vunpack.c.l.b16 %v1469
    %v1826 = vunpack.c.l.b16 %v1470
    %v1827 = vunpack.c.l.b16 %v1471
    %v1828 = vunpack.c.l.b16 %v1472
    %v1829 = vunpack.c.l.b16 %v1473
    %v1830 = vunpack.c.l.b16 %v1474
    %v1831 = vunpack.c.l.b16 %v1475
    %v1832 = vunpack.c.l.b16 %v1476
    %v1833 = vunpack.c.l.b16 %v1477
    %v1834 = vpack.c.b16 %v1819, %v1818
    %v1835 = vpack.c.b16 %v1821, %v1820
    %v1836 = vpack.c.b16 %v1823, %v1822
    %v1837 = vpack.c.b16 %v1825, %v1824
    %v1838 = vpack.c.b16 %v1827, %v1826
    %v1839 = vpack.c.b16 %v1829, %v1828
    %v1840 = vpack.c.b16 %v1831, %v1830
    %v1841 = vpack.c.b16 %v1833, %v1832
    %1850 = vmatprep.subr.bf16.mxu0 0
    %1851 = vmatpush1.bf16.msra.mxu0 %v1841
    %1852 = vmatprep.subr.bf16.mxu0 0
    %1853 = vmatpush1.bf16.msra.mxu0 %v1840
    %1854 = vmatprep.subr.bf16.mxu0 0
    %1855 = vmatpush1.bf16.msra.mxu0 %v1839
    %1856 = vmatprep.subr.bf16.mxu0 0
    %1857 = vmatpush1.bf16.msra.mxu0 %v1838
    %1858 = vmatprep.subr.bf16.mxu0 0
    %1859 = vmatpush1.bf16.msra.mxu0 %v1837
    %1860 = vmatprep.subr.bf16.mxu0 0
    %1861 = vmatpush1.bf16.msra.mxu0 %v1836
    %1862 = vmatprep.subr.bf16.mxu0 0
    %1863 = vmatpush1.bf16.msra.mxu0 %v1835
    %1864 = vmatprep.subr.bf16.mxu0 0
    %1865 = vmatpush1.bf16.msra.mxu0 %v1834
    %1866 = vmatprep.subr.bf16.mxu0 0
    %1867 = vmatpush2.bf16.msra.mxu0 0
    %1868 = vmatprep.subr.bf16.mxu0 0
    %1869 = vmatpush2.bf16.msra.mxu0 0
    %1870 = vmatprep.subr.bf16.mxu0 0
    %1871 = vmatpush2.bf16.msra.mxu0 0
    %1872 = vmatprep.subr.bf16.mxu0 0
    %1873 = vmatpush2.bf16.msra.mxu0 0
    %1874 = vmatprep.subr.bf16.mxu0 0
    %1875 = vmatpush2.bf16.msra.mxu0 0
    %1876 = vmatprep.subr.bf16.mxu0 0
    %1877 = vmatpush2.bf16.msra.mxu0 0
    %1878 = vmatprep.subr.bf16.mxu0 0
    %1879 = vmatpush2.bf16.msra.mxu0 0
    %1880 = vmatprep.subr.bf16.mxu0 0
    %1881 = vmatpush2.bf16.msra.mxu0 0
    %1882 = vmatprep.mubr.bf16.mxu0 0
    %1883 = vmatmul.mubr.bf16.gmra.mxu0 %v1779
    %v1884 = vpop.f32.mrf.mxu0
    %v1885 = vadd.f32 %v1711, %v1884
    %v1886 = vpop.f32.mrf.mxu0
    %v1887 = vpop.f32.mrf.mxu0
    %v1888 = vadd.f32 %v1714, %v1887
    %v1889 = vpop.f32.mrf.mxu0
    %1890 = vmatprep.mubr.bf16.mxu0 0
    %1891 = vmatmul.mubr.bf16.gmra.mxu0 %v1781
    %v1892 = vpop.f32.mrf.mxu0
    %v1893 = vadd.f32 %v1719, %v1892
    %v1894 = vpop.f32.mrf.mxu0
    %v1895 = vpop.f32.mrf.mxu0
    %v1896 = vadd.f32 %v1722, %v1895
    %v1897 = vpop.f32.mrf.mxu0
    %1898 = vmatprep.mubr.bf16.mxu0 0
    %1899 = vmatmul.mubr.bf16.gmra.mxu0 %v1783
    %v1900 = vpop.f32.mrf.mxu0
    %v1901 = vadd.f32 %v1727, %v1900
    %v1902 = vpop.f32.mrf.mxu0
    %v1903 = vpop.f32.mrf.mxu0
    %v1904 = vadd.f32 %v1730, %v1903
    %v1905 = vpop.f32.mrf.mxu0
    %1906 = vmatprep.mubr.bf16.mxu0 0
    %1907 = vmatmul.mubr.bf16.gmra.mxu0 %v1785
    %v1908 = vpop.f32.mrf.mxu0
    %v1909 = vadd.f32 %v1735, %v1908
    %v1910 = vpop.f32.mrf.mxu0
    %v1911 = vpop.f32.mrf.mxu0
    %v1912 = vadd.f32 %v1738, %v1911
    %v1913 = vpop.f32.mrf.mxu0
    %1914 = vmatprep.mubr.bf16.mxu0 0
    %1915 = vmatmul.mubr.bf16.gmra.mxu0 %v1787
    %v1916 = vpop.f32.mrf.mxu0
    %v1917 = vadd.f32 %v1743, %v1916
    %v1918 = vpop.f32.mrf.mxu0
    %v1919 = vpop.f32.mrf.mxu0
    %v1920 = vadd.f32 %v1746, %v1919
    %v1921 = vpop.f32.mrf.mxu0
    %1922 = vmatprep.mubr.bf16.mxu0 0
    %1923 = vmatmul.mubr.bf16.gmra.mxu0 %v1789
    %v1924 = vpop.f32.mrf.mxu0
    %v1925 = vadd.f32 %v1751, %v1924
    %v1926 = vpop.f32.mrf.mxu0
    %v1927 = vpop.f32.mrf.mxu0
    %v1928 = vadd.f32 %v1754, %v1927
    %v1929 = vpop.f32.mrf.mxu0
    %1930 = vmatprep.mubr.bf16.mxu0 0
    %1931 = vmatmul.mubr.bf16.gmra.mxu0 %v1791
    %v1932 = vpop.f32.mrf.mxu0
    %v1933 = vadd.f32 %v1759, %v1932
    %v1934 = vpop.f32.mrf.mxu0
    %v1935 = vpop.f32.mrf.mxu0
    %v1936 = vadd.f32 %v1762, %v1935
    %v1937 = vpop.f32.mrf.mxu0
    %1938 = vmatprep.mubr.bf16.mxu0 0
    %1939 = vmatmul.mubr.bf16.gmra.mxu0 %v1793
    %v1940 = vpop.f32.mrf.mxu0
    %v1941 = vadd.f32 %v1767, %v1940
    %v1942 = vpop.f32.mrf.mxu0
    %v1943 = vpop.f32.mrf.mxu0
    %v1944 = vadd.f32 %v1770, %v1943
    %v1945 = vpop.f32.mrf.mxu0
    %1946 = vdwg.mxu0
    %s1947 = scalar_lea.vmem %s3, 128
    %v1948 = vld [vmem:[%s1947] sm:$0xf]
    %v1949 = vld [vmem:[%s1947 + $0x4] sm:$0xf]
    %v1950 = vld [vmem:[%s1947 + $0x8] sm:$0xf]
    %v1951 = vld [vmem:[%s1947 + $0xc] sm:$0xf]
    %v1952 = vld [vmem:[%s1947 + $0x10] sm:$0xf]
    %v1953 = vld [vmem:[%s1947 + $0x14] sm:$0xf]
    %v1954 = vld [vmem:[%s1947 + $0x18] sm:$0xf]
    %v1955 = vld [vmem:[%s1947 + $0x1c] sm:$0xf]
    %v1956 = vld [vmem:[%s1947 + $0x20] sm:$0xf]
    %v1957 = vld [vmem:[%s1947 + $0x24] sm:$0xf]
    %v1958 = vld [vmem:[%s1947 + $0x28] sm:$0xf]
    %v1959 = vld [vmem:[%s1947 + $0x2c] sm:$0xf]
    %v1960 = vld [vmem:[%s1947 + $0x30] sm:$0xf]
    %v1961 = vld [vmem:[%s1947 + $0x34] sm:$0xf]
    %v1962 = vld [vmem:[%s1947 + $0x38] sm:$0xf]
    %v1963 = vld [vmem:[%s1947 + $0x3c] sm:$0xf]
    %v1964 = vpack.c.b16 %v1515, %v1514
    %v1965 = vpack.c.b16 %v1517, %v1516
    %v1966 = vpack.c.b16 %v1519, %v1518
    %v1967 = vpack.c.b16 %v1521, %v1520
    %v1968 = vpack.c.b16 %v1523, %v1522
    %v1969 = vpack.c.b16 %v1525, %v1524
    %v1970 = vpack.c.b16 %v1527, %v1526
    %v1971 = vpack.c.b16 %v1529, %v1528
    %v1996 = vunpack.c.l.b16 %v1948
    %v1997 = vunpack.c.l.b16 %v1949
    %v1998 = vunpack.c.l.b16 %v1950
    %v1999 = vunpack.c.l.b16 %v1951
    %v2000 = vunpack.c.l.b16 %v1952
    %v2001 = vunpack.c.l.b16 %v1953
    %v2002 = vunpack.c.l.b16 %v1954
    %v2003 = vunpack.c.l.b16 %v1955
    %v2004 = vunpack.c.l.b16 %v1956
    %v2005 = vunpack.c.l.b16 %v1957
    %v2006 = vunpack.c.l.b16 %v1958
    %v2007 = vunpack.c.l.b16 %v1959
    %v2008 = vunpack.c.l.b16 %v1960
    %v2009 = vunpack.c.l.b16 %v1961
    %v2010 = vunpack.c.l.b16 %v1962
    %v2011 = vunpack.c.l.b16 %v1963
    %v2012 = vpack.c.b16 %v1997, %v1996
    %v2013 = vpack.c.b16 %v1999, %v1998
    %v2014 = vpack.c.b16 %v2001, %v2000
    %v2015 = vpack.c.b16 %v2003, %v2002
    %v2016 = vpack.c.b16 %v2005, %v2004
    %v2017 = vpack.c.b16 %v2007, %v2006
    %v2018 = vpack.c.b16 %v2009, %v2008
    %v2019 = vpack.c.b16 %v2011, %v2010
    %2028 = vmatprep.subr.bf16.mxu0 0
    %2029 = vmatpush1.bf16.msra.mxu0 %v2019
    %2030 = vmatprep.subr.bf16.mxu0 0
    %2031 = vmatpush1.bf16.msra.mxu0 %v2018
    %2032 = vmatprep.subr.bf16.mxu0 0
    %2033 = vmatpush1.bf16.msra.mxu0 %v2017
    %2034 = vmatprep.subr.bf16.mxu0 0
    %2035 = vmatpush1.bf16.msra.mxu0 %v2016
    %2036 = vmatprep.subr.bf16.mxu0 0
    %2037 = vmatpush1.bf16.msra.mxu0 %v2015
    %2038 = vmatprep.subr.bf16.mxu0 0
    %2039 = vmatpush1.bf16.msra.mxu0 %v2014
    %2040 = vmatprep.subr.bf16.mxu0 0
    %2041 = vmatpush1.bf16.msra.mxu0 %v2013
    %2042 = vmatprep.subr.bf16.mxu0 0
    %2043 = vmatpush1.bf16.msra.mxu0 %v2012
    %2044 = vmatprep.subr.bf16.mxu0 0
    %2045 = vmatpush2.bf16.msra.mxu0 0
    %2046 = vmatprep.subr.bf16.mxu0 0
    %2047 = vmatpush2.bf16.msra.mxu0 0
    %2048 = vmatprep.subr.bf16.mxu0 0
    %2049 = vmatpush2.bf16.msra.mxu0 0
    %2050 = vmatprep.subr.bf16.mxu0 0
    %2051 = vmatpush2.bf16.msra.mxu0 0
    %2052 = vmatprep.subr.bf16.mxu0 0
    %2053 = vmatpush2.bf16.msra.mxu0 0
    %2054 = vmatprep.subr.bf16.mxu0 0
    %2055 = vmatpush2.bf16.msra.mxu0 0
    %2056 = vmatprep.subr.bf16.mxu0 0
    %2057 = vmatpush2.bf16.msra.mxu0 0
    %2058 = vmatprep.subr.bf16.mxu0 0
    %2059 = vmatpush2.bf16.msra.mxu0 0
    %2060 = vmatprep.mubr.bf16.mxu0 0
    %2061 = vmatmul.mubr.bf16.gmra.mxu0 %v1964
    %v2062 = vpop.f32.mrf.mxu0
    %v2063 = vadd.f32 0.0, %v2062
    %v2064 = vpop.f32.mrf.mxu0
    %v2065 = vpop.f32.mrf.mxu0
    %v2066 = vadd.f32 0.0, %v2065
    %v2067 = vpop.f32.mrf.mxu0
    %2068 = vmatprep.mubr.bf16.mxu0 0
    %2069 = vmatmul.mubr.bf16.gmra.mxu0 %v1965
    %v2070 = vpop.f32.mrf.mxu0
    %v2071 = vadd.f32 0.0, %v2070
    %v2072 = vpop.f32.mrf.mxu0
    %v2073 = vpop.f32.mrf.mxu0
    %v2074 = vadd.f32 0.0, %v2073
    %v2075 = vpop.f32.mrf.mxu0
    %2076 = vmatprep.mubr.bf16.mxu0 0
    %2077 = vmatmul.mubr.bf16.gmra.mxu0 %v1966
    %v2078 = vpop.f32.mrf.mxu0
    %v2079 = vadd.f32 0.0, %v2078
    %v2080 = vpop.f32.mrf.mxu0
    %v2081 = vpop.f32.mrf.mxu0
    %v2082 = vadd.f32 0.0, %v2081
    %v2083 = vpop.f32.mrf.mxu0
    %2084 = vmatprep.mubr.bf16.mxu0 0
    %2085 = vmatmul.mubr.bf16.gmra.mxu0 %v1967
    %v2086 = vpop.f32.mrf.mxu0
    %v2087 = vadd.f32 0.0, %v2086
    %v2088 = vpop.f32.mrf.mxu0
    %v2089 = vpop.f32.mrf.mxu0
    %v2090 = vadd.f32 0.0, %v2089
    %v2091 = vpop.f32.mrf.mxu0
    %2092 = vmatprep.mubr.bf16.mxu0 0
    %2093 = vmatmul.mubr.bf16.gmra.mxu0 %v1968
    %v2094 = vpop.f32.mrf.mxu0
    %v2095 = vadd.f32 0.0, %v2094
    %v2096 = vpop.f32.mrf.mxu0
    %v2097 = vpop.f32.mrf.mxu0
    %v2098 = vadd.f32 0.0, %v2097
    %v2099 = vpop.f32.mrf.mxu0
    %2100 = vmatprep.mubr.bf16.mxu0 0
    %2101 = vmatmul.mubr.bf16.gmra.mxu0 %v1969
    %v2102 = vpop.f32.mrf.mxu0
    %v2103 = vadd.f32 0.0, %v2102
    %v2104 = vpop.f32.mrf.mxu0
    %v2105 = vpop.f32.mrf.mxu0
    %v2106 = vadd.f32 0.0, %v2105
    %v2107 = vpop.f32.mrf.mxu0
    %2108 = vmatprep.mubr.bf16.mxu0 0
    %2109 = vmatmul.mubr.bf16.gmra.mxu0 %v1970
    %v2110 = vpop.f32.mrf.mxu0
    %v2111 = vadd.f32 0.0, %v2110
    %v2112 = vpop.f32.mrf.mxu0
    %v2113 = vpop.f32.mrf.mxu0
    %v2114 = vadd.f32 0.0, %v2113
    %v2115 = vpop.f32.mrf.mxu0
    %2116 = vmatprep.mubr.bf16.mxu0 0
    %2117 = vmatmul.mubr.bf16.gmra.mxu0 %v1971
    %v2118 = vpop.f32.mrf.mxu0
    %v2119 = vadd.f32 0.0, %v2118
    %v2120 = vpop.f32.mrf.mxu0
    %v2121 = vpop.f32.mrf.mxu0
    %v2122 = vadd.f32 0.0, %v2121
    %v2123 = vpop.f32.mrf.mxu0
    %2124 = vdwg.mxu0
    %v2125 = vadd.f32 %v1885, %v2063
    %v2126 = vadd.f32 %v1888, %v2066
    %v2127 = vadd.f32 %v1893, %v2071
    %v2128 = vadd.f32 %v1896, %v2074
    %v2129 = vadd.f32 %v1901, %v2079
    %v2130 = vadd.f32 %v1904, %v2082
    %v2131 = vadd.f32 %v1909, %v2087
    %v2132 = vadd.f32 %v1912, %v2090
    %v2133 = vadd.f32 %v1917, %v2095
    %v2134 = vadd.f32 %v1920, %v2098
    %v2135 = vadd.f32 %v1925, %v2103
    %v2136 = vadd.f32 %v1928, %v2106
    %v2137 = vadd.f32 %v1933, %v2111
    %v2138 = vadd.f32 %v1936, %v2114
    %v2139 = vadd.f32 %v1941, %v2119
    %v2140 = vadd.f32 %v1944, %v2122
    %v2141 = vld [vmem:[#allocation3 + $0x4] sm:$0xf]
    %v2142 = vld [vmem:[#allocation3 + $0x8] sm:$0xf]
    %v2143 = vld [vmem:[#allocation3 + $0xc] sm:$0xf]
    %v2144 = vld [vmem:[#allocation3 + $0x10] sm:$0xf]
    %v2145 = vld [vmem:[#allocation3 + $0x14] sm:$0xf]
    %v2146 = vld [vmem:[#allocation3 + $0x18] sm:$0xf]
    %v2147 = vld [vmem:[#allocation3 + $0x1c] sm:$0xf]
    %v2148 = vld [vmem:[#allocation3 + $0x20] sm:$0xf]
    %v2149 = vld [vmem:[#allocation3 + $0x24] sm:$0xf]
    %v2150 = vld [vmem:[#allocation3 + $0x28] sm:$0xf]
    %v2151 = vld [vmem:[#allocation3 + $0x2c] sm:$0xf]
    %v2152 = vld [vmem:[#allocation3 + $0x30] sm:$0xf]
    %v2153 = vld [vmem:[#allocation3 + $0x34] sm:$0xf]
    %v2154 = vld [vmem:[#allocation3 + $0x38] sm:$0xf]
    %v2155 = vld [vmem:[#allocation3 + $0x3c] sm:$0xf]
    %v2156 = vld [vmem:[#allocation3 + $0x40] sm:$0xf]
    %v2157 = vld [vmem:[#allocation3 + $0x44] sm:$0x1]
    %s2158 = scalar_lea.vmem %s3, 192
    %v2159 = vld [vmem:[%s2158] sm:$0xf]
    %v2160 = vld [vmem:[%s2158 + $0x4] sm:$0xf]
    %v2161 = vld [vmem:[%s2158 + $0x8] sm:$0xf]
    %v2162 = vld [vmem:[%s2158 + $0xc] sm:$0xf]
    %v2163 = vld [vmem:[%s2158 + $0x10] sm:$0xf]
    %v2164 = vld [vmem:[%s2158 + $0x14] sm:$0xf]
    %v2165 = vld [vmem:[%s2158 + $0x18] sm:$0xf]
    %v2166 = vld [vmem:[%s2158 + $0x1c] sm:$0xf]
    %v2167 = vld [vmem:[%s2158 + $0x20] sm:$0xf]
    %v2168 = vld [vmem:[%s2158 + $0x24] sm:$0xf]
    %v2169 = vld [vmem:[%s2158 + $0x28] sm:$0xf]
    %v2170 = vld [vmem:[%s2158 + $0x2c] sm:$0xf]
    %v2171 = vld [vmem:[%s2158 + $0x30] sm:$0xf]
    %v2172 = vld [vmem:[%s2158 + $0x34] sm:$0xf]
    %v2173 = vld [vmem:[%s2158 + $0x38] sm:$0xf]
    %v2174 = vld [vmem:[%s2158 + $0x3c] sm:$0xf]
    %v2192 = vunpack.c.l.b16 %v2141
    %v2193 = vunpack.c.l.b16 %v2142
    %v2194 = vunpack.c.l.b16 %v2143
    %v2195 = vunpack.c.l.b16 %v2144
    %v2196 = vunpack.c.l.b16 %v2145
    %v2197 = vunpack.c.l.b16 %v2146
    %v2198 = vunpack.c.l.b16 %v2147
    %v2199 = vunpack.c.l.b16 %v2148
    %v2200 = vunpack.c.l.b16 %v2149
    %v2201 = vunpack.c.l.b16 %v2150
    %v2202 = vunpack.c.l.b16 %v2151
    %v2203 = vunpack.c.l.b16 %v2152
    %v2204 = vunpack.c.l.b16 %v2153
    %v2205 = vunpack.c.l.b16 %v2154
    %v2206 = vunpack.c.l.b16 %v2155
    %v2207 = vunpack.c.l.b16 %v2156
    %v2208 = vunpack.c.l.b16 %v2157
    %v2209 = vpack.c.b16 %v2193, %v2192
    %v2210 = vpack.c.b16 %v2195, %v2194
    %v2211 = vpack.c.b16 %v2197, %v2196
    %v2212 = vpack.c.b16 %v2199, %v2198
    %v2213 = vpack.c.b16 %v2201, %v2200
    %v2214 = vpack.c.b16 %v2203, %v2202
    %v2215 = vpack.c.b16 %v2205, %v2204
    %v2216 = vpack.c.b16 %v2207, %v2206
    %v2217 = vpack.c.b16 %v2208, %v2208
    %vm2218 = vsmask.f32 7424
    %v2220 = vshrl.u32 %v2209, 16
    %v2222 = vshll.u32 %v2209, 16
    %v2224 = vrot.slane %v2222, 1
    %v2225 = vor.u32 %v2220, %v2224
    %v2227 = vshll.u32 %v2210, 16
    %v2229 = vrot.slane %v2227, 1
    %v2230 = vsel %vm2218, %v2225, %v2229
    %v2231 = vshrl.u32 %v2210, 16
    %v2233 = vor.u32 %v2231, %v2229
    %v2235 = vshll.u32 %v2211, 16
    %v2237 = vrot.slane %v2235, 1
    %v2238 = vsel %vm2218, %v2233, %v2237
    %v2239 = vshrl.u32 %v2211, 16
    %v2241 = vor.u32 %v2239, %v2237
    %v2243 = vshll.u32 %v2212, 16
    %v2245 = vrot.slane %v2243, 1
    %v2246 = vsel %vm2218, %v2241, %v2245
    %v2247 = vshrl.u32 %v2212, 16
    %v2249 = vor.u32 %v2247, %v2245
    %v2251 = vshll.u32 %v2213, 16
    %v2253 = vrot.slane %v2251, 1
    %v2254 = vsel %vm2218, %v2249, %v2253
    %v2255 = vshrl.u32 %v2213, 16
    %v2257 = vor.u32 %v2255, %v2253
    %v2259 = vshll.u32 %v2214, 16
    %v2261 = vrot.slane %v2259, 1
    %v2262 = vsel %vm2218, %v2257, %v2261
    %v2263 = vshrl.u32 %v2214, 16
    %v2265 = vor.u32 %v2263, %v2261
    %v2267 = vshll.u32 %v2215, 16
    %v2269 = vrot.slane %v2267, 1
    %v2270 = vsel %vm2218, %v2265, %v2269
    %v2271 = vshrl.u32 %v2215, 16
    %v2273 = vor.u32 %v2271, %v2269
    %v2275 = vshll.u32 %v2216, 16
    %v2277 = vrot.slane %v2275, 1
    %v2278 = vsel %vm2218, %v2273, %v2277
    %v2279 = vshrl.u32 %v2216, 16
    %v2281 = vor.u32 %v2279, %v2277
    %v2283 = vshll.u32 %v2217, 16
    %v2285 = vrot.slane %v2283, 1
    %v2286 = vsel %vm2218, %v2281, %v2285
    %v2311 = vunpack.c.l.b16 %v2159
    %v2312 = vunpack.c.l.b16 %v2160
    %v2313 = vunpack.c.l.b16 %v2161
    %v2314 = vunpack.c.l.b16 %v2162
    %v2315 = vunpack.c.l.b16 %v2163
    %v2316 = vunpack.c.l.b16 %v2164
    %v2317 = vunpack.c.l.b16 %v2165
    %v2318 = vunpack.c.l.b16 %v2166
    %v2319 = vunpack.c.l.b16 %v2167
    %v2320 = vunpack.c.l.b16 %v2168
    %v2321 = vunpack.c.l.b16 %v2169
    %v2322 = vunpack.c.l.b16 %v2170
    %v2323 = vunpack.c.l.b16 %v2171
    %v2324 = vunpack.c.l.b16 %v2172
    %v2325 = vunpack.c.l.b16 %v2173
    %v2326 = vunpack.c.l.b16 %v2174
    %v2327 = vpack.c.b16 %v2312, %v2311
    %v2328 = vpack.c.b16 %v2314, %v2313
    %v2329 = vpack.c.b16 %v2316, %v2315
    %v2330 = vpack.c.b16 %v2318, %v2317
    %v2331 = vpack.c.b16 %v2320, %v2319
    %v2332 = vpack.c.b16 %v2322, %v2321
    %v2333 = vpack.c.b16 %v2324, %v2323
    %v2334 = vpack.c.b16 %v2326, %v2325
    %2343 = vmatprep.subr.bf16.mxu0 0
    %2344 = vmatpush1.bf16.msra.mxu0 %v2334
    %2345 = vmatprep.subr.bf16.mxu0 0
    %2346 = vmatpush1.bf16.msra.mxu0 %v2333
    %2347 = vmatprep.subr.bf16.mxu0 0
    %2348 = vmatpush1.bf16.msra.mxu0 %v2332
    %2349 = vmatprep.subr.bf16.mxu0 0
    %2350 = vmatpush1.bf16.msra.mxu0 %v2331
    %2351 = vmatprep.subr.bf16.mxu0 0
    %2352 = vmatpush1.bf16.msra.mxu0 %v2330
    %2353 = vmatprep.subr.bf16.mxu0 0
    %2354 = vmatpush1.bf16.msra.mxu0 %v2329
    %2355 = vmatprep.subr.bf16.mxu0 0
    %2356 = vmatpush1.bf16.msra.mxu0 %v2328
    %2357 = vmatprep.subr.bf16.mxu0 0
    %2358 = vmatpush1.bf16.msra.mxu0 %v2327
    %2359 = vmatprep.subr.bf16.mxu0 0
    %2360 = vmatpush2.bf16.msra.mxu0 0
    %2361 = vmatprep.subr.bf16.mxu0 0
    %2362 = vmatpush2.bf16.msra.mxu0 0
    %2363 = vmatprep.subr.bf16.mxu0 0
    %2364 = vmatpush2.bf16.msra.mxu0 0
    %2365 = vmatprep.subr.bf16.mxu0 0
    %2366 = vmatpush2.bf16.msra.mxu0 0
    %2367 = vmatprep.subr.bf16.mxu0 0
    %2368 = vmatpush2.bf16.msra.mxu0 0
    %2369 = vmatprep.subr.bf16.mxu0 0
    %2370 = vmatpush2.bf16.msra.mxu0 0
    %2371 = vmatprep.subr.bf16.mxu0 0
    %2372 = vmatpush2.bf16.msra.mxu0 0
    %2373 = vmatprep.subr.bf16.mxu0 0
    %2374 = vmatpush2.bf16.msra.mxu0 0
    %2375 = vmatprep.mubr.bf16.mxu0 0
    %2376 = vmatmul.mubr.bf16.gmra.mxu0 %v2230
    %v2377 = vpop.f32.mrf.mxu0
    %v2378 = vadd.f32 0.0, %v2377
    %v2379 = vpop.f32.mrf.mxu0
    %v2380 = vpop.f32.mrf.mxu0
    %v2381 = vadd.f32 0.0, %v2380
    %v2382 = vpop.f32.mrf.mxu0
    %2383 = vmatprep.mubr.bf16.mxu0 0
    %2384 = vmatmul.mubr.bf16.gmra.mxu0 %v2238
    %v2385 = vpop.f32.mrf.mxu0
    %v2386 = vadd.f32 0.0, %v2385
    %v2387 = vpop.f32.mrf.mxu0
    %v2388 = vpop.f32.mrf.mxu0
    %v2389 = vadd.f32 0.0, %v2388
    %v2390 = vpop.f32.mrf.mxu0
    %2391 = vmatprep.mubr.bf16.mxu0 0
    %2392 = vmatmul.mubr.bf16.gmra.mxu0 %v2246
    %v2393 = vpop.f32.mrf.mxu0
    %v2394 = vadd.f32 0.0, %v2393
    %v2395 = vpop.f32.mrf.mxu0
    %v2396 = vpop.f32.mrf.mxu0
    %v2397 = vadd.f32 0.0, %v2396
    %v2398 = vpop.f32.mrf.mxu0
    %2399 = vmatprep.mubr.bf16.mxu0 0
    %2400 = vmatmul.mubr.bf16.gmra.mxu0 %v2254
    %v2401 = vpop.f32.mrf.mxu0
    %v2402 = vadd.f32 0.0, %v2401
    %v2403 = vpop.f32.mrf.mxu0
    %v2404 = vpop.f32.mrf.mxu0
    %v2405 = vadd.f32 0.0, %v2404
    %v2406 = vpop.f32.mrf.mxu0
    %2407 = vmatprep.mubr.bf16.mxu0 0
    %2408 = vmatmul.mubr.bf16.gmra.mxu0 %v2262
    %v2409 = vpop.f32.mrf.mxu0
    %v2410 = vadd.f32 0.0, %v2409
    %v2411 = vpop.f32.mrf.mxu0
    %v2412 = vpop.f32.mrf.mxu0
    %v2413 = vadd.f32 0.0, %v2412
    %v2414 = vpop.f32.mrf.mxu0
    %2415 = vmatprep.mubr.bf16.mxu0 0
    %2416 = vmatmul.mubr.bf16.gmra.mxu0 %v2270
    %v2417 = vpop.f32.mrf.mxu0
    %v2418 = vadd.f32 0.0, %v2417
    %v2419 = vpop.f32.mrf.mxu0
    %v2420 = vpop.f32.mrf.mxu0
    %v2421 = vadd.f32 0.0, %v2420
    %v2422 = vpop.f32.mrf.mxu0
    %2423 = vmatprep.mubr.bf16.mxu0 0
    %2424 = vmatmul.mubr.bf16.gmra.mxu0 %v2278
    %v2425 = vpop.f32.mrf.mxu0
    %v2426 = vadd.f32 0.0, %v2425
    %v2427 = vpop.f32.mrf.mxu0
    %v2428 = vpop.f32.mrf.mxu0
    %v2429 = vadd.f32 0.0, %v2428
    %v2430 = vpop.f32.mrf.mxu0
    %2431 = vmatprep.mubr.bf16.mxu0 0
    %2432 = vmatmul.mubr.bf16.gmra.mxu0 %v2286
    %v2433 = vpop.f32.mrf.mxu0
    %v2434 = vadd.f32 0.0, %v2433
    %v2435 = vpop.f32.mrf.mxu0
    %v2436 = vpop.f32.mrf.mxu0
    %v2437 = vadd.f32 0.0, %v2436
    %v2438 = vpop.f32.mrf.mxu0
    %2439 = vdwg.mxu0
    %v2440 = vadd.f32 %v2125, %v2378
    %v2441 = vadd.f32 %v2126, %v2381
    %v2442 = vadd.f32 %v2127, %v2386
    %v2443 = vadd.f32 %v2128, %v2389
    %v2444 = vadd.f32 %v2129, %v2394
    %v2445 = vadd.f32 %v2130, %v2397
    %v2446 = vadd.f32 %v2131, %v2402
    %v2447 = vadd.f32 %v2132, %v2405
    %v2448 = vadd.f32 %v2133, %v2410
    %v2449 = vadd.f32 %v2134, %v2413
    %v2450 = vadd.f32 %v2135, %v2418
    %v2451 = vadd.f32 %v2136, %v2421
    %v2452 = vadd.f32 %v2137, %v2426
    %v2453 = vadd.f32 %v2138, %v2429
    %v2454 = vadd.f32 %v2139, %v2434
    %v2455 = vadd.f32 %v2140, %v2437
    %v2456 = vld [vmem:[#allocation3 + $0x4] sm:$0xe]
    %s2457 = scalar_lea.vmem %s3, 256
    %v2458 = vld [vmem:[%s2457] sm:$0xf]
    %v2459 = vld [vmem:[%s2457 + $0x4] sm:$0xf]
    %v2460 = vld [vmem:[%s2457 + $0x8] sm:$0xf]
    %v2461 = vld [vmem:[%s2457 + $0xc] sm:$0xf]
    %v2462 = vld [vmem:[%s2457 + $0x10] sm:$0xf]
    %v2463 = vld [vmem:[%s2457 + $0x14] sm:$0xf]
    %v2464 = vld [vmem:[%s2457 + $0x18] sm:$0xf]
    %v2465 = vld [vmem:[%s2457 + $0x1c] sm:$0xf]
    %v2466 = vld [vmem:[%s2457 + $0x20] sm:$0xf]
    %v2467 = vld [vmem:[%s2457 + $0x24] sm:$0xf]
    %v2468 = vld [vmem:[%s2457 + $0x28] sm:$0xf]
    %v2469 = vld [vmem:[%s2457 + $0x2c] sm:$0xf]
    %v2470 = vld [vmem:[%s2457 + $0x30] sm:$0xf]
    %v2471 = vld [vmem:[%s2457 + $0x34] sm:$0xf]
    %v2472 = vld [vmem:[%s2457 + $0x38] sm:$0xf]
    %v2473 = vld [vmem:[%s2457 + $0x3c] sm:$0xf]
    %v2475 = vunpack.c.l.b16 %v2456
    %v2476 = vpack.c.b16 %v2193, %v2475
    %vm2477 = vcmask 1046528
    %v2478 = vrot.slane %v2476, 1
    %v2479 = vrot.slane %v2210, 1
    %v2480 = vsel %vm2477, %v2478, %v2479
    %v2481 = vrot.slane %v2211, 1
    %v2482 = vsel %vm2477, %v2479, %v2481
    %v2483 = vrot.slane %v2212, 1
    %v2484 = vsel %vm2477, %v2481, %v2483
    %v2485 = vrot.slane %v2213, 1
    %v2486 = vsel %vm2477, %v2483, %v2485
    %v2487 = vrot.slane %v2214, 1
    %v2488 = vsel %vm2477, %v2485, %v2487
    %v2489 = vrot.slane %v2215, 1
    %v2490 = vsel %vm2477, %v2487, %v2489
    %v2491 = vrot.slane %v2216, 1
    %v2492 = vsel %vm2477, %v2489, %v2491
    %v2493 = vrot.slane %v2217, 1
    %v2494 = vsel %vm2477, %v2491, %v2493
    %v2519 = vunpack.c.l.b16 %v2458
    %v2520 = vunpack.c.l.b16 %v2459
    %v2521 = vunpack.c.l.b16 %v2460
    %v2522 = vunpack.c.l.b16 %v2461
    %v2523 = vunpack.c.l.b16 %v2462
    %v2524 = vunpack.c.l.b16 %v2463
    %v2525 = vunpack.c.l.b16 %v2464
    %v2526 = vunpack.c.l.b16 %v2465
    %v2527 = vunpack.c.l.b16 %v2466
    %v2528 = vunpack.c.l.b16 %v2467
    %v2529 = vunpack.c.l.b16 %v2468
    %v2530 = vunpack.c.l.b16 %v2469
    %v2531 = vunpack.c.l.b16 %v2470
    %v2532 = vunpack.c.l.b16 %v2471
    %v2533 = vunpack.c.l.b16 %v2472
    %v2534 = vunpack.c.l.b16 %v2473
    %v2535 = vpack.c.b16 %v2520, %v2519
    %v2536 = vpack.c.b16 %v2522, %v2521
    %v2537 = vpack.c.b16 %v2524, %v2523
    %v2538 = vpack.c.b16 %v2526, %v2525
    %v2539 = vpack.c.b16 %v2528, %v2527
    %v2540 = vpack.c.b16 %v2530, %v2529
    %v2541 = vpack.c.b16 %v2532, %v2531
    %v2542 = vpack.c.b16 %v2534, %v2533
    %2551 = vmatprep.subr.bf16.mxu0 0
    %2552 = vmatpush1.bf16.msra.mxu0 %v2542
    %2553 = vmatprep.subr.bf16.mxu0 0
    %2554 = vmatpush1.bf16.msra.mxu0 %v2541
    %2555 = vmatprep.subr.bf16.mxu0 0
    %2556 = vmatpush1.bf16.msra.mxu0 %v2540
    %2557 = vmatprep.subr.bf16.mxu0 0
    %2558 = vmatpush1.bf16.msra.mxu0 %v2539
    %2559 = vmatprep.subr.bf16.mxu0 0
    %2560 = vmatpush1.bf16.msra.mxu0 %v2538
    %2561 = vmatprep.subr.bf16.mxu0 0
    %2562 = vmatpush1.bf16.msra.mxu0 %v2537
    %2563 = vmatprep.subr.bf16.mxu0 0
    %2564 = vmatpush1.bf16.msra.mxu0 %v2536
    %2565 = vmatprep.subr.bf16.mxu0 0
    %2566 = vmatpush1.bf16.msra.mxu0 %v2535
    %2567 = vmatprep.subr.bf16.mxu0 0
    %2568 = vmatpush2.bf16.msra.mxu0 0
    %2569 = vmatprep.subr.bf16.mxu0 0
    %2570 = vmatpush2.bf16.msra.mxu0 0
    %2571 = vmatprep.subr.bf16.mxu0 0
    %2572 = vmatpush2.bf16.msra.mxu0 0
    %2573 = vmatprep.subr.bf16.mxu0 0
    %2574 = vmatpush2.bf16.msra.mxu0 0
    %2575 = vmatprep.subr.bf16.mxu0 0
    %2576 = vmatpush2.bf16.msra.mxu0 0
    %2577 = vmatprep.subr.bf16.mxu0 0
    %2578 = vmatpush2.bf16.msra.mxu0 0
    %2579 = vmatprep.subr.bf16.mxu0 0
    %2580 = vmatpush2.bf16.msra.mxu0 0
    %2581 = vmatprep.subr.bf16.mxu0 0
    %2582 = vmatpush2.bf16.msra.mxu0 0
    %2583 = vmatprep.mubr.bf16.mxu0 0
    %2584 = vmatmul.mubr.bf16.gmra.mxu0 %v2480
    %v2585 = vpop.f32.mrf.mxu0
    %v2586 = vadd.f32 0.0, %v2585
    %v2587 = vpop.f32.mrf.mxu0
    %v2588 = vpop.f32.mrf.mxu0
    %v2589 = vadd.f32 0.0, %v2588
    %v2590 = vpop.f32.mrf.mxu0
    %2591 = vmatprep.mubr.bf16.mxu0 0
    %2592 = vmatmul.mubr.bf16.gmra.mxu0 %v2482
    %v2593 = vpop.f32.mrf.mxu0
    %v2594 = vadd.f32 0.0, %v2593
    %v2595 = vpop.f32.mrf.mxu0
    %v2596 = vpop.f32.mrf.mxu0
    %v2597 = vadd.f32 0.0, %v2596
    %v2598 = vpop.f32.mrf.mxu0
    %2599 = vmatprep.mubr.bf16.mxu0 0
    %2600 = vmatmul.mubr.bf16.gmra.mxu0 %v2484
    %v2601 = vpop.f32.mrf.mxu0
    %v2602 = vadd.f32 0.0, %v2601
    %v2603 = vpop.f32.mrf.mxu0
    %v2604 = vpop.f32.mrf.mxu0
    %v2605 = vadd.f32 0.0, %v2604
    %v2606 = vpop.f32.mrf.mxu0
    %2607 = vmatprep.mubr.bf16.mxu0 0
    %2608 = vmatmul.mubr.bf16.gmra.mxu0 %v2486
    %v2609 = vpop.f32.mrf.mxu0
    %v2610 = vadd.f32 0.0, %v2609
    %v2611 = vpop.f32.mrf.mxu0
    %v2612 = vpop.f32.mrf.mxu0
    %v2613 = vadd.f32 0.0, %v2612
    %v2614 = vpop.f32.mrf.mxu0
    %2615 = vmatprep.mubr.bf16.mxu0 0
    %2616 = vmatmul.mubr.bf16.gmra.mxu0 %v2488
    %v2617 = vpop.f32.mrf.mxu0
    %v2618 = vadd.f32 0.0, %v2617
    %v2619 = vpop.f32.mrf.mxu0
    %v2620 = vpop.f32.mrf.mxu0
    %v2621 = vadd.f32 0.0, %v2620
    %v2622 = vpop.f32.mrf.mxu0
    %2623 = vmatprep.mubr.bf16.mxu0 0
    %2624 = vmatmul.mubr.bf16.gmra.mxu0 %v2490
    %v2625 = vpop.f32.mrf.mxu0
    %v2626 = vadd.f32 0.0, %v2625
    %v2627 = vpop.f32.mrf.mxu0
    %v2628 = vpop.f32.mrf.mxu0
    %v2629 = vadd.f32 0.0, %v2628
    %v2630 = vpop.f32.mrf.mxu0
    %2631 = vmatprep.mubr.bf16.mxu0 0
    %2632 = vmatmul.mubr.bf16.gmra.mxu0 %v2492
    %v2633 = vpop.f32.mrf.mxu0
    %v2634 = vadd.f32 0.0, %v2633
    %v2635 = vpop.f32.mrf.mxu0
    %v2636 = vpop.f32.mrf.mxu0
    %v2637 = vadd.f32 0.0, %v2636
    %v2638 = vpop.f32.mrf.mxu0
    %2639 = vmatprep.mubr.bf16.mxu0 0
    %2640 = vmatmul.mubr.bf16.gmra.mxu0 %v2494
    %v2641 = vpop.f32.mrf.mxu0
    %v2642 = vadd.f32 0.0, %v2641
    %v2643 = vpop.f32.mrf.mxu0
    %v2644 = vpop.f32.mrf.mxu0
    %v2645 = vadd.f32 0.0, %v2644
    %v2646 = vpop.f32.mrf.mxu0
    %2647 = vdwg.mxu0
    %v2648 = vadd.f32 %v2440, %v2586
    %v2649 = vadd.f32 %v2441, %v2589
    %v2650 = vadd.f32 %v2442, %v2594
    %v2651 = vadd.f32 %v2443, %v2597
    %v2652 = vadd.f32 %v2444, %v2602
    %v2653 = vadd.f32 %v2445, %v2605
    %v2654 = vadd.f32 %v2446, %v2610
    %v2655 = vadd.f32 %v2447, %v2613
    %v2656 = vadd.f32 %v2448, %v2618
    %v2657 = vadd.f32 %v2449, %v2621
    %v2658 = vadd.f32 %v2450, %v2626
    %v2659 = vadd.f32 %v2451, %v2629
    %v2660 = vadd.f32 %v2452, %v2634
    %v2661 = vadd.f32 %v2453, %v2637
    %v2662 = vadd.f32 %v2454, %v2642
    %v2663 = vadd.f32 %v2455, %v2645
    %v2664 = vld [vmem:[%s4] sm:$0x1]
    %v2666 = vlaneseq
    %v2667 = vshrl.u32 %v2666, 7
    %v2668 = vsub.s32 0, %v2667
    %v2669 = vrot.slane %v2664, %v2668
    %v2671 = vadd.f32 %v2648, %v2669
    %v2672 = vadd.f32 %v2649, %v2669
    %v2673 = vadd.f32 %v2650, %v2669
    %v2674 = vadd.f32 %v2651, %v2669
    %v2675 = vadd.f32 %v2652, %v2669
    %v2676 = vadd.f32 %v2653, %v2669
    %v2677 = vadd.f32 %v2654, %v2669
    %v2678 = vadd.f32 %v2655, %v2669
    %v2679 = vadd.f32 %v2656, %v2669
    %v2680 = vadd.f32 %v2657, %v2669
    %v2681 = vadd.f32 %v2658, %v2669
    %v2682 = vadd.f32 %v2659, %v2669
    %v2683 = vadd.f32 %v2660, %v2669
    %v2684 = vadd.f32 %v2661, %v2669
    %v2685 = vadd.f32 %v2662, %v2669
    %v2686 = vadd.f32 %v2663, %v2669
    %v2687 = vmax.f32 %v2671, 0.0
    %v2688 = vmax.f32 %v2672, 0.0
    %v2689 = vmax.f32 %v2673, 0.0
    %v2690 = vmax.f32 %v2674, 0.0
    %v2691 = vmax.f32 %v2675, 0.0
    %v2692 = vmax.f32 %v2676, 0.0
    %v2693 = vmax.f32 %v2677, 0.0
    %v2694 = vmax.f32 %v2678, 0.0
    %v2695 = vmax.f32 %v2679, 0.0
    %v2696 = vmax.f32 %v2680, 0.0
    %v2697 = vmax.f32 %v2681, 0.0
    %v2698 = vmax.f32 %v2682, 0.0
    %v2699 = vmax.f32 %v2683, 0.0
    %v2700 = vmax.f32 %v2684, 0.0
    %v2701 = vmax.f32 %v2685, 0.0
    %v2702 = vmax.f32 %v2686, 0.0
    %2703 = vst [vmem:[#allocation2] sm:$0xff] %v2687
    %2704 = vst [vmem:[#allocation2 + $0x8] sm:$0xff] %v2688
    %2705 = vst [vmem:[#allocation2 + $0x10] sm:$0xff] %v2689
    %2706 = vst [vmem:[#allocation2 + $0x18] sm:$0xff] %v2690
    %2707 = vst [vmem:[#allocation2 + $0x20] sm:$0xff] %v2691
    %2708 = vst [vmem:[#allocation2 + $0x28] sm:$0xff] %v2692
    %2709 = vst [vmem:[#allocation2 + $0x30] sm:$0xff] %v2693
    %2710 = vst [vmem:[#allocation2 + $0x38] sm:$0xff] %v2694
    %2711 = vst [vmem:[#allocation2 + $0x40] sm:$0xff] %v2695
    %2712 = vst [vmem:[#allocation2 + $0x48] sm:$0xff] %v2696
    %2713 = vst [vmem:[#allocation2 + $0x50] sm:$0xff] %v2697
    %2714 = vst [vmem:[#allocation2 + $0x58] sm:$0xff] %v2698
    %2715 = vst [vmem:[#allocation2 + $0x60] sm:$0xff] %v2699
    %2716 = vst [vmem:[#allocation2 + $0x68] sm:$0xff] %v2700
    %2717 = vst [vmem:[#allocation2 + $0x70] sm:$0xff] %v2701
    %2718 = vst [vmem:[#allocation2 + $0x78] sm:$0xff] %v2702
    %s2719 = scalar_lea.vmem [#allocation2], 18
    %v2720 = vld [vmem:[%s2719] ss:$64 sm:$0x1]
    %v2721 = vld [vmem:[%s2719] ss:$64 sm:$0x2]
    %v2722 = vor.u32 %v2720, %v2721
    %s2723 = scalar_lea.vmem [#allocation2], 19
    %v2724 = vld [vmem:[%s2723] ss:$64 sm:$0x1]
    %v2725 = vld [vmem:[%s2723] ss:$64 sm:$0x2]
    %v2726 = vor.u32 %v2724, %v2725
    %v2727 = vmax.f32 %v2722, %v2726
    %s2728 = scalar_lea.vmem [#allocation2], 26
    %v2729 = vld [vmem:[%s2728] ss:$64 sm:$0x1]
    %v2730 = vld [vmem:[%s2728] ss:$64 sm:$0x2]
    %v2731 = vor.u32 %v2729, %v2730
    %v2732 = vmax.f32 %v2727, %v2731
    %s2733 = scalar_lea.vmem [#allocation2], 27
    %v2734 = vld [vmem:[%s2733] ss:$64 sm:$0x1]
    %v2735 = vld [vmem:[%s2733] ss:$64 sm:$0x2]
    %v2736 = vor.u32 %v2734, %v2735
    %v2737 = vmax.f32 %v2732, %v2736
    %s2738 = scalar_lea.vmem [#allocation2], 20
    %v2739 = vld [vmem:[%s2738] ss:$64 sm:$0x1]
    %v2740 = vld [vmem:[%s2738] ss:$64 sm:$0x2]
    %v2741 = vor.u32 %v2739, %v2740
    %s2742 = scalar_lea.vmem [#allocation2], 21
    %v2743 = vld [vmem:[%s2742] ss:$64 sm:$0x1]
    %v2744 = vld [vmem:[%s2742] ss:$64 sm:$0x2]
    %v2745 = vor.u32 %v2743, %v2744
    %v2746 = vmax.f32 %v2741, %v2745
    %s2747 = scalar_lea.vmem [#allocation2], 28
    %v2748 = vld [vmem:[%s2747] ss:$64 sm:$0x1]
    %v2749 = vld [vmem:[%s2747] ss:$64 sm:$0x2]
    %v2750 = vor.u32 %v2748, %v2749
    %v2751 = vmax.f32 %v2746, %v2750
    %s2752 = scalar_lea.vmem [#allocation2], 29
    %v2753 = vld [vmem:[%s2752] ss:$64 sm:$0x1]
    %v2754 = vld [vmem:[%s2752] ss:$64 sm:$0x2]
    %v2755 = vor.u32 %v2753, %v2754
    %v2756 = vmax.f32 %v2751, %v2755
    %s2757 = scalar_lea.vmem [#allocation2], 34
    %v2758 = vld [vmem:[%s2757] ss:$64 sm:$0x1]
    %v2759 = vld [vmem:[%s2757] ss:$64 sm:$0x2]
    %v2760 = vor.u32 %v2758, %v2759
    %s2761 = scalar_lea.vmem [#allocation2], 35
    %v2762 = vld [vmem:[%s2761] ss:$64 sm:$0x1]
    %v2763 = vld [vmem:[%s2761] ss:$64 sm:$0x2]
    %v2764 = vor.u32 %v2762, %v2763
    %v2765 = vmax.f32 %v2760, %v2764
    %s2766 = scalar_lea.vmem [#allocation2], 42
    %v2767 = vld [vmem:[%s2766] ss:$64 sm:$0x1]
    %v2768 = vld [vmem:[%s2766] ss:$64 sm:$0x2]
    %v2769 = vor.u32 %v2767, %v2768
    %v2770 = vmax.f32 %v2765, %v2769
    %s2771 = scalar_lea.vmem [#allocation2], 43
    %v2772 = vld [vmem:[%s2771] ss:$64 sm:$0x1]
    %v2773 = vld [vmem:[%s2771] ss:$64 sm:$0x2]
    %v2774 = vor.u32 %v2772, %v2773
    %v2775 = vmax.f32 %v2770, %v2774
    %s2776 = scalar_lea.vmem [#allocation2], 36
    %v2777 = vld [vmem:[%s2776] ss:$64 sm:$0x1]
    %v2778 = vld [vmem:[%s2776] ss:$64 sm:$0x2]
    %v2779 = vor.u32 %v2777, %v2778
    %s2780 = scalar_lea.vmem [#allocation2], 37
    %v2781 = vld [vmem:[%s2780] ss:$64 sm:$0x1]
    %v2782 = vld [vmem:[%s2780] ss:$64 sm:$0x2]
    %v2783 = vor.u32 %v2781, %v2782
    %v2784 = vmax.f32 %v2779, %v2783
    %s2785 = scalar_lea.vmem [#allocation2], 44
    %v2786 = vld [vmem:[%s2785] ss:$64 sm:$0x1]
    %v2787 = vld [vmem:[%s2785] ss:$64 sm:$0x2]
    %v2788 = vor.u32 %v2786, %v2787
    %v2789 = vmax.f32 %v2784, %v2788
    %s2790 = scalar_lea.vmem [#allocation2], 45
    %v2791 = vld [vmem:[%s2790] ss:$64 sm:$0x1]
    %v2792 = vld [vmem:[%s2790] ss:$64 sm:$0x2]
    %v2793 = vor.u32 %v2791, %v2792
    %v2794 = vmax.f32 %v2789, %v2793
    %s2795 = smul.u32 4, 64
    %s2796 = smul.u32 %s2795, 8
    %s2797 = sshll.u32 %s2796, 4
    %2798 = dma.done [#allocation6], %s2797
    %v2799 = vpack.c.bf16 %v2737, %v2737
    %v2800 = vpack.c.bf16 %v2756, %v2756
    %v2801 = vpack.c.bf16 %v2775, %v2775
    %v2802 = vpack.c.bf16 %v2794, %v2794
    %v2803 = vld [vmem:[#allocation4] sm:$0xff]
    %v2804 = vld [vmem:[#allocation4 + $0x8] sm:$0xff]
    %v2805 = vld [vmem:[#allocation4 + $0x10] sm:$0xff]
    %v2806 = vld [vmem:[#allocation4 + $0x18] sm:$0xff]
    %v2807 = vld [vmem:[#allocation4 + $0x20] sm:$0xff]
    %v2808 = vld [vmem:[#allocation4 + $0x28] sm:$0xff]
    %v2809 = vld [vmem:[#allocation4 + $0x30] sm:$0xff]
    %v2810 = vld [vmem:[#allocation4 + $0x38] sm:$0xff]
    %v2811 = vld [vmem:[#allocation4 + $0x40] sm:$0xff]
    %v2812 = vld [vmem:[#allocation4 + $0x48] sm:$0xff]
    %v2813 = vld [vmem:[#allocation4 + $0x50] sm:$0xff]
    %v2814 = vld [vmem:[#allocation4 + $0x58] sm:$0xff]
    %v2815 = vld [vmem:[#allocation4 + $0x60] sm:$0xff]
    %v2816 = vld [vmem:[#allocation4 + $0x68] sm:$0xff]
    %v2817 = vld [vmem:[#allocation4 + $0x70] sm:$0xff]
    %v2818 = vld [vmem:[#allocation4 + $0x78] sm:$0xff]
    %v2819 = vld [vmem:[#allocation4 + $0x80] sm:$0xff]
    %v2820 = vld [vmem:[#allocation4 + $0x88] sm:$0xff]
    %v2821 = vld [vmem:[#allocation4 + $0x90] sm:$0xff]
    %v2822 = vld [vmem:[#allocation4 + $0x98] sm:$0xff]
    %v2823 = vld [vmem:[#allocation4 + $0xa0] sm:$0xff]
    %v2824 = vld [vmem:[#allocation4 + $0xa8] sm:$0xff]
    %v2825 = vld [vmem:[#allocation4 + $0xb0] sm:$0xff]
    %v2826 = vld [vmem:[#allocation4 + $0xb8] sm:$0xff]
    %v2827 = vld [vmem:[#allocation4 + $0xc0] sm:$0xff]
    %v2828 = vld [vmem:[#allocation4 + $0xc8] sm:$0xff]
    %v2829 = vld [vmem:[#allocation4 + $0xd0] sm:$0xff]
    %v2830 = vld [vmem:[#allocation4 + $0xd8] sm:$0xff]
    %v2831 = vld [vmem:[#allocation4 + $0xe0] sm:$0xff]
    %v2832 = vld [vmem:[#allocation4 + $0xe8] sm:$0xff]
    %v2833 = vld [vmem:[#allocation4 + $0xf0] sm:$0xff]
    %v2834 = vld [vmem:[#allocation4 + $0xf8] sm:$0xff]
    %v2835 = vld [vmem:[#allocation4 + $0x100] sm:$0xff]
    %v2836 = vld [vmem:[#allocation4 + $0x108] sm:$0xff]
    %v2837 = vld [vmem:[#allocation4 + $0x110] sm:$0xff]
    %v2838 = vld [vmem:[#allocation4 + $0x118] sm:$0xff]
    %v2839 = vld [vmem:[#allocation4 + $0x120] sm:$0xff]
    %v2840 = vld [vmem:[#allocation4 + $0x128] sm:$0xff]
    %v2841 = vld [vmem:[#allocation4 + $0x130] sm:$0xff]
    %v2842 = vld [vmem:[#allocation4 + $0x138] sm:$0xff]
    %v2843 = vld [vmem:[#allocation4 + $0x140] sm:$0xff]
    %v2844 = vld [vmem:[#allocation4 + $0x148] sm:$0xff]
    %v2845 = vld [vmem:[#allocation4 + $0x150] sm:$0xff]
    %v2846 = vld [vmem:[#allocation4 + $0x158] sm:$0xff]
    %v2847 = vld [vmem:[#allocation4 + $0x160] sm:$0xff]
    %v2848 = vld [vmem:[#allocation4 + $0x168] sm:$0xff]
    %v2849 = vld [vmem:[#allocation4 + $0x170] sm:$0xff]
    %v2850 = vld [vmem:[#allocation4 + $0x178] sm:$0xff]
    %v2851 = vld [vmem:[#allocation4 + $0x180] sm:$0xff]
    %v2852 = vld [vmem:[#allocation4 + $0x188] sm:$0xff]
    %v2853 = vld [vmem:[#allocation4 + $0x190] sm:$0xff]
    %v2854 = vld [vmem:[#allocation4 + $0x198] sm:$0xff]
    %v2855 = vld [vmem:[#allocation4 + $0x1a0] sm:$0xff]
    %v2856 = vld [vmem:[#allocation4 + $0x1a8] sm:$0xff]
    %v2857 = vld [vmem:[#allocation4 + $0x1b0] sm:$0xff]
    %v2858 = vld [vmem:[#allocation4 + $0x1b8] sm:$0xff]
    %v2859 = vld [vmem:[#allocation4 + $0x1c0] sm:$0xff]
    %v2860 = vld [vmem:[#allocation4 + $0x1c8] sm:$0xff]
    %v2861 = vld [vmem:[#allocation4 + $0x1d0] sm:$0xff]
    %v2862 = vld [vmem:[#allocation4 + $0x1d8] sm:$0xff]
    %v2863 = vld [vmem:[#allocation4 + $0x1e0] sm:$0xff]
    %v2864 = vld [vmem:[#allocation4 + $0x1e8] sm:$0xff]
    %v2865 = vld [vmem:[#allocation4 + $0x1f0] sm:$0xff]
    %v2866 = vld [vmem:[#allocation4 + $0x1f8] sm:$0xff]
    %v2867 = vld [vmem:[#allocation4 + $0x200] sm:$0xff]
    %v2868 = vld [vmem:[#allocation4 + $0x208] sm:$0xff]
    %v2869 = vld [vmem:[#allocation4 + $0x210] sm:$0xff]
    %v2870 = vld [vmem:[#allocation4 + $0x218] sm:$0xff]
    %v2871 = vld [vmem:[#allocation4 + $0x220] sm:$0xff]
    %v2872 = vld [vmem:[#allocation4 + $0x228] sm:$0xff]
    %v2873 = vld [vmem:[#allocation4 + $0x230] sm:$0xff]
    %v2874 = vld [vmem:[#allocation4 + $0x238] sm:$0xff]
    %v2875 = vld [vmem:[#allocation4 + $0x240] sm:$0xff]
    %v2876 = vld [vmem:[#allocation4 + $0x248] sm:$0xff]
    %v2877 = vld [vmem:[#allocation4 + $0x250] sm:$0xff]
    %v2878 = vld [vmem:[#allocation4 + $0x258] sm:$0xff]
    %v2879 = vld [vmem:[#allocation4 + $0x260] sm:$0xff]
    %v2880 = vld [vmem:[#allocation4 + $0x268] sm:$0xff]
    %v2881 = vld [vmem:[#allocation4 + $0x270] sm:$0xff]
    %v2882 = vld [vmem:[#allocation4 + $0x278] sm:$0xff]
    %v2883 = vld [vmem:[#allocation4 + $0x280] sm:$0xff]
    %v2884 = vld [vmem:[#allocation4 + $0x288] sm:$0xff]
    %v2885 = vld [vmem:[#allocation4 + $0x290] sm:$0xff]
    %v2886 = vld [vmem:[#allocation4 + $0x298] sm:$0xff]
    %v2887 = vld [vmem:[#allocation4 + $0x2a0] sm:$0xff]
    %v2888 = vld [vmem:[#allocation4 + $0x2a8] sm:$0xff]
    %v2889 = vld [vmem:[#allocation4 + $0x2b0] sm:$0xff]
    %v2890 = vld [vmem:[#allocation4 + $0x2b8] sm:$0xff]
    %v2891 = vld [vmem:[#allocation4 + $0x2c0] sm:$0xff]
    %v2892 = vld [vmem:[#allocation4 + $0x2c8] sm:$0xff]
    %v2893 = vld [vmem:[#allocation4 + $0x2d0] sm:$0xff]
    %v2894 = vld [vmem:[#allocation4 + $0x2d8] sm:$0xff]
    %v2895 = vld [vmem:[#allocation4 + $0x2e0] sm:$0xff]
    %v2896 = vld [vmem:[#allocation4 + $0x2e8] sm:$0xff]
    %v2897 = vld [vmem:[#allocation4 + $0x2f0] sm:$0xff]
    %v2898 = vld [vmem:[#allocation4 + $0x2f8] sm:$0xff]
    %v2899 = vld [vmem:[#allocation4 + $0x300] sm:$0xff]
    %v2900 = vld [vmem:[#allocation4 + $0x308] sm:$0xff]
    %v2901 = vld [vmem:[#allocation4 + $0x310] sm:$0xff]
    %v2902 = vld [vmem:[#allocation4 + $0x318] sm:$0xff]
    %v2903 = vld [vmem:[#allocation4 + $0x320] sm:$0xff]
    %v2904 = vld [vmem:[#allocation4 + $0x328] sm:$0xff]
    %v2905 = vld [vmem:[#allocation4 + $0x330] sm:$0xff]
    %v2906 = vld [vmem:[#allocation4 + $0x338] sm:$0xff]
    %v2907 = vld [vmem:[#allocation4 + $0x340] sm:$0xff]
    %v2908 = vld [vmem:[#allocation4 + $0x348] sm:$0xff]
    %v2909 = vld [vmem:[#allocation4 + $0x350] sm:$0xff]
    %v2910 = vld [vmem:[#allocation4 + $0x358] sm:$0xff]
    %v2911 = vld [vmem:[#allocation4 + $0x360] sm:$0xff]
    %v2912 = vld [vmem:[#allocation4 + $0x368] sm:$0xff]
    %v2913 = vld [vmem:[#allocation4 + $0x370] sm:$0xff]
    %v2914 = vld [vmem:[#allocation4 + $0x378] sm:$0xff]
    %v2915 = vld [vmem:[#allocation4 + $0x380] sm:$0xff]
    %v2916 = vld [vmem:[#allocation4 + $0x388] sm:$0xff]
    %v2917 = vld [vmem:[#allocation4 + $0x390] sm:$0xff]
    %v2918 = vld [vmem:[#allocation4 + $0x398] sm:$0xff]
    %v2919 = vld [vmem:[#allocation4 + $0x3a0] sm:$0xff]
    %v2920 = vld [vmem:[#allocation4 + $0x3a8] sm:$0xff]
    %v2921 = vld [vmem:[#allocation4 + $0x3b0] sm:$0xff]
    %v2922 = vld [vmem:[#allocation4 + $0x3b8] sm:$0xff]
    %v2923 = vld [vmem:[#allocation4 + $0x3c0] sm:$0xff]
    %v2924 = vld [vmem:[#allocation4 + $0x3c8] sm:$0xff]
    %v2925 = vld [vmem:[#allocation4 + $0x3d0] sm:$0xff]
    %v2926 = vld [vmem:[#allocation4 + $0x3d8] sm:$0xff]
    %v2927 = vld [vmem:[#allocation4 + $0x3e0] sm:$0xff]
    %v2928 = vld [vmem:[#allocation4 + $0x3e8] sm:$0xff]
    %v2929 = vld [vmem:[#allocation4 + $0x3f0] sm:$0xff]
    %v2930 = vld [vmem:[#allocation4 + $0x3f8] sm:$0xff]
    %v2931 = vld [vmem:[#allocation4 + $0x400] sm:$0xff]
    %v2932 = vld [vmem:[#allocation4 + $0x408] sm:$0xff]
    %v2933 = vld [vmem:[#allocation4 + $0x410] sm:$0xff]
    %v2934 = vld [vmem:[#allocation4 + $0x418] sm:$0xff]
    %v2935 = vld [vmem:[#allocation4 + $0x420] sm:$0xff]
    %v2936 = vld [vmem:[#allocation4 + $0x428] sm:$0xff]
    %v2937 = vld [vmem:[#allocation4 + $0x430] sm:$0xff]
    %v2938 = vld [vmem:[#allocation4 + $0x438] sm:$0xff]
    %v2939 = vld [vmem:[#allocation4 + $0x440] sm:$0xff]
    %v2940 = vld [vmem:[#allocation4 + $0x448] sm:$0xff]
    %v2941 = vld [vmem:[#allocation4 + $0x450] sm:$0xff]
    %v2942 = vld [vmem:[#allocation4 + $0x458] sm:$0xff]
    %v2943 = vld [vmem:[#allocation4 + $0x460] sm:$0xff]
    %v2944 = vld [vmem:[#allocation4 + $0x468] sm:$0xff]
    %v2945 = vld [vmem:[#allocation4 + $0x470] sm:$0xff]
    %v2946 = vld [vmem:[#allocation4 + $0x478] sm:$0xff]
    %v2947 = vld [vmem:[#allocation4 + $0x480] sm:$0xff]
    %v2948 = vld [vmem:[#allocation4 + $0x488] sm:$0xff]
    %v2949 = vld [vmem:[#allocation4 + $0x490] sm:$0xff]
    %v2950 = vld [vmem:[#allocation4 + $0x498] sm:$0xff]
    %v2951 = vld [vmem:[#allocation4 + $0x4a0] sm:$0xff]
    %v2952 = vld [vmem:[#allocation4 + $0x4a8] sm:$0xff]
    %v2953 = vld [vmem:[#allocation4 + $0x4b0] sm:$0xff]
    %v2954 = vld [vmem:[#allocation4 + $0x4b8] sm:$0xff]
    %v2955 = vld [vmem:[#allocation4 + $0x4c0] sm:$0xff]
    %v2956 = vld [vmem:[#allocation4 + $0x4c8] sm:$0xff]
    %v2957 = vld [vmem:[#allocation4 + $0x4d0] sm:$0xff]
    %v2958 = vld [vmem:[#allocation4 + $0x4d8] sm:$0xff]
    %v2959 = vld [vmem:[#allocation4 + $0x4e0] sm:$0xff]
    %v2960 = vld [vmem:[#allocation4 + $0x4e8] sm:$0xff]
    %v2961 = vld [vmem:[#allocation4 + $0x4f0] sm:$0xff]
    %v2962 = vld [vmem:[#allocation4 + $0x4f8] sm:$0xff]
    %v2963 = vld [vmem:[#allocation4 + $0x500] sm:$0xff]
    %v2964 = vld [vmem:[#allocation4 + $0x508] sm:$0xff]
    %v2965 = vld [vmem:[#allocation4 + $0x510] sm:$0xff]
    %v2966 = vld [vmem:[#allocation4 + $0x518] sm:$0xff]
    %v2967 = vld [vmem:[#allocation4 + $0x520] sm:$0xff]
    %v2968 = vld [vmem:[#allocation4 + $0x528] sm:$0xff]
    %v2969 = vld [vmem:[#allocation4 + $0x530] sm:$0xff]
    %v2970 = vld [vmem:[#allocation4 + $0x538] sm:$0xff]
    %v2971 = vld [vmem:[#allocation4 + $0x540] sm:$0xff]
    %v2972 = vld [vmem:[#allocation4 + $0x548] sm:$0xff]
    %v2973 = vld [vmem:[#allocation4 + $0x550] sm:$0xff]
    %v2974 = vld [vmem:[#allocation4 + $0x558] sm:$0xff]
    %v2975 = vld [vmem:[#allocation4 + $0x560] sm:$0xff]
    %v2976 = vld [vmem:[#allocation4 + $0x568] sm:$0xff]
    %v2977 = vld [vmem:[#allocation4 + $0x570] sm:$0xff]
    %v2978 = vld [vmem:[#allocation4 + $0x578] sm:$0xff]
    %v2979 = vld [vmem:[#allocation4 + $0x580] sm:$0xff]
    %v2980 = vld [vmem:[#allocation4 + $0x588] sm:$0xff]
    %v2981 = vld [vmem:[#allocation4 + $0x590] sm:$0xff]
    %v2982 = vld [vmem:[#allocation4 + $0x598] sm:$0xff]
    %v2983 = vld [vmem:[#allocation4 + $0x5a0] sm:$0xff]
    %v2984 = vld [vmem:[#allocation4 + $0x5a8] sm:$0xff]
    %v2985 = vld [vmem:[#allocation4 + $0x5b0] sm:$0xff]
    %v2986 = vld [vmem:[#allocation4 + $0x5b8] sm:$0xff]
    %v2987 = vld [vmem:[#allocation4 + $0x5c0] sm:$0xff]
    %v2988 = vld [vmem:[#allocation4 + $0x5c8] sm:$0xff]
    %v2989 = vld [vmem:[#allocation4 + $0x5d0] sm:$0xff]
    %v2990 = vld [vmem:[#allocation4 + $0x5d8] sm:$0xff]
    %v2991 = vld [vmem:[#allocation4 + $0x5e0] sm:$0xff]
    %v2992 = vld [vmem:[#allocation4 + $0x5e8] sm:$0xff]
    %v2993 = vld [vmem:[#allocation4 + $0x5f0] sm:$0xff]
    %v2994 = vld [vmem:[#allocation4 + $0x5f8] sm:$0xff]
    %v2995 = vld [vmem:[#allocation4 + $0x600] sm:$0xff]
    %v2996 = vld [vmem:[#allocation4 + $0x608] sm:$0xff]
    %v2997 = vld [vmem:[#allocation4 + $0x610] sm:$0xff]
    %v2998 = vld [vmem:[#allocation4 + $0x618] sm:$0xff]
    %v2999 = vld [vmem:[#allocation4 + $0x620] sm:$0xff]
    %v3000 = vld [vmem:[#allocation4 + $0x628] sm:$0xff]
    %v3001 = vld [vmem:[#allocation4 + $0x630] sm:$0xff]
    %v3002 = vld [vmem:[#allocation4 + $0x638] sm:$0xff]
    %v3003 = vld [vmem:[#allocation4 + $0x640] sm:$0xff]
    %v3004 = vld [vmem:[#allocation4 + $0x648] sm:$0xff]
    %v3005 = vld [vmem:[#allocation4 + $0x650] sm:$0xff]
    %v3006 = vld [vmem:[#allocation4 + $0x658] sm:$0xff]
    %v3007 = vld [vmem:[#allocation4 + $0x660] sm:$0xff]
    %v3008 = vld [vmem:[#allocation4 + $0x668] sm:$0xff]
    %v3009 = vld [vmem:[#allocation4 + $0x670] sm:$0xff]
    %v3010 = vld [vmem:[#allocation4 + $0x678] sm:$0xff]
    %v3011 = vld [vmem:[#allocation4 + $0x680] sm:$0xff]
    %v3012 = vld [vmem:[#allocation4 + $0x688] sm:$0xff]
    %v3013 = vld [vmem:[#allocation4 + $0x690] sm:$0xff]
    %v3014 = vld [vmem:[#allocation4 + $0x698] sm:$0xff]
    %v3015 = vld [vmem:[#allocation4 + $0x6a0] sm:$0xff]
    %v3016 = vld [vmem:[#allocation4 + $0x6a8] sm:$0xff]
    %v3017 = vld [vmem:[#allocation4 + $0x6b0] sm:$0xff]
    %v3018 = vld [vmem:[#allocation4 + $0x6b8] sm:$0xff]
    %v3019 = vld [vmem:[#allocation4 + $0x6c0] sm:$0xff]
    %v3020 = vld [vmem:[#allocation4 + $0x6c8] sm:$0xff]
    %v3021 = vld [vmem:[#allocation4 + $0x6d0] sm:$0xff]
    %v3022 = vld [vmem:[#allocation4 + $0x6d8] sm:$0xff]
    %v3023 = vld [vmem:[#allocation4 + $0x6e0] sm:$0xff]
    %v3024 = vld [vmem:[#allocation4 + $0x6e8] sm:$0xff]
    %v3025 = vld [vmem:[#allocation4 + $0x6f0] sm:$0xff]
    %v3026 = vld [vmem:[#allocation4 + $0x6f8] sm:$0xff]
    %v3027 = vld [vmem:[#allocation4 + $0x700] sm:$0xff]
    %v3028 = vld [vmem:[#allocation4 + $0x708] sm:$0xff]
    %v3029 = vld [vmem:[#allocation4 + $0x710] sm:$0xff]
    %v3030 = vld [vmem:[#allocation4 + $0x718] sm:$0xff]
    %v3031 = vld [vmem:[#allocation4 + $0x720] sm:$0xff]
    %v3032 = vld [vmem:[#allocation4 + $0x728] sm:$0xff]
    %v3033 = vld [vmem:[#allocation4 + $0x730] sm:$0xff]
    %v3034 = vld [vmem:[#allocation4 + $0x738] sm:$0xff]
    %v3035 = vld [vmem:[#allocation4 + $0x740] sm:$0xff]
    %v3036 = vld [vmem:[#allocation4 + $0x748] sm:$0xff]
    %v3037 = vld [vmem:[#allocation4 + $0x750] sm:$0xff]
    %v3038 = vld [vmem:[#allocation4 + $0x758] sm:$0xff]
    %v3039 = vld [vmem:[#allocation4 + $0x760] sm:$0xff]
    %v3040 = vld [vmem:[#allocation4 + $0x768] sm:$0xff]
    %v3041 = vld [vmem:[#allocation4 + $0x770] sm:$0xff]
    %v3042 = vld [vmem:[#allocation4 + $0x778] sm:$0xff]
    %v3043 = vld [vmem:[#allocation4 + $0x780] sm:$0xff]
    %v3044 = vld [vmem:[#allocation4 + $0x788] sm:$0xff]
    %v3045 = vld [vmem:[#allocation4 + $0x790] sm:$0xff]
    %v3046 = vld [vmem:[#allocation4 + $0x798] sm:$0xff]
    %v3047 = vld [vmem:[#allocation4 + $0x7a0] sm:$0xff]
    %v3048 = vld [vmem:[#allocation4 + $0x7a8] sm:$0xff]
    %v3049 = vld [vmem:[#allocation4 + $0x7b0] sm:$0xff]
    %v3050 = vld [vmem:[#allocation4 + $0x7b8] sm:$0xff]
    %v3051 = vld [vmem:[#allocation4 + $0x7c0] sm:$0xff]
    %v3052 = vld [vmem:[#allocation4 + $0x7c8] sm:$0xff]
    %v3053 = vld [vmem:[#allocation4 + $0x7d0] sm:$0xff]
    %v3054 = vld [vmem:[#allocation4 + $0x7d8] sm:$0xff]
    %v3055 = vld [vmem:[#allocation4 + $0x7e0] sm:$0xff]
    %v3056 = vld [vmem:[#allocation4 + $0x7e8] sm:$0xff]
    %v3057 = vld [vmem:[#allocation4 + $0x7f0] sm:$0xff]
    %v3058 = vld [vmem:[#allocation4 + $0x7f8] sm:$0xff]
    %v3059 = vld [vmem:[%s6] sm:$0xff]
    %v3061 = vlaneseq
    %v3062 = vshrl.u32 %v3061, 7
    %v3063 = vsub.s32 0, %v3062
    %v3064 = vrot.slane %v3059, %v3063
    %v3065 = vlaneseq
    %v3066 = vshrl.u32 %v3065, 7
    %v3067 = vsub.s32 1, %v3066
    %v3068 = vrot.slane %v3059, %v3067
    %v3069 = vlaneseq
    %v3070 = vshrl.u32 %v3069, 7
    %v3071 = vsub.s32 2, %v3070
    %v3072 = vrot.slane %v3059, %v3071
    %v3073 = vlaneseq
    %v3074 = vshrl.u32 %v3073, 7
    %v3075 = vsub.s32 3, %v3074
    %v3076 = vrot.slane %v3059, %v3075
    %v3077 = vlaneseq
    %v3078 = vshrl.u32 %v3077, 7
    %v3079 = vsub.s32 4, %v3078
    %v3080 = vrot.slane %v3059, %v3079
    %v3081 = vlaneseq
    %v3082 = vshrl.u32 %v3081, 7
    %v3083 = vsub.s32 5, %v3082
    %v3084 = vrot.slane %v3059, %v3083
    %v3085 = vlaneseq
    %v3086 = vshrl.u32 %v3085, 7
    %v3087 = vsub.s32 6, %v3086
    %v3088 = vrot.slane %v3059, %v3087
    %v3089 = vlaneseq
    %v3090 = vshrl.u32 %v3089, 7
    %v3091 = vsub.s32 7, %v3090
    %v3092 = vrot.slane %v3059, %v3091
    %v3357 = vunpack.c.l.b16 %v2803
    %v3358 = vunpack.c.h.b16 %v2803
    %v3359 = vunpack.c.l.b16 %v2804
    %v3360 = vunpack.c.h.b16 %v2804
    %v3361 = vunpack.c.l.b16 %v2805
    %v3362 = vunpack.c.h.b16 %v2805
    %v3363 = vunpack.c.l.b16 %v2806
    %v3364 = vunpack.c.h.b16 %v2806
    %v3365 = vunpack.c.l.b16 %v2807
    %v3366 = vunpack.c.h.b16 %v2807
    %v3367 = vunpack.c.l.b16 %v2808
    %v3368 = vunpack.c.h.b16 %v2808
    %v3369 = vunpack.c.l.b16 %v2809
    %v3370 = vunpack.c.h.b16 %v2809
    %v3371 = vunpack.c.l.b16 %v2810
    %v3372 = vunpack.c.h.b16 %v2810
    %v3373 = vunpack.c.l.b16 %v2811
    %v3374 = vunpack.c.h.b16 %v2811
    %v3375 = vunpack.c.l.b16 %v2812
    %v3376 = vunpack.c.h.b16 %v2812
    %v3377 = vunpack.c.l.b16 %v2813
    %v3378 = vunpack.c.h.b16 %v2813
    %v3379 = vunpack.c.l.b16 %v2814
    %v3380 = vunpack.c.h.b16 %v2814
    %v3381 = vunpack.c.l.b16 %v2815
    %v3382 = vunpack.c.h.b16 %v2815
    %v3383 = vunpack.c.l.b16 %v2816
    %v3384 = vunpack.c.h.b16 %v2816
    %v3385 = vunpack.c.l.b16 %v2817
    %v3386 = vunpack.c.h.b16 %v2817
    %v3387 = vunpack.c.l.b16 %v2818
    %v3388 = vunpack.c.h.b16 %v2818
    %v3389 = vunpack.c.l.b16 %v2819
    %v3390 = vunpack.c.h.b16 %v2819
    %v3391 = vunpack.c.l.b16 %v2820
    %v3392 = vunpack.c.h.b16 %v2820
    %v3393 = vunpack.c.l.b16 %v2821
    %v3394 = vunpack.c.h.b16 %v2821
    %v3395 = vunpack.c.l.b16 %v2822
    %v3396 = vunpack.c.h.b16 %v2822
    %v3397 = vunpack.c.l.b16 %v2823
    %v3398 = vunpack.c.h.b16 %v2823
    %v3399 = vunpack.c.l.b16 %v2824
    %v3400 = vunpack.c.h.b16 %v2824
    %v3401 = vunpack.c.l.b16 %v2825
    %v3402 = vunpack.c.h.b16 %v2825
    %v3403 = vunpack.c.l.b16 %v2826
    %v3404 = vunpack.c.h.b16 %v2826
    %v3405 = vunpack.c.l.b16 %v2827
    %v3406 = vunpack.c.h.b16 %v2827
    %v3407 = vunpack.c.l.b16 %v2828
    %v3408 = vunpack.c.h.b16 %v2828
    %v3409 = vunpack.c.l.b16 %v2829
    %v3410 = vunpack.c.h.b16 %v2829
    %v3411 = vunpack.c.l.b16 %v2830
    %v3412 = vunpack.c.h.b16 %v2830
    %v3413 = vunpack.c.l.b16 %v2831
    %v3414 = vunpack.c.h.b16 %v2831
    %v3415 = vunpack.c.l.b16 %v2832
    %v3416 = vunpack.c.h.b16 %v2832
    %v3417 = vunpack.c.l.b16 %v2833
    %v3418 = vunpack.c.h.b16 %v2833
    %v3419 = vunpack.c.l.b16 %v2834
    %v3420 = vunpack.c.h.b16 %v2834
    %v3421 = vunpack.c.l.b16 %v2835
    %v3422 = vunpack.c.h.b16 %v2835
    %v3423 = vunpack.c.l.b16 %v2836
    %v3424 = vunpack.c.h.b16 %v2836
    %v3425 = vunpack.c.l.b16 %v2837
    %v3426 = vunpack.c.h.b16 %v2837
    %v3427 = vunpack.c.l.b16 %v2838
    %v3428 = vunpack.c.h.b16 %v2838
    %v3429 = vunpack.c.l.b16 %v2839
    %v3430 = vunpack.c.h.b16 %v2839
    %v3431 = vunpack.c.l.b16 %v2840
    %v3432 = vunpack.c.h.b16 %v2840
    %v3433 = vunpack.c.l.b16 %v2841
    %v3434 = vunpack.c.h.b16 %v2841
    %v3435 = vunpack.c.l.b16 %v2842
    %v3436 = vunpack.c.h.b16 %v2842
    %v3437 = vunpack.c.l.b16 %v2843
    %v3438 = vunpack.c.h.b16 %v2843
    %v3439 = vunpack.c.l.b16 %v2844
    %v3440 = vunpack.c.h.b16 %v2844
    %v3441 = vunpack.c.l.b16 %v2845
    %v3442 = vunpack.c.h.b16 %v2845
    %v3443 = vunpack.c.l.b16 %v2846
    %v3444 = vunpack.c.h.b16 %v2846
    %v3445 = vunpack.c.l.b16 %v2847
    %v3446 = vunpack.c.h.b16 %v2847
    %v3447 = vunpack.c.l.b16 %v2848
    %v3448 = vunpack.c.h.b16 %v2848
    %v3449 = vunpack.c.l.b16 %v2849
    %v3450 = vunpack.c.h.b16 %v2849
    %v3451 = vunpack.c.l.b16 %v2850
    %v3452 = vunpack.c.h.b16 %v2850
    %v3453 = vunpack.c.l.b16 %v2851
    %v3454 = vunpack.c.h.b16 %v2851
    %v3455 = vunpack.c.l.b16 %v2852
    %v3456 = vunpack.c.h.b16 %v2852
    %v3457 = vunpack.c.l.b16 %v2853
    %v3458 = vunpack.c.h.b16 %v2853
    %v3459 = vunpack.c.l.b16 %v2854
    %v3460 = vunpack.c.h.b16 %v2854
    %v3461 = vunpack.c.l.b16 %v2855
    %v3462 = vunpack.c.h.b16 %v2855
    %v3463 = vunpack.c.l.b16 %v2856
    %v3464 = vunpack.c.h.b16 %v2856
    %v3465 = vunpack.c.l.b16 %v2857
    %v3466 = vunpack.c.h.b16 %v2857
    %v3467 = vunpack.c.l.b16 %v2858
    %v3468 = vunpack.c.h.b16 %v2858
    %v3469 = vunpack.c.l.b16 %v2859
    %v3470 = vunpack.c.h.b16 %v2859
    %v3471 = vunpack.c.l.b16 %v2860
    %v3472 = vunpack.c.h.b16 %v2860
    %v3473 = vunpack.c.l.b16 %v2861
    %v3474 = vunpack.c.h.b16 %v2861
    %v3475 = vunpack.c.l.b16 %v2862
    %v3476 = vunpack.c.h.b16 %v2862
    %v3477 = vunpack.c.l.b16 %v2863
    %v3478 = vunpack.c.h.b16 %v2863
    %v3479 = vunpack.c.l.b16 %v2864
    %v3480 = vunpack.c.h.b16 %v2864
    %v3481 = vunpack.c.l.b16 %v2865
    %v3482 = vunpack.c.h.b16 %v2865
    %v3483 = vunpack.c.l.b16 %v2866
    %v3484 = vunpack.c.h.b16 %v2866
    %v3485 = vunpack.c.l.b16 %v2867
    %v3486 = vunpack.c.h.b16 %v2867
    %v3487 = vunpack.c.l.b16 %v2868
    %v3488 = vunpack.c.h.b16 %v2868
    %v3489 = vunpack.c.l.b16 %v2869
    %v3490 = vunpack.c.h.b16 %v2869
    %v3491 = vunpack.c.l.b16 %v2870
    %v3492 = vunpack.c.h.b16 %v2870
    %v3493 = vunpack.c.l.b16 %v2871
    %v3494 = vunpack.c.h.b16 %v2871
    %v3495 = vunpack.c.l.b16 %v2872
    %v3496 = vunpack.c.h.b16 %v2872
    %v3497 = vunpack.c.l.b16 %v2873
    %v3498 = vunpack.c.h.b16 %v2873
    %v3499 = vunpack.c.l.b16 %v2874
    %v3500 = vunpack.c.h.b16 %v2874
    %v3501 = vunpack.c.l.b16 %v2875
    %v3502 = vunpack.c.h.b16 %v2875
    %v3503 = vunpack.c.l.b16 %v2876
    %v3504 = vunpack.c.h.b16 %v2876
    %v3505 = vunpack.c.l.b16 %v2877
    %v3506 = vunpack.c.h.b16 %v2877
    %v3507 = vunpack.c.l.b16 %v2878
    %v3508 = vunpack.c.h.b16 %v2878
    %v3509 = vunpack.c.l.b16 %v2879
    %v3510 = vunpack.c.h.b16 %v2879
    %v3511 = vunpack.c.l.b16 %v2880
    %v3512 = vunpack.c.h.b16 %v2880
    %v3513 = vunpack.c.l.b16 %v2881
    %v3514 = vunpack.c.h.b16 %v2881
    %v3515 = vunpack.c.l.b16 %v2882
    %v3516 = vunpack.c.h.b16 %v2882
    %v3517 = vunpack.c.l.b16 %v2883
    %v3518 = vunpack.c.h.b16 %v2883
    %v3519 = vunpack.c.l.b16 %v2884
    %v3520 = vunpack.c.h.b16 %v2884
    %v3521 = vunpack.c.l.b16 %v2885
    %v3522 = vunpack.c.h.b16 %v2885
    %v3523 = vunpack.c.l.b16 %v2886
    %v3524 = vunpack.c.h.b16 %v2886
    %v3525 = vunpack.c.l.b16 %v2887
    %v3526 = vunpack.c.h.b16 %v2887
    %v3527 = vunpack.c.l.b16 %v2888
    %v3528 = vunpack.c.h.b16 %v2888
    %v3529 = vunpack.c.l.b16 %v2889
    %v3530 = vunpack.c.h.b16 %v2889
    %v3531 = vunpack.c.l.b16 %v2890
    %v3532 = vunpack.c.h.b16 %v2890
    %v3533 = vunpack.c.l.b16 %v2891
    %v3534 = vunpack.c.h.b16 %v2891
    %v3535 = vunpack.c.l.b16 %v2892
    %v3536 = vunpack.c.h.b16 %v2892
    %v3537 = vunpack.c.l.b16 %v2893
    %v3538 = vunpack.c.h.b16 %v2893
    %v3539 = vunpack.c.l.b16 %v2894
    %v3540 = vunpack.c.h.b16 %v2894
    %v3541 = vunpack.c.l.b16 %v2895
    %v3542 = vunpack.c.h.b16 %v2895
    %v3543 = vunpack.c.l.b16 %v2896
    %v3544 = vunpack.c.h.b16 %v2896
    %v3545 = vunpack.c.l.b16 %v2897
    %v3546 = vunpack.c.h.b16 %v2897
    %v3547 = vunpack.c.l.b16 %v2898
    %v3548 = vunpack.c.h.b16 %v2898
    %v3549 = vunpack.c.l.b16 %v2899
    %v3550 = vunpack.c.h.b16 %v2899
    %v3551 = vunpack.c.l.b16 %v2900
    %v3552 = vunpack.c.h.b16 %v2900
    %v3553 = vunpack.c.l.b16 %v2901
    %v3554 = vunpack.c.h.b16 %v2901
    %v3555 = vunpack.c.l.b16 %v2902
    %v3556 = vunpack.c.h.b16 %v2902
    %v3557 = vunpack.c.l.b16 %v2903
    %v3558 = vunpack.c.h.b16 %v2903
    %v3559 = vunpack.c.l.b16 %v2904
    %v3560 = vunpack.c.h.b16 %v2904
    %v3561 = vunpack.c.l.b16 %v2905
    %v3562 = vunpack.c.h.b16 %v2905
    %v3563 = vunpack.c.l.b16 %v2906
    %v3564 = vunpack.c.h.b16 %v2906
    %v3565 = vunpack.c.l.b16 %v2907
    %v3566 = vunpack.c.h.b16 %v2907
    %v3567 = vunpack.c.l.b16 %v2908
    %v3568 = vunpack.c.h.b16 %v2908
    %v3569 = vunpack.c.l.b16 %v2909
    %v3570 = vunpack.c.h.b16 %v2909
    %v3571 = vunpack.c.l.b16 %v2910
    %v3572 = vunpack.c.h.b16 %v2910
    %v3573 = vunpack.c.l.b16 %v2911
    %v3574 = vunpack.c.h.b16 %v2911
    %v3575 = vunpack.c.l.b16 %v2912
    %v3576 = vunpack.c.h.b16 %v2912
    %v3577 = vunpack.c.l.b16 %v2913
    %v3578 = vunpack.c.h.b16 %v2913
    %v3579 = vunpack.c.l.b16 %v2914
    %v3580 = vunpack.c.h.b16 %v2914
    %v3581 = vunpack.c.l.b16 %v2915
    %v3582 = vunpack.c.h.b16 %v2915
    %v3583 = vunpack.c.l.b16 %v2916
    %v3584 = vunpack.c.h.b16 %v2916
    %v3585 = vunpack.c.l.b16 %v2917
    %v3586 = vunpack.c.h.b16 %v2917
    %v3587 = vunpack.c.l.b16 %v2918
    %v3588 = vunpack.c.h.b16 %v2918
    %v3589 = vunpack.c.l.b16 %v2919
    %v3590 = vunpack.c.h.b16 %v2919
    %v3591 = vunpack.c.l.b16 %v2920
    %v3592 = vunpack.c.h.b16 %v2920
    %v3593 = vunpack.c.l.b16 %v2921
    %v3594 = vunpack.c.h.b16 %v2921
    %v3595 = vunpack.c.l.b16 %v2922
    %v3596 = vunpack.c.h.b16 %v2922
    %v3597 = vunpack.c.l.b16 %v2923
    %v3598 = vunpack.c.h.b16 %v2923
    %v3599 = vunpack.c.l.b16 %v2924
    %v3600 = vunpack.c.h.b16 %v2924
    %v3601 = vunpack.c.l.b16 %v2925
    %v3602 = vunpack.c.h.b16 %v2925
    %v3603 = vunpack.c.l.b16 %v2926
    %v3604 = vunpack.c.h.b16 %v2926
    %v3605 = vunpack.c.l.b16 %v2927
    %v3606 = vunpack.c.h.b16 %v2927
    %v3607 = vunpack.c.l.b16 %v2928
    %v3608 = vunpack.c.h.b16 %v2928
    %v3609 = vunpack.c.l.b16 %v2929
    %v3610 = vunpack.c.h.b16 %v2929
    %v3611 = vunpack.c.l.b16 %v2930
    %v3612 = vunpack.c.h.b16 %v2930
    %v3613 = vunpack.c.l.b16 %v2931
    %v3614 = vunpack.c.h.b16 %v2931
    %v3615 = vunpack.c.l.b16 %v2932
    %v3616 = vunpack.c.h.b16 %v2932
    %v3617 = vunpack.c.l.b16 %v2933
    %v3618 = vunpack.c.h.b16 %v2933
    %v3619 = vunpack.c.l.b16 %v2934
    %v3620 = vunpack.c.h.b16 %v2934
    %v3621 = vunpack.c.l.b16 %v2935
    %v3622 = vunpack.c.h.b16 %v2935
    %v3623 = vunpack.c.l.b16 %v2936
    %v3624 = vunpack.c.h.b16 %v2936
    %v3625 = vunpack.c.l.b16 %v2937
    %v3626 = vunpack.c.h.b16 %v2937
    %v3627 = vunpack.c.l.b16 %v2938
    %v3628 = vunpack.c.h.b16 %v2938
    %v3629 = vunpack.c.l.b16 %v2939
    %v3630 = vunpack.c.h.b16 %v2939
    %v3631 = vunpack.c.l.b16 %v2940
    %v3632 = vunpack.c.h.b16 %v2940
    %v3633 = vunpack.c.l.b16 %v2941
    %v3634 = vunpack.c.h.b16 %v2941
    %v3635 = vunpack.c.l.b16 %v2942
    %v3636 = vunpack.c.h.b16 %v2942
    %v3637 = vunpack.c.l.b16 %v2943
    %v3638 = vunpack.c.h.b16 %v2943
    %v3639 = vunpack.c.l.b16 %v2944
    %v3640 = vunpack.c.h.b16 %v2944
    %v3641 = vunpack.c.l.b16 %v2945
    %v3642 = vunpack.c.h.b16 %v2945
    %v3643 = vunpack.c.l.b16 %v2946
    %v3644 = vunpack.c.h.b16 %v2946
    %v3645 = vunpack.c.l.b16 %v2947
    %v3646 = vunpack.c.h.b16 %v2947
    %v3647 = vunpack.c.l.b16 %v2948
    %v3648 = vunpack.c.h.b16 %v2948
    %v3649 = vunpack.c.l.b16 %v2949
    %v3650 = vunpack.c.h.b16 %v2949
    %v3651 = vunpack.c.l.b16 %v2950
    %v3652 = vunpack.c.h.b16 %v2950
    %v3653 = vunpack.c.l.b16 %v2951
    %v3654 = vunpack.c.h.b16 %v2951
    %v3655 = vunpack.c.l.b16 %v2952
    %v3656 = vunpack.c.h.b16 %v2952
    %v3657 = vunpack.c.l.b16 %v2953
    %v3658 = vunpack.c.h.b16 %v2953
    %v3659 = vunpack.c.l.b16 %v2954
    %v3660 = vunpack.c.h.b16 %v2954
    %v3661 = vunpack.c.l.b16 %v2955
    %v3662 = vunpack.c.h.b16 %v2955
    %v3663 = vunpack.c.l.b16 %v2956
    %v3664 = vunpack.c.h.b16 %v2956
    %v3665 = vunpack.c.l.b16 %v2957
    %v3666 = vunpack.c.h.b16 %v2957
    %v3667 = vunpack.c.l.b16 %v2958
    %v3668 = vunpack.c.h.b16 %v2958
    %v3669 = vunpack.c.l.b16 %v2959
    %v3670 = vunpack.c.h.b16 %v2959
    %v3671 = vunpack.c.l.b16 %v2960
    %v3672 = vunpack.c.h.b16 %v2960
    %v3673 = vunpack.c.l.b16 %v2961
    %v3674 = vunpack.c.h.b16 %v2961
    %v3675 = vunpack.c.l.b16 %v2962
    %v3676 = vunpack.c.h.b16 %v2962
    %v3677 = vunpack.c.l.b16 %v2963
    %v3678 = vunpack.c.h.b16 %v2963
    %v3679 = vunpack.c.l.b16 %v2964
    %v3680 = vunpack.c.h.b16 %v2964
    %v3681 = vunpack.c.l.b16 %v2965
    %v3682 = vunpack.c.h.b16 %v2965
    %v3683 = vunpack.c.l.b16 %v2966
    %v3684 = vunpack.c.h.b16 %v2966
    %v3685 = vunpack.c.l.b16 %v2967
    %v3686 = vunpack.c.h.b16 %v2967
    %v3687 = vunpack.c.l.b16 %v2968
    %v3688 = vunpack.c.h.b16 %v2968
    %v3689 = vunpack.c.l.b16 %v2969
    %v3690 = vunpack.c.h.b16 %v2969
    %v3691 = vunpack.c.l.b16 %v2970
    %v3692 = vunpack.c.h.b16 %v2970
    %v3693 = vunpack.c.l.b16 %v2971
    %v3694 = vunpack.c.h.b16 %v2971
    %v3695 = vunpack.c.l.b16 %v2972
    %v3696 = vunpack.c.h.b16 %v2972
    %v3697 = vunpack.c.l.b16 %v2973
    %v3698 = vunpack.c.h.b16 %v2973
    %v3699 = vunpack.c.l.b16 %v2974
    %v3700 = vunpack.c.h.b16 %v2974
    %v3701 = vunpack.c.l.b16 %v2975
    %v3702 = vunpack.c.h.b16 %v2975
    %v3703 = vunpack.c.l.b16 %v2976
    %v3704 = vunpack.c.h.b16 %v2976
    %v3705 = vunpack.c.l.b16 %v2977
    %v3706 = vunpack.c.h.b16 %v2977
    %v3707 = vunpack.c.l.b16 %v2978
    %v3708 = vunpack.c.h.b16 %v2978
    %v3709 = vunpack.c.l.b16 %v2979
    %v3710 = vunpack.c.h.b16 %v2979
    %v3711 = vunpack.c.l.b16 %v2980
    %v3712 = vunpack.c.h.b16 %v2980
    %v3713 = vunpack.c.l.b16 %v2981
    %v3714 = vunpack.c.h.b16 %v2981
    %v3715 = vunpack.c.l.b16 %v2982
    %v3716 = vunpack.c.h.b16 %v2982
    %v3717 = vunpack.c.l.b16 %v2983
    %v3718 = vunpack.c.h.b16 %v2983
    %v3719 = vunpack.c.l.b16 %v2984
    %v3720 = vunpack.c.h.b16 %v2984
    %v3721 = vunpack.c.l.b16 %v2985
    %v3722 = vunpack.c.h.b16 %v2985
    %v3723 = vunpack.c.l.b16 %v2986
    %v3724 = vunpack.c.h.b16 %v2986
    %v3725 = vunpack.c.l.b16 %v2987
    %v3726 = vunpack.c.h.b16 %v2987
    %v3727 = vunpack.c.l.b16 %v2988
    %v3728 = vunpack.c.h.b16 %v2988
    %v3729 = vunpack.c.l.b16 %v2989
    %v3730 = vunpack.c.h.b16 %v2989
    %v3731 = vunpack.c.l.b16 %v2990
    %v3732 = vunpack.c.h.b16 %v2990
    %v3733 = vunpack.c.l.b16 %v2991
    %v3734 = vunpack.c.h.b16 %v2991
    %v3735 = vunpack.c.l.b16 %v2992
    %v3736 = vunpack.c.h.b16 %v2992
    %v3737 = vunpack.c.l.b16 %v2993
    %v3738 = vunpack.c.h.b16 %v2993
    %v3739 = vunpack.c.l.b16 %v2994
    %v3740 = vunpack.c.h.b16 %v2994
    %v3741 = vunpack.c.l.b16 %v2995
    %v3742 = vunpack.c.h.b16 %v2995
    %v3743 = vunpack.c.l.b16 %v2996
    %v3744 = vunpack.c.h.b16 %v2996
    %v3745 = vunpack.c.l.b16 %v2997
    %v3746 = vunpack.c.h.b16 %v2997
    %v3747 = vunpack.c.l.b16 %v2998
    %v3748 = vunpack.c.h.b16 %v2998
    %v3749 = vunpack.c.l.b16 %v2999
    %v3750 = vunpack.c.h.b16 %v2999
    %v3751 = vunpack.c.l.b16 %v3000
    %v3752 = vunpack.c.h.b16 %v3000
    %v3753 = vunpack.c.l.b16 %v3001
    %v3754 = vunpack.c.h.b16 %v3001
    %v3755 = vunpack.c.l.b16 %v3002
    %v3756 = vunpack.c.h.b16 %v3002
    %v3757 = vunpack.c.l.b16 %v3003
    %v3758 = vunpack.c.h.b16 %v3003
    %v3759 = vunpack.c.l.b16 %v3004
    %v3760 = vunpack.c.h.b16 %v3004
    %v3761 = vunpack.c.l.b16 %v3005
    %v3762 = vunpack.c.h.b16 %v3005
    %v3763 = vunpack.c.l.b16 %v3006
    %v3764 = vunpack.c.h.b16 %v3006
    %v3765 = vunpack.c.l.b16 %v3007
    %v3766 = vunpack.c.h.b16 %v3007
    %v3767 = vunpack.c.l.b16 %v3008
    %v3768 = vunpack.c.h.b16 %v3008
    %v3769 = vunpack.c.l.b16 %v3009
    %v3770 = vunpack.c.h.b16 %v3009
    %v3771 = vunpack.c.l.b16 %v3010
    %v3772 = vunpack.c.h.b16 %v3010
    %v3773 = vunpack.c.l.b16 %v3011
    %v3774 = vunpack.c.h.b16 %v3011
    %v3775 = vunpack.c.l.b16 %v3012
    %v3776 = vunpack.c.h.b16 %v3012
    %v3777 = vunpack.c.l.b16 %v3013
    %v3778 = vunpack.c.h.b16 %v3013
    %v3779 = vunpack.c.l.b16 %v3014
    %v3780 = vunpack.c.h.b16 %v3014
    %v3781 = vunpack.c.l.b16 %v3015
    %v3782 = vunpack.c.h.b16 %v3015
    %v3783 = vunpack.c.l.b16 %v3016
    %v3784 = vunpack.c.h.b16 %v3016
    %v3785 = vunpack.c.l.b16 %v3017
    %v3786 = vunpack.c.h.b16 %v3017
    %v3787 = vunpack.c.l.b16 %v3018
    %v3788 = vunpack.c.h.b16 %v3018
    %v3789 = vunpack.c.l.b16 %v3019
    %v3790 = vunpack.c.h.b16 %v3019
    %v3791 = vunpack.c.l.b16 %v3020
    %v3792 = vunpack.c.h.b16 %v3020
    %v3793 = vunpack.c.l.b16 %v3021
    %v3794 = vunpack.c.h.b16 %v3021
    %v3795 = vunpack.c.l.b16 %v3022
    %v3796 = vunpack.c.h.b16 %v3022
    %v3797 = vunpack.c.l.b16 %v3023
    %v3798 = vunpack.c.h.b16 %v3023
    %v3799 = vunpack.c.l.b16 %v3024
    %v3800 = vunpack.c.h.b16 %v3024
    %v3801 = vunpack.c.l.b16 %v3025
    %v3802 = vunpack.c.h.b16 %v3025
    %v3803 = vunpack.c.l.b16 %v3026
    %v3804 = vunpack.c.h.b16 %v3026
    %v3805 = vunpack.c.l.b16 %v3027
    %v3806 = vunpack.c.h.b16 %v3027
    %v3807 = vunpack.c.l.b16 %v3028
    %v3808 = vunpack.c.h.b16 %v3028
    %v3809 = vunpack.c.l.b16 %v3029
    %v3810 = vunpack.c.h.b16 %v3029
    %v3811 = vunpack.c.l.b16 %v3030
    %v3812 = vunpack.c.h.b16 %v3030
    %v3813 = vunpack.c.l.b16 %v3031
    %v3814 = vunpack.c.h.b16 %v3031
    %v3815 = vunpack.c.l.b16 %v3032
    %v3816 = vunpack.c.h.b16 %v3032
    %v3817 = vunpack.c.l.b16 %v3033
    %v3818 = vunpack.c.h.b16 %v3033
    %v3819 = vunpack.c.l.b16 %v3034
    %v3820 = vunpack.c.h.b16 %v3034
    %v3821 = vunpack.c.l.b16 %v3035
    %v3822 = vunpack.c.h.b16 %v3035
    %v3823 = vunpack.c.l.b16 %v3036
    %v3824 = vunpack.c.h.b16 %v3036
    %v3825 = vunpack.c.l.b16 %v3037
    %v3826 = vunpack.c.h.b16 %v3037
    %v3827 = vunpack.c.l.b16 %v3038
    %v3828 = vunpack.c.h.b16 %v3038
    %v3829 = vunpack.c.l.b16 %v3039
    %v3830 = vunpack.c.h.b16 %v3039
    %v3831 = vunpack.c.l.b16 %v3040
    %v3832 = vunpack.c.h.b16 %v3040
    %v3833 = vunpack.c.l.b16 %v3041
    %v3834 = vunpack.c.h.b16 %v3041
    %v3835 = vunpack.c.l.b16 %v3042
    %v3836 = vunpack.c.h.b16 %v3042
    %v3837 = vunpack.c.l.b16 %v3043
    %v3838 = vunpack.c.h.b16 %v3043
    %v3839 = vunpack.c.l.b16 %v3044
    %v3840 = vunpack.c.h.b16 %v3044
    %v3841 = vunpack.c.l.b16 %v3045
    %v3842 = vunpack.c.h.b16 %v3045
    %v3843 = vunpack.c.l.b16 %v3046
    %v3844 = vunpack.c.h.b16 %v3046
    %v3845 = vunpack.c.l.b16 %v3047
    %v3846 = vunpack.c.h.b16 %v3047
    %v3847 = vunpack.c.l.b16 %v3048
    %v3848 = vunpack.c.h.b16 %v3048
    %v3849 = vunpack.c.l.b16 %v3049
    %v3850 = vunpack.c.h.b16 %v3049
    %v3851 = vunpack.c.l.b16 %v3050
    %v3852 = vunpack.c.h.b16 %v3050
    %v3853 = vunpack.c.l.b16 %v3051
    %v3854 = vunpack.c.h.b16 %v3051
    %v3855 = vunpack.c.l.b16 %v3052
    %v3856 = vunpack.c.h.b16 %v3052
    %v3857 = vunpack.c.l.b16 %v3053
    %v3858 = vunpack.c.h.b16 %v3053
    %v3859 = vunpack.c.l.b16 %v3054
    %v3860 = vunpack.c.h.b16 %v3054
    %v3861 = vunpack.c.l.b16 %v3055
    %v3862 = vunpack.c.h.b16 %v3055
    %v3863 = vunpack.c.l.b16 %v3056
    %v3864 = vunpack.c.h.b16 %v3056
    %v3865 = vunpack.c.l.b16 %v3057
    %v3866 = vunpack.c.h.b16 %v3057
    %v3867 = vunpack.c.l.b16 %v3058
    %v3868 = vunpack.c.h.b16 %v3058
    %v3869 = vpack.c.b16 %v3365, %v3357
    %v3870 = vpack.c.b16 %v3366, %v3358
    %v3871 = vpack.c.b16 %v3367, %v3359
    %v3872 = vpack.c.b16 %v3368, %v3360
    %v3873 = vpack.c.b16 %v3369, %v3361
    %v3874 = vpack.c.b16 %v3370, %v3362
    %v3875 = vpack.c.b16 %v3371, %v3363
    %v3876 = vpack.c.b16 %v3372, %v3364
    %v3877 = vpack.c.b16 %v3381, %v3373
    %v3878 = vpack.c.b16 %v3382, %v3374
    %v3879 = vpack.c.b16 %v3383, %v3375
    %v3880 = vpack.c.b16 %v3384, %v3376
    %v3881 = vpack.c.b16 %v3385, %v3377
    %v3882 = vpack.c.b16 %v3386, %v3378
    %v3883 = vpack.c.b16 %v3387, %v3379
    %v3884 = vpack.c.b16 %v3388, %v3380
    %v3885 = vpack.c.b16 %v3397, %v3389
    %v3886 = vpack.c.b16 %v3398, %v3390
    %v3887 = vpack.c.b16 %v3399, %v3391
    %v3888 = vpack.c.b16 %v3400, %v3392
    %v3889 = vpack.c.b16 %v3401, %v3393
    %v3890 = vpack.c.b16 %v3402, %v3394
    %v3891 = vpack.c.b16 %v3403, %v3395
    %v3892 = vpack.c.b16 %v3404, %v3396
    %v3893 = vpack.c.b16 %v3413, %v3405
    %v3894 = vpack.c.b16 %v3414, %v3406
    %v3895 = vpack.c.b16 %v3415, %v3407
    %v3896 = vpack.c.b16 %v3416, %v3408
    %v3897 = vpack.c.b16 %v3417, %v3409
    %v3898 = vpack.c.b16 %v3418, %v3410
    %v3899 = vpack.c.b16 %v3419, %v3411
    %v3900 = vpack.c.b16 %v3420, %v3412
    %v3901 = vpack.c.b16 %v3429, %v3421
    %v3902 = vpack.c.b16 %v3430, %v3422
    %v3903 = vpack.c.b16 %v3431, %v3423
    %v3904 = vpack.c.b16 %v3432, %v3424
    %v3905 = vpack.c.b16 %v3433, %v3425
    %v3906 = vpack.c.b16 %v3434, %v3426
    %v3907 = vpack.c.b16 %v3435, %v3427
    %v3908 = vpack.c.b16 %v3436, %v3428
    %v3909 = vpack.c.b16 %v3445, %v3437
    %v3910 = vpack.c.b16 %v3446, %v3438
    %v3911 = vpack.c.b16 %v3447, %v3439
    %v3912 = vpack.c.b16 %v3448, %v3440
    %v3913 = vpack.c.b16 %v3449, %v3441
    %v3914 = vpack.c.b16 %v3450, %v3442
    %v3915 = vpack.c.b16 %v3451, %v3443
    %v3916 = vpack.c.b16 %v3452, %v3444
    %v3917 = vpack.c.b16 %v3461, %v3453
    %v3918 = vpack.c.b16 %v3462, %v3454
    %v3919 = vpack.c.b16 %v3463, %v3455
    %v3920 = vpack.c.b16 %v3464, %v3456
    %v3921 = vpack.c.b16 %v3465, %v3457
    %v3922 = vpack.c.b16 %v3466, %v3458
    %v3923 = vpack.c.b16 %v3467, %v3459
    %v3924 = vpack.c.b16 %v3468, %v3460
    %v3925 = vpack.c.b16 %v3477, %v3469
    %v3926 = vpack.c.b16 %v3478, %v3470
    %v3927 = vpack.c.b16 %v3479, %v3471
    %v3928 = vpack.c.b16 %v3480, %v3472
    %v3929 = vpack.c.b16 %v3481, %v3473
    %v3930 = vpack.c.b16 %v3482, %v3474
    %v3931 = vpack.c.b16 %v3483, %v3475
    %v3932 = vpack.c.b16 %v3484, %v3476
    %v3933 = vpack.c.b16 %v3493, %v3485
    %v3934 = vpack.c.b16 %v3494, %v3486
    %v3935 = vpack.c.b16 %v3495, %v3487
    %v3936 = vpack.c.b16 %v3496, %v3488
    %v3937 = vpack.c.b16 %v3497, %v3489
    %v3938 = vpack.c.b16 %v3498, %v3490
    %v3939 = vpack.c.b16 %v3499, %v3491
    %v3940 = vpack.c.b16 %v3500, %v3492
    %v3941 = vpack.c.b16 %v3509, %v3501
    %v3942 = vpack.c.b16 %v3510, %v3502
    %v3943 = vpack.c.b16 %v3511, %v3503
    %v3944 = vpack.c.b16 %v3512, %v3504
    %v3945 = vpack.c.b16 %v3513, %v3505
    %v3946 = vpack.c.b16 %v3514, %v3506
    %v3947 = vpack.c.b16 %v3515, %v3507
    %v3948 = vpack.c.b16 %v3516, %v3508
    %v3949 = vpack.c.b16 %v3525, %v3517
    %v3950 = vpack.c.b16 %v3526, %v3518
    %v3951 = vpack.c.b16 %v3527, %v3519
    %v3952 = vpack.c.b16 %v3528, %v3520
    %v3953 = vpack.c.b16 %v3529, %v3521
    %v3954 = vpack.c.b16 %v3530, %v3522
    %v3955 = vpack.c.b16 %v3531, %v3523
    %v3956 = vpack.c.b16 %v3532, %v3524
    %v3957 = vpack.c.b16 %v3541, %v3533
    %v3958 = vpack.c.b16 %v3542, %v3534
    %v3959 = vpack.c.b16 %v3543, %v3535
    %v3960 = vpack.c.b16 %v3544, %v3536
    %v3961 = vpack.c.b16 %v3545, %v3537
    %v3962 = vpack.c.b16 %v3546, %v3538
    %v3963 = vpack.c.b16 %v3547, %v3539
    %v3964 = vpack.c.b16 %v3548, %v3540
    %v3965 = vpack.c.b16 %v3557, %v3549
    %v3966 = vpack.c.b16 %v3558, %v3550
    %v3967 = vpack.c.b16 %v3559, %v3551
    %v3968 = vpack.c.b16 %v3560, %v3552
    %v3969 = vpack.c.b16 %v3561, %v3553
    %v3970 = vpack.c.b16 %v3562, %v3554
    %v3971 = vpack.c.b16 %v3563, %v3555
    %v3972 = vpack.c.b16 %v3564, %v3556
    %v3973 = vpack.c.b16 %v3573, %v3565
    %v3974 = vpack.c.b16 %v3574, %v3566
    %v3975 = vpack.c.b16 %v3575, %v3567
    %v3976 = vpack.c.b16 %v3576, %v3568
    %v3977 = vpack.c.b16 %v3577, %v3569
    %v3978 = vpack.c.b16 %v3578, %v3570
    %v3979 = vpack.c.b16 %v3579, %v3571
    %v3980 = vpack.c.b16 %v3580, %v3572
    %v3981 = vpack.c.b16 %v3589, %v3581
    %v3982 = vpack.c.b16 %v3590, %v3582
    %v3983 = vpack.c.b16 %v3591, %v3583
    %v3984 = vpack.c.b16 %v3592, %v3584
    %v3985 = vpack.c.b16 %v3593, %v3585
    %v3986 = vpack.c.b16 %v3594, %v3586
    %v3987 = vpack.c.b16 %v3595, %v3587
    %v3988 = vpack.c.b16 %v3596, %v3588
    %v3989 = vpack.c.b16 %v3605, %v3597
    %v3990 = vpack.c.b16 %v3606, %v3598
    %v3991 = vpack.c.b16 %v3607, %v3599
    %v3992 = vpack.c.b16 %v3608, %v3600
    %v3993 = vpack.c.b16 %v3609, %v3601
    %v3994 = vpack.c.b16 %v3610, %v3602
    %v3995 = vpack.c.b16 %v3611, %v3603
    %v3996 = vpack.c.b16 %v3612, %v3604
    %v3997 = vpack.c.b16 %v3621, %v3613
    %v3998 = vpack.c.b16 %v3622, %v3614
    %v3999 = vpack.c.b16 %v3623, %v3615
    %v4000 = vpack.c.b16 %v3624, %v3616
    %v4001 = vpack.c.b16 %v3625, %v3617
    %v4002 = vpack.c.b16 %v3626, %v3618
    %v4003 = vpack.c.b16 %v3627, %v3619
    %v4004 = vpack.c.b16 %v3628, %v3620
    %v4005 = vpack.c.b16 %v3637, %v3629
    %v4006 = vpack.c.b16 %v3638, %v3630
    %v4007 = vpack.c.b16 %v3639, %v3631
    %v4008 = vpack.c.b16 %v3640, %v3632
    %v4009 = vpack.c.b16 %v3641, %v3633
    %v4010 = vpack.c.b16 %v3642, %v3634
    %v4011 = vpack.c.b16 %v3643, %v3635
    %v4012 = vpack.c.b16 %v3644, %v3636
    %v4013 = vpack.c.b16 %v3653, %v3645
    %v4014 = vpack.c.b16 %v3654, %v3646
    %v4015 = vpack.c.b16 %v3655, %v3647
    %v4016 = vpack.c.b16 %v3656, %v3648
    %v4017 = vpack.c.b16 %v3657, %v3649
    %v4018 = vpack.c.b16 %v3658, %v3650
    %v4019 = vpack.c.b16 %v3659, %v3651
    %v4020 = vpack.c.b16 %v3660, %v3652
    %v4021 = vpack.c.b16 %v3669, %v3661
    %v4022 = vpack.c.b16 %v3670, %v3662
    %v4023 = vpack.c.b16 %v3671, %v3663
    %v4024 = vpack.c.b16 %v3672, %v3664
    %v4025 = vpack.c.b16 %v3673, %v3665
    %v4026 = vpack.c.b16 %v3674, %v3666
    %v4027 = vpack.c.b16 %v3675, %v3667
    %v4028 = vpack.c.b16 %v3676, %v3668
    %v4029 = vpack.c.b16 %v3685, %v3677
    %v4030 = vpack.c.b16 %v3686, %v3678
    %v4031 = vpack.c.b16 %v3687, %v3679
    %v4032 = vpack.c.b16 %v3688, %v3680
    %v4033 = vpack.c.b16 %v3689, %v3681
    %v4034 = vpack.c.b16 %v3690, %v3682
    %v4035 = vpack.c.b16 %v3691, %v3683
    %v4036 = vpack.c.b16 %v3692, %v3684
    %v4037 = vpack.c.b16 %v3701, %v3693
    %v4038 = vpack.c.b16 %v3702, %v3694
    %v4039 = vpack.c.b16 %v3703, %v3695
    %v4040 = vpack.c.b16 %v3704, %v3696
    %v4041 = vpack.c.b16 %v3705, %v3697
    %v4042 = vpack.c.b16 %v3706, %v3698
    %v4043 = vpack.c.b16 %v3707, %v3699
    %v4044 = vpack.c.b16 %v3708, %v3700
    %v4045 = vpack.c.b16 %v3717, %v3709
    %v4046 = vpack.c.b16 %v3718, %v3710
    %v4047 = vpack.c.b16 %v3719, %v3711
    %v4048 = vpack.c.b16 %v3720, %v3712
    %v4049 = vpack.c.b16 %v3721, %v3713
    %v4050 = vpack.c.b16 %v3722, %v3714
    %v4051 = vpack.c.b16 %v3723, %v3715
    %v4052 = vpack.c.b16 %v3724, %v3716
    %v4053 = vpack.c.b16 %v3733, %v3725
    %v4054 = vpack.c.b16 %v3734, %v3726
    %v4055 = vpack.c.b16 %v3735, %v3727
    %v4056 = vpack.c.b16 %v3736, %v3728
    %v4057 = vpack.c.b16 %v3737, %v3729
    %v4058 = vpack.c.b16 %v3738, %v3730
    %v4059 = vpack.c.b16 %v3739, %v3731
    %v4060 = vpack.c.b16 %v3740, %v3732
    %v4061 = vpack.c.b16 %v3749, %v3741
    %v4062 = vpack.c.b16 %v3750, %v3742
    %v4063 = vpack.c.b16 %v3751, %v3743
    %v4064 = vpack.c.b16 %v3752, %v3744
    %v4065 = vpack.c.b16 %v3753, %v3745
    %v4066 = vpack.c.b16 %v3754, %v3746
    %v4067 = vpack.c.b16 %v3755, %v3747
    %v4068 = vpack.c.b16 %v3756, %v3748
    %v4069 = vpack.c.b16 %v3765, %v3757
    %v4070 = vpack.c.b16 %v3766, %v3758
    %v4071 = vpack.c.b16 %v3767, %v3759
    %v4072 = vpack.c.b16 %v3768, %v3760
    %v4073 = vpack.c.b16 %v3769, %v3761
    %v4074 = vpack.c.b16 %v3770, %v3762
    %v4075 = vpack.c.b16 %v3771, %v3763
    %v4076 = vpack.c.b16 %v3772, %v3764
    %v4077 = vpack.c.b16 %v3781, %v3773
    %v4078 = vpack.c.b16 %v3782, %v3774
    %v4079 = vpack.c.b16 %v3783, %v3775
    %v4080 = vpack.c.b16 %v3784, %v3776
    %v4081 = vpack.c.b16 %v3785, %v3777
    %v4082 = vpack.c.b16 %v3786, %v3778
    %v4083 = vpack.c.b16 %v3787, %v3779
    %v4084 = vpack.c.b16 %v3788, %v3780
    %v4085 = vpack.c.b16 %v3797, %v3789
    %v4086 = vpack.c.b16 %v3798, %v3790
    %v4087 = vpack.c.b16 %v3799, %v3791
    %v4088 = vpack.c.b16 %v3800, %v3792
    %v4089 = vpack.c.b16 %v3801, %v3793
    %v4090 = vpack.c.b16 %v3802, %v3794
    %v4091 = vpack.c.b16 %v3803, %v3795
    %v4092 = vpack.c.b16 %v3804, %v3796
    %v4093 = vpack.c.b16 %v3813, %v3805
    %v4094 = vpack.c.b16 %v3814, %v3806
    %v4095 = vpack.c.b16 %v3815, %v3807
    %v4096 = vpack.c.b16 %v3816, %v3808
    %v4097 = vpack.c.b16 %v3817, %v3809
    %v4098 = vpack.c.b16 %v3818, %v3810
    %v4099 = vpack.c.b16 %v3819, %v3811
    %v4100 = vpack.c.b16 %v3820, %v3812
    %v4101 = vpack.c.b16 %v3829, %v3821
    %v4102 = vpack.c.b16 %v3830, %v3822
    %v4103 = vpack.c.b16 %v3831, %v3823
    %v4104 = vpack.c.b16 %v3832, %v3824
    %v4105 = vpack.c.b16 %v3833, %v3825
    %v4106 = vpack.c.b16 %v3834, %v3826
    %v4107 = vpack.c.b16 %v3835, %v3827
    %v4108 = vpack.c.b16 %v3836, %v3828
    %v4109 = vpack.c.b16 %v3845, %v3837
    %v4110 = vpack.c.b16 %v3846, %v3838
    %v4111 = vpack.c.b16 %v3847, %v3839
    %v4112 = vpack.c.b16 %v3848, %v3840
    %v4113 = vpack.c.b16 %v3849, %v3841
    %v4114 = vpack.c.b16 %v3850, %v3842
    %v4115 = vpack.c.b16 %v3851, %v3843
    %v4116 = vpack.c.b16 %v3852, %v3844
    %v4117 = vpack.c.b16 %v3861, %v3853
    %v4118 = vpack.c.b16 %v3862, %v3854
    %v4119 = vpack.c.b16 %v3863, %v3855
    %v4120 = vpack.c.b16 %v3864, %v3856
    %v4121 = vpack.c.b16 %v3865, %v3857
    %v4122 = vpack.c.b16 %v3866, %v3858
    %v4123 = vpack.c.b16 %v3867, %v3859
    %v4124 = vpack.c.b16 %v3868, %v3860
    %4381 = vmatprep.subr.bf16.mxu0 %v3926
    %4382 = vmatpush1.bf16.msra.mxu0 %v3925
    %4383 = vmatprep.subr.bf16.mxu0 %v3918
    %4384 = vmatpush1.bf16.msra.mxu0 %v3917
    %4385 = vmatprep.subr.bf16.mxu0 %v3910
    %4386 = vmatpush1.bf16.msra.mxu0 %v3909
    %4387 = vmatprep.subr.bf16.mxu0 %v3902
    %4388 = vmatpush1.bf16.msra.mxu0 %v3901
    %4389 = vmatprep.subr.bf16.mxu0 %v3894
    %4390 = vmatpush1.bf16.msra.mxu0 %v3893
    %4391 = vmatprep.subr.bf16.mxu0 %v3886
    %4392 = vmatpush1.bf16.msra.mxu0 %v3885
    %4393 = vmatprep.subr.bf16.mxu0 %v3878
    %4394 = vmatpush1.bf16.msra.mxu0 %v3877
    %4395 = vmatprep.subr.bf16.mxu0 %v3870
    %4396 = vmatpush1.bf16.msra.mxu0 %v3869
    %4397 = vmatprep.subr.bf16.mxu0 %v3990
    %4398 = vmatpush2.bf16.msra.mxu0 %v3989
    %4399 = vmatprep.subr.bf16.mxu0 %v3982
    %4400 = vmatpush2.bf16.msra.mxu0 %v3981
    %4401 = vmatprep.subr.bf16.mxu0 %v3974
    %4402 = vmatpush2.bf16.msra.mxu0 %v3973
    %4403 = vmatprep.subr.bf16.mxu0 %v3966
    %4404 = vmatpush2.bf16.msra.mxu0 %v3965
    %4405 = vmatprep.subr.bf16.mxu0 %v3958
    %4406 = vmatpush2.bf16.msra.mxu0 %v3957
    %4407 = vmatprep.subr.bf16.mxu0 %v3950
    %4408 = vmatpush2.bf16.msra.mxu0 %v3949
    %4409 = vmatprep.subr.bf16.mxu0 %v3942
    %4410 = vmatpush2.bf16.msra.mxu0 %v3941
    %4411 = vmatprep.subr.bf16.mxu0 %v3934
    %4412 = vmatpush2.bf16.msra.mxu0 %v3933
    %4413 = vmatprep.mubr.bf16.mxu0 %v2800
    %4414 = vmatmul.mubr.bf16.gmra.mxu0 %v2799
    %v4415 = vpop.f32.mrf.mxu0
    %v4416 = vadd.f32 %v3064, %v4415
    %v4417 = vpop.f32.mrf.mxu0
    %v4418 = vadd.f32 %v3068, %v4417
    %v4419 = vpop.f32.mrf.mxu0
    %v4420 = vpop.f32.mrf.mxu0
    %4421 = vdwg.mxu0
    %4422 = vmatprep.subr.bf16.mxu0 %v4054
    %4423 = vmatpush1.bf16.msra.mxu0 %v4053
    %4424 = vmatprep.subr.bf16.mxu0 %v4046
    %4425 = vmatpush1.bf16.msra.mxu0 %v4045
    %4426 = vmatprep.subr.bf16.mxu0 %v4038
    %4427 = vmatpush1.bf16.msra.mxu0 %v4037
    %4428 = vmatprep.subr.bf16.mxu0 %v4030
    %4429 = vmatpush1.bf16.msra.mxu0 %v4029
    %4430 = vmatprep.subr.bf16.mxu0 %v4022
    %4431 = vmatpush1.bf16.msra.mxu0 %v4021
    %4432 = vmatprep.subr.bf16.mxu0 %v4014
    %4433 = vmatpush1.bf16.msra.mxu0 %v4013
    %4434 = vmatprep.subr.bf16.mxu0 %v4006
    %4435 = vmatpush1.bf16.msra.mxu0 %v4005
    %4436 = vmatprep.subr.bf16.mxu0 %v3998
    %4437 = vmatpush1.bf16.msra.mxu0 %v3997
    %4438 = vmatprep.subr.bf16.mxu0 %v4118
    %4439 = vmatpush2.bf16.msra.mxu0 %v4117
    %4440 = vmatprep.subr.bf16.mxu0 %v4110
    %4441 = vmatpush2.bf16.msra.mxu0 %v4109
    %4442 = vmatprep.subr.bf16.mxu0 %v4102
    %4443 = vmatpush2.bf16.msra.mxu0 %v4101
    %4444 = vmatprep.subr.bf16.mxu0 %v4094
    %4445 = vmatpush2.bf16.msra.mxu0 %v4093
    %4446 = vmatprep.subr.bf16.mxu0 %v4086
    %4447 = vmatpush2.bf16.msra.mxu0 %v4085
    %4448 = vmatprep.subr.bf16.mxu0 %v4078
    %4449 = vmatpush2.bf16.msra.mxu0 %v4077
    %4450 = vmatprep.subr.bf16.mxu0 %v4070
    %4451 = vmatpush2.bf16.msra.mxu0 %v4069
    %4452 = vmatprep.subr.bf16.mxu0 %v4062
    %4453 = vmatpush2.bf16.msra.mxu0 %v4061
    %4454 = vmatprep.mubr.bf16.mxu0 %v2802
    %4455 = vmatmul.mubr.bf16.gmra.mxu0 %v2801
    %v4456 = vpop.f32.mrf.mxu0
    %v4457 = vadd.f32 %v4416, %v4456
    %v4458 = vpop.f32.mrf.mxu0
    %v4459 = vadd.f32 %v4418, %v4458
    %v4460 = vpop.f32.mrf.mxu0
    %v4461 = vpop.f32.mrf.mxu0
    %4462 = vdwg.mxu0
    %4463 = vmatprep.subr.bf16.mxu0 %v3928
    %4464 = vmatpush1.bf16.msra.mxu0 %v3927
    %4465 = vmatprep.subr.bf16.mxu0 %v3920
    %4466 = vmatpush1.bf16.msra.mxu0 %v3919
    %4467 = vmatprep.subr.bf16.mxu0 %v3912
    %4468 = vmatpush1.bf16.msra.mxu0 %v3911
    %4469 = vmatprep.subr.bf16.mxu0 %v3904
    %4470 = vmatpush1.bf16.msra.mxu0 %v3903
    %4471 = vmatprep.subr.bf16.mxu0 %v3896
    %4472 = vmatpush1.bf16.msra.mxu0 %v3895
    %4473 = vmatprep.subr.bf16.mxu0 %v3888
    %4474 = vmatpush1.bf16.msra.mxu0 %v3887
    %4475 = vmatprep.subr.bf16.mxu0 %v3880
    %4476 = vmatpush1.bf16.msra.mxu0 %v3879
    %4477 = vmatprep.subr.bf16.mxu0 %v3872
    %4478 = vmatpush1.bf16.msra.mxu0 %v3871
    %4479 = vmatprep.subr.bf16.mxu0 %v3992
    %4480 = vmatpush2.bf16.msra.mxu0 %v3991
    %4481 = vmatprep.subr.bf16.mxu0 %v3984
    %4482 = vmatpush2.bf16.msra.mxu0 %v3983
    %4483 = vmatprep.subr.bf16.mxu0 %v3976
    %4484 = vmatpush2.bf16.msra.mxu0 %v3975
    %4485 = vmatprep.subr.bf16.mxu0 %v3968
    %4486 = vmatpush2.bf16.msra.mxu0 %v3967
    %4487 = vmatprep.subr.bf16.mxu0 %v3960
    %4488 = vmatpush2.bf16.msra.mxu0 %v3959
    %4489 = vmatprep.subr.bf16.mxu0 %v3952
    %4490 = vmatpush2.bf16.msra.mxu0 %v3951
    %4491 = vmatprep.subr.bf16.mxu0 %v3944
    %4492 = vmatpush2.bf16.msra.mxu0 %v3943
    %4493 = vmatprep.subr.bf16.mxu0 %v3936
    %4494 = vmatpush2.bf16.msra.mxu0 %v3935
    %4495 = vmatprep.mubr.bf16.mxu0 %v2800
    %4496 = vmatmul.mubr.bf16.gmra.mxu0 %v2799
    %v4497 = vpop.f32.mrf.mxu0
    %v4498 = vadd.f32 %v3072, %v4497
    %v4499 = vpop.f32.mrf.mxu0
    %v4500 = vadd.f32 %v3076, %v4499
    %v4501 = vpop.f32.mrf.mxu0
    %v4502 = vpop.f32.mrf.mxu0
    %4503 = vdwg.mxu0
    %4504 = vmatprep.subr.bf16.mxu0 %v4056
    %4505 = vmatpush1.bf16.msra.mxu0 %v4055
    %4506 = vmatprep.subr.bf16.mxu0 %v4048
    %4507 = vmatpush1.bf16.msra.mxu0 %v4047
    %4508 = vmatprep.subr.bf16.mxu0 %v4040
    %4509 = vmatpush1.bf16.msra.mxu0 %v4039
    %4510 = vmatprep.subr.bf16.mxu0 %v4032
    %4511 = vmatpush1.bf16.msra.mxu0 %v4031
    %4512 = vmatprep.subr.bf16.mxu0 %v4024
    %4513 = vmatpush1.bf16.msra.mxu0 %v4023
    %4514 = vmatprep.subr.bf16.mxu0 %v4016
    %4515 = vmatpush1.bf16.msra.mxu0 %v4015
    %4516 = vmatprep.subr.bf16.mxu0 %v4008
    %4517 = vmatpush1.bf16.msra.mxu0 %v4007
    %4518 = vmatprep.subr.bf16.mxu0 %v4000
    %4519 = vmatpush1.bf16.msra.mxu0 %v3999
    %4520 = vmatprep.subr.bf16.mxu0 %v4120
    %4521 = vmatpush2.bf16.msra.mxu0 %v4119
    %4522 = vmatprep.subr.bf16.mxu0 %v4112
    %4523 = vmatpush2.bf16.msra.mxu0 %v4111
    %4524 = vmatprep.subr.bf16.mxu0 %v4104
    %4525 = vmatpush2.bf16.msra.mxu0 %v4103
    %4526 = vmatprep.subr.bf16.mxu0 %v4096
    %4527 = vmatpush2.bf16.msra.mxu0 %v4095
    %4528 = vmatprep.subr.bf16.mxu0 %v4088
    %4529 = vmatpush2.bf16.msra.mxu0 %v4087
    %4530 = vmatprep.subr.bf16.mxu0 %v4080
    %4531 = vmatpush2.bf16.msra.mxu0 %v4079
    %4532 = vmatprep.subr.bf16.mxu0 %v4072
    %4533 = vmatpush2.bf16.msra.mxu0 %v4071
    %4534 = vmatprep.subr.bf16.mxu0 %v4064
    %4535 = vmatpush2.bf16.msra.mxu0 %v4063
    %4536 = vmatprep.mubr.bf16.mxu0 %v2802
    %4537 = vmatmul.mubr.bf16.gmra.mxu0 %v2801
    %v4538 = vpop.f32.mrf.mxu0
    %v4539 = vadd.f32 %v4498, %v4538
    %v4540 = vpop.f32.mrf.mxu0
    %v4541 = vadd.f32 %v4500, %v4540
    %v4542 = vpop.f32.mrf.mxu0
    %v4543 = vpop.f32.mrf.mxu0
    %4544 = vdwg.mxu0
    %4545 = vmatprep.subr.bf16.mxu0 %v3930
    %4546 = vmatpush1.bf16.msra.mxu0 %v3929
    %4547 = vmatprep.subr.bf16.mxu0 %v3922
    %4548 = vmatpush1.bf16.msra.mxu0 %v3921
    %4549 = vmatprep.subr.bf16.mxu0 %v3914
    %4550 = vmatpush1.bf16.msra.mxu0 %v3913
    %4551 = vmatprep.subr.bf16.mxu0 %v3906
    %4552 = vmatpush1.bf16.msra.mxu0 %v3905
    %4553 = vmatprep.subr.bf16.mxu0 %v3898
    %4554 = vmatpush1.bf16.msra.mxu0 %v3897
    %4555 = vmatprep.subr.bf16.mxu0 %v3890
    %4556 = vmatpush1.bf16.msra.mxu0 %v3889
    %4557 = vmatprep.subr.bf16.mxu0 %v3882
    %4558 = vmatpush1.bf16.msra.mxu0 %v3881
    %4559 = vmatprep.subr.bf16.mxu0 %v3874
    %4560 = vmatpush1.bf16.msra.mxu0 %v3873
    %4561 = vmatprep.subr.bf16.mxu0 %v3994
    %4562 = vmatpush2.bf16.msra.mxu0 %v3993
    %4563 = vmatprep.subr.bf16.mxu0 %v3986
    %4564 = vmatpush2.bf16.msra.mxu0 %v3985
    %4565 = vmatprep.subr.bf16.mxu0 %v3978
    %4566 = vmatpush2.bf16.msra.mxu0 %v3977
    %4567 = vmatprep.subr.bf16.mxu0 %v3970
    %4568 = vmatpush2.bf16.msra.mxu0 %v3969
    %4569 = vmatprep.subr.bf16.mxu0 %v3962
    %4570 = vmatpush2.bf16.msra.mxu0 %v3961
    %4571 = vmatprep.subr.bf16.mxu0 %v3954
    %4572 = vmatpush2.bf16.msra.mxu0 %v3953
    %4573 = vmatprep.subr.bf16.mxu0 %v3946
    %4574 = vmatpush2.bf16.msra.mxu0 %v3945
    %4575 = vmatprep.subr.bf16.mxu0 %v3938
    %4576 = vmatpush2.bf16.msra.mxu0 %v3937
    %4577 = vmatprep.mubr.bf16.mxu0 %v2800
    %4578 = vmatmul.mubr.bf16.gmra.mxu0 %v2799
    %v4579 = vpop.f32.mrf.mxu0
    %v4580 = vadd.f32 %v3080, %v4579
    %v4581 = vpop.f32.mrf.mxu0
    %v4582 = vadd.f32 %v3084, %v4581
    %v4583 = vpop.f32.mrf.mxu0
    %v4584 = vpop.f32.mrf.mxu0
    %4585 = vdwg.mxu0
    %4586 = vmatprep.subr.bf16.mxu0 %v4058
    %4587 = vmatpush1.bf16.msra.mxu0 %v4057
    %4588 = vmatprep.subr.bf16.mxu0 %v4050
    %4589 = vmatpush1.bf16.msra.mxu0 %v4049
    %4590 = vmatprep.subr.bf16.mxu0 %v4042
    %4591 = vmatpush1.bf16.msra.mxu0 %v4041
    %4592 = vmatprep.subr.bf16.mxu0 %v4034
    %4593 = vmatpush1.bf16.msra.mxu0 %v4033
    %4594 = vmatprep.subr.bf16.mxu0 %v4026
    %4595 = vmatpush1.bf16.msra.mxu0 %v4025
    %4596 = vmatprep.subr.bf16.mxu0 %v4018
    %4597 = vmatpush1.bf16.msra.mxu0 %v4017
    %4598 = vmatprep.subr.bf16.mxu0 %v4010
    %4599 = vmatpush1.bf16.msra.mxu0 %v4009
    %4600 = vmatprep.subr.bf16.mxu0 %v4002
    %4601 = vmatpush1.bf16.msra.mxu0 %v4001
    %4602 = vmatprep.subr.bf16.mxu0 %v4122
    %4603 = vmatpush2.bf16.msra.mxu0 %v4121
    %4604 = vmatprep.subr.bf16.mxu0 %v4114
    %4605 = vmatpush2.bf16.msra.mxu0 %v4113
    %4606 = vmatprep.subr.bf16.mxu0 %v4106
    %4607 = vmatpush2.bf16.msra.mxu0 %v4105
    %4608 = vmatprep.subr.bf16.mxu0 %v4098
    %4609 = vmatpush2.bf16.msra.mxu0 %v4097
    %4610 = vmatprep.subr.bf16.mxu0 %v4090
    %4611 = vmatpush2.bf16.msra.mxu0 %v4089
    %4612 = vmatprep.subr.bf16.mxu0 %v4082
    %4613 = vmatpush2.bf16.msra.mxu0 %v4081
    %4614 = vmatprep.subr.bf16.mxu0 %v4074
    %4615 = vmatpush2.bf16.msra.mxu0 %v4073
    %4616 = vmatprep.subr.bf16.mxu0 %v4066
    %4617 = vmatpush2.bf16.msra.mxu0 %v4065
    %4618 = vmatprep.mubr.bf16.mxu0 %v2802
    %4619 = vmatmul.mubr.bf16.gmra.mxu0 %v2801
    %v4620 = vpop.f32.mrf.mxu0
    %v4621 = vadd.f32 %v4580, %v4620
    %v4622 = vpop.f32.mrf.mxu0
    %v4623 = vadd.f32 %v4582, %v4622
    %v4624 = vpop.f32.mrf.mxu0
    %v4625 = vpop.f32.mrf.mxu0
    %4626 = vdwg.mxu0
    %4627 = vmatprep.subr.bf16.mxu0 %v3932
    %4628 = vmatpush1.bf16.msra.mxu0 %v3931
    %4629 = vmatprep.subr.bf16.mxu0 %v3924
    %4630 = vmatpush1.bf16.msra.mxu0 %v3923
    %4631 = vmatprep.subr.bf16.mxu0 %v3916
    %4632 = vmatpush1.bf16.msra.mxu0 %v3915
    %4633 = vmatprep.subr.bf16.mxu0 %v3908
    %4634 = vmatpush1.bf16.msra.mxu0 %v3907
    %4635 = vmatprep.subr.bf16.mxu0 %v3900
    %4636 = vmatpush1.bf16.msra.mxu0 %v3899
    %4637 = vmatprep.subr.bf16.mxu0 %v3892
    %4638 = vmatpush1.bf16.msra.mxu0 %v3891
    %4639 = vmatprep.subr.bf16.mxu0 %v3884
    %4640 = vmatpush1.bf16.msra.mxu0 %v3883
    %4641 = vmatprep.subr.bf16.mxu0 %v3876
    %4642 = vmatpush1.bf16.msra.mxu0 %v3875
    %4643 = vmatprep.subr.bf16.mxu0 %v3996
    %4644 = vmatpush2.bf16.msra.mxu0 %v3995
    %4645 = vmatprep.subr.bf16.mxu0 %v3988
    %4646 = vmatpush2.bf16.msra.mxu0 %v3987
    %4647 = vmatprep.subr.bf16.mxu0 %v3980
    %4648 = vmatpush2.bf16.msra.mxu0 %v3979
    %4649 = vmatprep.subr.bf16.mxu0 %v3972
    %4650 = vmatpush2.bf16.msra.mxu0 %v3971
    %4651 = vmatprep.subr.bf16.mxu0 %v3964
    %4652 = vmatpush2.bf16.msra.mxu0 %v3963
    %4653 = vmatprep.subr.bf16.mxu0 %v3956
    %4654 = vmatpush2.bf16.msra.mxu0 %v3955
    %4655 = vmatprep.subr.bf16.mxu0 %v3948
    %4656 = vmatpush2.bf16.msra.mxu0 %v3947
    %4657 = vmatprep.subr.bf16.mxu0 %v3940
    %4658 = vmatpush2.bf16.msra.mxu0 %v3939
    %4659 = vmatprep.mubr.bf16.mxu0 %v2800
    %4660 = vmatmul.mubr.bf16.gmra.mxu0 %v2799
    %v4661 = vpop.f32.mrf.mxu0
    %v4662 = vadd.f32 %v3088, %v4661
    %v4663 = vpop.f32.mrf.mxu0
    %v4664 = vadd.f32 %v3092, %v4663
    %v4665 = vpop.f32.mrf.mxu0
    %v4666 = vpop.f32.mrf.mxu0
    %4667 = vdwg.mxu0
    %4668 = vmatprep.subr.bf16.mxu0 %v4060
    %4669 = vmatpush1.bf16.msra.mxu0 %v4059
    %4670 = vmatprep.subr.bf16.mxu0 %v4052
    %4671 = vmatpush1.bf16.msra.mxu0 %v4051
    %4672 = vmatprep.subr.bf16.mxu0 %v4044
    %4673 = vmatpush1.bf16.msra.mxu0 %v4043
    %4674 = vmatprep.subr.bf16.mxu0 %v4036
    %4675 = vmatpush1.bf16.msra.mxu0 %v4035
    %4676 = vmatprep.subr.bf16.mxu0 %v4028
    %4677 = vmatpush1.bf16.msra.mxu0 %v4027
    %4678 = vmatprep.subr.bf16.mxu0 %v4020
    %4679 = vmatpush1.bf16.msra.mxu0 %v4019
    %4680 = vmatprep.subr.bf16.mxu0 %v4012
    %4681 = vmatpush1.bf16.msra.mxu0 %v4011
    %4682 = vmatprep.subr.bf16.mxu0 %v4004
    %4683 = vmatpush1.bf16.msra.mxu0 %v4003
    %4684 = vmatprep.subr.bf16.mxu0 %v4124
    %4685 = vmatpush2.bf16.msra.mxu0 %v4123
    %4686 = vmatprep.subr.bf16.mxu0 %v4116
    %4687 = vmatpush2.bf16.msra.mxu0 %v4115
    %4688 = vmatprep.subr.bf16.mxu0 %v4108
    %4689 = vmatpush2.bf16.msra.mxu0 %v4107
    %4690 = vmatprep.subr.bf16.mxu0 %v4100
    %4691 = vmatpush2.bf16.msra.mxu0 %v4099
    %4692 = vmatprep.subr.bf16.mxu0 %v4092
    %4693 = vmatpush2.bf16.msra.mxu0 %v4091
    %4694 = vmatprep.subr.bf16.mxu0 %v4084
    %4695 = vmatpush2.bf16.msra.mxu0 %v4083
    %4696 = vmatprep.subr.bf16.mxu0 %v4076
    %4697 = vmatpush2.bf16.msra.mxu0 %v4075
    %4698 = vmatprep.subr.bf16.mxu0 %v4068
    %4699 = vmatpush2.bf16.msra.mxu0 %v4067
    %4700 = vmatprep.mubr.bf16.mxu0 %v2802
    %4701 = vmatmul.mubr.bf16.gmra.mxu0 %v2801
    %v4702 = vpop.f32.mrf.mxu0
    %v4703 = vadd.f32 %v4662, %v4702
    %v4704 = vpop.f32.mrf.mxu0
    %v4705 = vadd.f32 %v4664, %v4704
    %v4706 = vpop.f32.mrf.mxu0
    %v4707 = vpop.f32.mrf.mxu0
    %4708 = vdwg.mxu0
    %v4709 = vmax.f32 %v4457, 0.0
    %v4710 = vmax.f32 %v4459, 0.0
    %v4711 = vmax.f32 %v4539, 0.0
    %v4712 = vmax.f32 %v4541, 0.0
    %v4713 = vmax.f32 %v4621, 0.0
    %v4714 = vmax.f32 %v4623, 0.0
    %v4715 = vmax.f32 %v4703, 0.0
    %v4716 = vmax.f32 %v4705, 0.0
    %s4717 = smul.u32 4, 128
    %s4718 = smul.u32 %s4717, 1
    %s4719 = sshll.u32 %s4718, 4
    %4720 = dma.done %s583, %s4719
    %v4721 = vpack.c.bf16 %v4709, %v4709
    %v4722 = vpack.c.bf16 %v4710, %v4710
    %v4723 = vpack.c.bf16 %v4711, %v4711
    %v4724 = vpack.c.bf16 %v4712, %v4712
    %v4725 = vpack.c.bf16 %v4713, %v4713
    %v4726 = vpack.c.bf16 %v4714, %v4714
    %v4727 = vpack.c.bf16 %v4715, %v4715
    %v4728 = vpack.c.bf16 %v4716, %v4716
    %v4729 = vld [vmem:[#allocation5] sm:$0xf]
    %v4730 = vld [vmem:[#allocation5 + $0x4] sm:$0xf]
    %v4731 = vld [vmem:[#allocation5 + $0x8] sm:$0xf]
    %v4732 = vld [vmem:[#allocation5 + $0xc] sm:$0xf]
    %v4733 = vld [vmem:[#allocation5 + $0x10] sm:$0xf]
    %v4734 = vld [vmem:[#allocation5 + $0x14] sm:$0xf]
    %v4735 = vld [vmem:[#allocation5 + $0x18] sm:$0xf]
    %v4736 = vld [vmem:[#allocation5 + $0x1c] sm:$0xf]
    %v4737 = vld [vmem:[#allocation5 + $0x20] sm:$0xf]
    %v4738 = vld [vmem:[#allocation5 + $0x24] sm:$0xf]
    %v4739 = vld [vmem:[#allocation5 + $0x28] sm:$0xf]
    %v4740 = vld [vmem:[#allocation5 + $0x2c] sm:$0xf]
    %v4741 = vld [vmem:[#allocation5 + $0x30] sm:$0xf]
    %v4742 = vld [vmem:[#allocation5 + $0x34] sm:$0xf]
    %v4743 = vld [vmem:[#allocation5 + $0x38] sm:$0xf]
    %v4744 = vld [vmem:[#allocation5 + $0x3c] sm:$0xf]
    %v4745 = vld [vmem:[#allocation5 + $0x40] sm:$0xf]
    %v4746 = vld [vmem:[#allocation5 + $0x44] sm:$0xf]
    %v4747 = vld [vmem:[#allocation5 + $0x48] sm:$0xf]
    %v4748 = vld [vmem:[#allocation5 + $0x4c] sm:$0xf]
    %v4749 = vld [vmem:[#allocation5 + $0x50] sm:$0xf]
    %v4750 = vld [vmem:[#allocation5 + $0x54] sm:$0xf]
    %v4751 = vld [vmem:[#allocation5 + $0x58] sm:$0xf]
    %v4752 = vld [vmem:[#allocation5 + $0x5c] sm:$0xf]
    %v4753 = vld [vmem:[#allocation5 + $0x60] sm:$0xf]
    %v4754 = vld [vmem:[#allocation5 + $0x64] sm:$0xf]
    %v4755 = vld [vmem:[#allocation5 + $0x68] sm:$0xf]
    %v4756 = vld [vmem:[#allocation5 + $0x6c] sm:$0xf]
    %v4757 = vld [vmem:[#allocation5 + $0x70] sm:$0xf]
    %v4758 = vld [vmem:[#allocation5 + $0x74] sm:$0xf]
    %v4759 = vld [vmem:[#allocation5 + $0x78] sm:$0xf]
    %v4760 = vld [vmem:[#allocation5 + $0x7c] sm:$0xf]
    %v4761 = vld [vmem:[#allocation5 + $0x80] sm:$0xf]
    %v4762 = vld [vmem:[#allocation5 + $0x84] sm:$0xf]
    %v4763 = vld [vmem:[#allocation5 + $0x88] sm:$0xf]
    %v4764 = vld [vmem:[#allocation5 + $0x8c] sm:$0xf]
    %v4765 = vld [vmem:[#allocation5 + $0x90] sm:$0xf]
    %v4766 = vld [vmem:[#allocation5 + $0x94] sm:$0xf]
    %v4767 = vld [vmem:[#allocation5 + $0x98] sm:$0xf]
    %v4768 = vld [vmem:[#allocation5 + $0x9c] sm:$0xf]
    %v4769 = vld [vmem:[#allocation5 + $0xa0] sm:$0xf]
    %v4770 = vld [vmem:[#allocation5 + $0xa4] sm:$0xf]
    %v4771 = vld [vmem:[#allocation5 + $0xa8] sm:$0xf]
    %v4772 = vld [vmem:[#allocation5 + $0xac] sm:$0xf]
    %v4773 = vld [vmem:[#allocation5 + $0xb0] sm:$0xf]
    %v4774 = vld [vmem:[#allocation5 + $0xb4] sm:$0xf]
    %v4775 = vld [vmem:[#allocation5 + $0xb8] sm:$0xf]
    %v4776 = vld [vmem:[#allocation5 + $0xbc] sm:$0xf]
    %v4777 = vld [vmem:[#allocation5 + $0xc0] sm:$0xf]
    %v4778 = vld [vmem:[#allocation5 + $0xc4] sm:$0xf]
    %v4779 = vld [vmem:[#allocation5 + $0xc8] sm:$0xf]
    %v4780 = vld [vmem:[#allocation5 + $0xcc] sm:$0xf]
    %v4781 = vld [vmem:[#allocation5 + $0xd0] sm:$0xf]
    %v4782 = vld [vmem:[#allocation5 + $0xd4] sm:$0xf]
    %v4783 = vld [vmem:[#allocation5 + $0xd8] sm:$0xf]
    %v4784 = vld [vmem:[#allocation5 + $0xdc] sm:$0xf]
    %v4785 = vld [vmem:[#allocation5 + $0xe0] sm:$0xf]
    %v4786 = vld [vmem:[#allocation5 + $0xe4] sm:$0xf]
    %v4787 = vld [vmem:[#allocation5 + $0xe8] sm:$0xf]
    %v4788 = vld [vmem:[#allocation5 + $0xec] sm:$0xf]
    %v4789 = vld [vmem:[#allocation5 + $0xf0] sm:$0xf]
    %v4790 = vld [vmem:[#allocation5 + $0xf4] sm:$0xf]
    %v4791 = vld [vmem:[#allocation5 + $0xf8] sm:$0xf]
    %v4792 = vld [vmem:[#allocation5 + $0xfc] sm:$0xf]
    %v4793 = vld [vmem:[#allocation5 + $0x100] sm:$0xf]
    %v4794 = vld [vmem:[#allocation5 + $0x104] sm:$0xf]
    %v4795 = vld [vmem:[#allocation5 + $0x108] sm:$0xf]
    %v4796 = vld [vmem:[#allocation5 + $0x10c] sm:$0xf]
    %v4797 = vld [vmem:[#allocation5 + $0x110] sm:$0xf]
    %v4798 = vld [vmem:[#allocation5 + $0x114] sm:$0xf]
    %v4799 = vld [vmem:[#allocation5 + $0x118] sm:$0xf]
    %v4800 = vld [vmem:[#allocation5 + $0x11c] sm:$0xf]
    %v4801 = vld [vmem:[#allocation5 + $0x120] sm:$0xf]
    %v4802 = vld [vmem:[#allocation5 + $0x124] sm:$0xf]
    %v4803 = vld [vmem:[#allocation5 + $0x128] sm:$0xf]
    %v4804 = vld [vmem:[#allocation5 + $0x12c] sm:$0xf]
    %v4805 = vld [vmem:[#allocation5 + $0x130] sm:$0xf]
    %v4806 = vld [vmem:[#allocation5 + $0x134] sm:$0xf]
    %v4807 = vld [vmem:[#allocation5 + $0x138] sm:$0xf]
    %v4808 = vld [vmem:[#allocation5 + $0x13c] sm:$0xf]
    %v4809 = vld [vmem:[#allocation5 + $0x140] sm:$0xf]
    %v4810 = vld [vmem:[#allocation5 + $0x144] sm:$0xf]
    %v4811 = vld [vmem:[#allocation5 + $0x148] sm:$0xf]
    %v4812 = vld [vmem:[#allocation5 + $0x14c] sm:$0xf]
    %v4813 = vld [vmem:[#allocation5 + $0x150] sm:$0xf]
    %v4814 = vld [vmem:[#allocation5 + $0x154] sm:$0xf]
    %v4815 = vld [vmem:[#allocation5 + $0x158] sm:$0xf]
    %v4816 = vld [vmem:[#allocation5 + $0x15c] sm:$0xf]
    %v4817 = vld [vmem:[#allocation5 + $0x160] sm:$0xf]
    %v4818 = vld [vmem:[#allocation5 + $0x164] sm:$0xf]
    %v4819 = vld [vmem:[#allocation5 + $0x168] sm:$0xf]
    %v4820 = vld [vmem:[#allocation5 + $0x16c] sm:$0xf]
    %v4821 = vld [vmem:[#allocation5 + $0x170] sm:$0xf]
    %v4822 = vld [vmem:[#allocation5 + $0x174] sm:$0xf]
    %v4823 = vld [vmem:[#allocation5 + $0x178] sm:$0xf]
    %v4824 = vld [vmem:[#allocation5 + $0x17c] sm:$0xf]
    %v4825 = vld [vmem:[#allocation5 + $0x180] sm:$0xf]
    %v4826 = vld [vmem:[#allocation5 + $0x184] sm:$0xf]
    %v4827 = vld [vmem:[#allocation5 + $0x188] sm:$0xf]
    %v4828 = vld [vmem:[#allocation5 + $0x18c] sm:$0xf]
    %v4829 = vld [vmem:[#allocation5 + $0x190] sm:$0xf]
    %v4830 = vld [vmem:[#allocation5 + $0x194] sm:$0xf]
    %v4831 = vld [vmem:[#allocation5 + $0x198] sm:$0xf]
    %v4832 = vld [vmem:[#allocation5 + $0x19c] sm:$0xf]
    %v4833 = vld [vmem:[#allocation5 + $0x1a0] sm:$0xf]
    %v4834 = vld [vmem:[#allocation5 + $0x1a4] sm:$0xf]
    %v4835 = vld [vmem:[#allocation5 + $0x1a8] sm:$0xf]
    %v4836 = vld [vmem:[#allocation5 + $0x1ac] sm:$0xf]
    %v4837 = vld [vmem:[#allocation5 + $0x1b0] sm:$0xf]
    %v4838 = vld [vmem:[#allocation5 + $0x1b4] sm:$0xf]
    %v4839 = vld [vmem:[#allocation5 + $0x1b8] sm:$0xf]
    %v4840 = vld [vmem:[#allocation5 + $0x1bc] sm:$0xf]
    %v4841 = vld [vmem:[#allocation5 + $0x1c0] sm:$0xf]
    %v4842 = vld [vmem:[#allocation5 + $0x1c4] sm:$0xf]
    %v4843 = vld [vmem:[#allocation5 + $0x1c8] sm:$0xf]
    %v4844 = vld [vmem:[#allocation5 + $0x1cc] sm:$0xf]
    %v4845 = vld [vmem:[#allocation5 + $0x1d0] sm:$0xf]
    %v4846 = vld [vmem:[#allocation5 + $0x1d4] sm:$0xf]
    %v4847 = vld [vmem:[#allocation5 + $0x1d8] sm:$0xf]
    %v4848 = vld [vmem:[#allocation5 + $0x1dc] sm:$0xf]
    %v4849 = vld [vmem:[#allocation5 + $0x1e0] sm:$0xf]
    %v4850 = vld [vmem:[#allocation5 + $0x1e4] sm:$0xf]
    %v4851 = vld [vmem:[#allocation5 + $0x1e8] sm:$0xf]
    %v4852 = vld [vmem:[#allocation5 + $0x1ec] sm:$0xf]
    %v4853 = vld [vmem:[#allocation5 + $0x1f0] sm:$0xf]
    %v4854 = vld [vmem:[#allocation5 + $0x1f4] sm:$0xf]
    %v4855 = vld [vmem:[#allocation5 + $0x1f8] sm:$0xf]
    %v4856 = vld [vmem:[#allocation5 + $0x1fc] sm:$0xf]
    %v4857 = vld [vmem:[%s8] sm:$0x1]
    %v4859 = vlaneseq
    %v4860 = vshrl.u32 %v4859, 7
    %v4861 = vsub.s32 0, %v4860
    %v4862 = vrot.slane %v4857, %v4861
    %v4992 = vunpack.c.l.b16 %v4729
    %v4993 = vunpack.c.l.b16 %v4730
    %v4994 = vunpack.c.l.b16 %v4731
    %v4995 = vunpack.c.l.b16 %v4732
    %v4996 = vunpack.c.l.b16 %v4733
    %v4997 = vunpack.c.l.b16 %v4734
    %v4998 = vunpack.c.l.b16 %v4735
    %v4999 = vunpack.c.l.b16 %v4736
    %v5000 = vunpack.c.l.b16 %v4737
    %v5001 = vunpack.c.l.b16 %v4738
    %v5002 = vunpack.c.l.b16 %v4739
    %v5003 = vunpack.c.l.b16 %v4740
    %v5004 = vunpack.c.l.b16 %v4741
    %v5005 = vunpack.c.l.b16 %v4742
    %v5006 = vunpack.c.l.b16 %v4743
    %v5007 = vunpack.c.l.b16 %v4744
    %v5008 = vunpack.c.l.b16 %v4745
    %v5009 = vunpack.c.l.b16 %v4746
    %v5010 = vunpack.c.l.b16 %v4747
    %v5011 = vunpack.c.l.b16 %v4748
    %v5012 = vunpack.c.l.b16 %v4749
    %v5013 = vunpack.c.l.b16 %v4750
    %v5014 = vunpack.c.l.b16 %v4751
    %v5015 = vunpack.c.l.b16 %v4752
    %v5016 = vunpack.c.l.b16 %v4753
    %v5017 = vunpack.c.l.b16 %v4754
    %v5018 = vunpack.c.l.b16 %v4755
    %v5019 = vunpack.c.l.b16 %v4756
    %v5020 = vunpack.c.l.b16 %v4757
    %v5021 = vunpack.c.l.b16 %v4758
    %v5022 = vunpack.c.l.b16 %v4759
    %v5023 = vunpack.c.l.b16 %v4760
    %v5024 = vunpack.c.l.b16 %v4761
    %v5025 = vunpack.c.l.b16 %v4762
    %v5026 = vunpack.c.l.b16 %v4763
    %v5027 = vunpack.c.l.b16 %v4764
    %v5028 = vunpack.c.l.b16 %v4765
    %v5029 = vunpack.c.l.b16 %v4766
    %v5030 = vunpack.c.l.b16 %v4767
    %v5031 = vunpack.c.l.b16 %v4768
    %v5032 = vunpack.c.l.b16 %v4769
    %v5033 = vunpack.c.l.b16 %v4770
    %v5034 = vunpack.c.l.b16 %v4771
    %v5035 = vunpack.c.l.b16 %v4772
    %v5036 = vunpack.c.l.b16 %v4773
    %v5037 = vunpack.c.l.b16 %v4774
    %v5038 = vunpack.c.l.b16 %v4775
    %v5039 = vunpack.c.l.b16 %v4776
    %v5040 = vunpack.c.l.b16 %v4777
    %v5041 = vunpack.c.l.b16 %v4778
    %v5042 = vunpack.c.l.b16 %v4779
    %v5043 = vunpack.c.l.b16 %v4780
    %v5044 = vunpack.c.l.b16 %v4781
    %v5045 = vunpack.c.l.b16 %v4782
    %v5046 = vunpack.c.l.b16 %v4783
    %v5047 = vunpack.c.l.b16 %v4784
    %v5048 = vunpack.c.l.b16 %v4785
    %v5049 = vunpack.c.l.b16 %v4786
    %v5050 = vunpack.c.l.b16 %v4787
    %v5051 = vunpack.c.l.b16 %v4788
    %v5052 = vunpack.c.l.b16 %v4789
    %v5053 = vunpack.c.l.b16 %v4790
    %v5054 = vunpack.c.l.b16 %v4791
    %v5055 = vunpack.c.l.b16 %v4792
    %v5056 = vunpack.c.l.b16 %v4793
    %v5057 = vunpack.c.l.b16 %v4794
    %v5058 = vunpack.c.l.b16 %v4795
    %v5059 = vunpack.c.l.b16 %v4796
    %v5060 = vunpack.c.l.b16 %v4797
    %v5061 = vunpack.c.l.b16 %v4798
    %v5062 = vunpack.c.l.b16 %v4799
    %v5063 = vunpack.c.l.b16 %v4800
    %v5064 = vunpack.c.l.b16 %v4801
    %v5065 = vunpack.c.l.b16 %v4802
    %v5066 = vunpack.c.l.b16 %v4803
    %v5067 = vunpack.c.l.b16 %v4804
    %v5068 = vunpack.c.l.b16 %v4805
    %v5069 = vunpack.c.l.b16 %v4806
    %v5070 = vunpack.c.l.b16 %v4807
    %v5071 = vunpack.c.l.b16 %v4808
    %v5072 = vunpack.c.l.b16 %v4809
    %v5073 = vunpack.c.l.b16 %v4810
    %v5074 = vunpack.c.l.b16 %v4811
    %v5075 = vunpack.c.l.b16 %v4812
    %v5076 = vunpack.c.l.b16 %v4813
    %v5077 = vunpack.c.l.b16 %v4814
    %v5078 = vunpack.c.l.b16 %v4815
    %v5079 = vunpack.c.l.b16 %v4816
    %v5080 = vunpack.c.l.b16 %v4817
    %v5081 = vunpack.c.l.b16 %v4818
    %v5082 = vunpack.c.l.b16 %v4819
    %v5083 = vunpack.c.l.b16 %v4820
    %v5084 = vunpack.c.l.b16 %v4821
    %v5085 = vunpack.c.l.b16 %v4822
    %v5086 = vunpack.c.l.b16 %v4823
    %v5087 = vunpack.c.l.b16 %v4824
    %v5088 = vunpack.c.l.b16 %v4825
    %v5089 = vunpack.c.l.b16 %v4826
    %v5090 = vunpack.c.l.b16 %v4827
    %v5091 = vunpack.c.l.b16 %v4828
    %v5092 = vunpack.c.l.b16 %v4829
    %v5093 = vunpack.c.l.b16 %v4830
    %v5094 = vunpack.c.l.b16 %v4831
    %v5095 = vunpack.c.l.b16 %v4832
    %v5096 = vunpack.c.l.b16 %v4833
    %v5097 = vunpack.c.l.b16 %v4834
    %v5098 = vunpack.c.l.b16 %v4835
    %v5099 = vunpack.c.l.b16 %v4836
    %v5100 = vunpack.c.l.b16 %v4837
    %v5101 = vunpack.c.l.b16 %v4838
    %v5102 = vunpack.c.l.b16 %v4839
    %v5103 = vunpack.c.l.b16 %v4840
    %v5104 = vunpack.c.l.b16 %v4841
    %v5105 = vunpack.c.l.b16 %v4842
    %v5106 = vunpack.c.l.b16 %v4843
    %v5107 = vunpack.c.l.b16 %v4844
    %v5108 = vunpack.c.l.b16 %v4845
    %v5109 = vunpack.c.l.b16 %v4846
    %v5110 = vunpack.c.l.b16 %v4847
    %v5111 = vunpack.c.l.b16 %v4848
    %v5112 = vunpack.c.l.b16 %v4849
    %v5113 = vunpack.c.l.b16 %v4850
    %v5114 = vunpack.c.l.b16 %v4851
    %v5115 = vunpack.c.l.b16 %v4852
    %v5116 = vunpack.c.l.b16 %v4853
    %v5117 = vunpack.c.l.b16 %v4854
    %v5118 = vunpack.c.l.b16 %v4855
    %v5119 = vunpack.c.l.b16 %v4856
    %v5120 = vpack.c.b16 %v4993, %v4992
    %v5121 = vpack.c.b16 %v4995, %v4994
    %v5122 = vpack.c.b16 %v4997, %v4996
    %v5123 = vpack.c.b16 %v4999, %v4998
    %v5124 = vpack.c.b16 %v5001, %v5000
    %v5125 = vpack.c.b16 %v5003, %v5002
    %v5126 = vpack.c.b16 %v5005, %v5004
    %v5127 = vpack.c.b16 %v5007, %v5006
    %v5128 = vpack.c.b16 %v5009, %v5008
    %v5129 = vpack.c.b16 %v5011, %v5010
    %v5130 = vpack.c.b16 %v5013, %v5012
    %v5131 = vpack.c.b16 %v5015, %v5014
    %v5132 = vpack.c.b16 %v5017, %v5016
    %v5133 = vpack.c.b16 %v5019, %v5018
    %v5134 = vpack.c.b16 %v5021, %v5020
    %v5135 = vpack.c.b16 %v5023, %v5022
    %v5136 = vpack.c.b16 %v5025, %v5024
    %v5137 = vpack.c.b16 %v5027, %v5026
    %v5138 = vpack.c.b16 %v5029, %v5028
    %v5139 = vpack.c.b16 %v5031, %v5030
    %v5140 = vpack.c.b16 %v5033, %v5032
    %v5141 = vpack.c.b16 %v5035, %v5034
    %v5142 = vpack.c.b16 %v5037, %v5036
    %v5143 = vpack.c.b16 %v5039, %v5038
    %v5144 = vpack.c.b16 %v5041, %v5040
    %v5145 = vpack.c.b16 %v5043, %v5042
    %v5146 = vpack.c.b16 %v5045, %v5044
    %v5147 = vpack.c.b16 %v5047, %v5046
    %v5148 = vpack.c.b16 %v5049, %v5048
    %v5149 = vpack.c.b16 %v5051, %v5050
    %v5150 = vpack.c.b16 %v5053, %v5052
    %v5151 = vpack.c.b16 %v5055, %v5054
    %v5152 = vpack.c.b16 %v5057, %v5056
    %v5153 = vpack.c.b16 %v5059, %v5058
    %v5154 = vpack.c.b16 %v5061, %v5060
    %v5155 = vpack.c.b16 %v5063, %v5062
    %v5156 = vpack.c.b16 %v5065, %v5064
    %v5157 = vpack.c.b16 %v5067, %v5066
    %v5158 = vpack.c.b16 %v5069, %v5068
    %v5159 = vpack.c.b16 %v5071, %v5070
    %v5160 = vpack.c.b16 %v5073, %v5072
    %v5161 = vpack.c.b16 %v5075, %v5074
    %v5162 = vpack.c.b16 %v5077, %v5076
    %v5163 = vpack.c.b16 %v5079, %v5078
    %v5164 = vpack.c.b16 %v5081, %v5080
    %v5165 = vpack.c.b16 %v5083, %v5082
    %v5166 = vpack.c.b16 %v5085, %v5084
    %v5167 = vpack.c.b16 %v5087, %v5086
    %v5168 = vpack.c.b16 %v5089, %v5088
    %v5169 = vpack.c.b16 %v5091, %v5090
    %v5170 = vpack.c.b16 %v5093, %v5092
    %v5171 = vpack.c.b16 %v5095, %v5094
    %v5172 = vpack.c.b16 %v5097, %v5096
    %v5173 = vpack.c.b16 %v5099, %v5098
    %v5174 = vpack.c.b16 %v5101, %v5100
    %v5175 = vpack.c.b16 %v5103, %v5102
    %v5176 = vpack.c.b16 %v5105, %v5104
    %v5177 = vpack.c.b16 %v5107, %v5106
    %v5178 = vpack.c.b16 %v5109, %v5108
    %v5179 = vpack.c.b16 %v5111, %v5110
    %v5180 = vpack.c.b16 %v5113, %v5112
    %v5181 = vpack.c.b16 %v5115, %v5114
    %v5182 = vpack.c.b16 %v5117, %v5116
    %v5183 = vpack.c.b16 %v5119, %v5118
    %5248 = vmatprep.subr.bf16.mxu0 0
    %5249 = vmatpush1.bf16.msra.mxu0 %v5127
    %5250 = vmatprep.subr.bf16.mxu0 0
    %5251 = vmatpush1.bf16.msra.mxu0 %v5126
    %5252 = vmatprep.subr.bf16.mxu0 0
    %5253 = vmatpush1.bf16.msra.mxu0 %v5125
    %5254 = vmatprep.subr.bf16.mxu0 0
    %5255 = vmatpush1.bf16.msra.mxu0 %v5124
    %5256 = vmatprep.subr.bf16.mxu0 0
    %5257 = vmatpush1.bf16.msra.mxu0 %v5123
    %5258 = vmatprep.subr.bf16.mxu0 0
    %5259 = vmatpush1.bf16.msra.mxu0 %v5122
    %5260 = vmatprep.subr.bf16.mxu0 0
    %5261 = vmatpush1.bf16.msra.mxu0 %v5121
    %5262 = vmatprep.subr.bf16.mxu0 0
    %5263 = vmatpush1.bf16.msra.mxu0 %v5120
    %5264 = vmatprep.subr.bf16.mxu0 0
    %5265 = vmatpush2.bf16.msra.mxu0 %v5135
    %5266 = vmatprep.subr.bf16.mxu0 0
    %5267 = vmatpush2.bf16.msra.mxu0 %v5134
    %5268 = vmatprep.subr.bf16.mxu0 0
    %5269 = vmatpush2.bf16.msra.mxu0 %v5133
    %5270 = vmatprep.subr.bf16.mxu0 0
    %5271 = vmatpush2.bf16.msra.mxu0 %v5132
    %5272 = vmatprep.subr.bf16.mxu0 0
    %5273 = vmatpush2.bf16.msra.mxu0 %v5131
    %5274 = vmatprep.subr.bf16.mxu0 0
    %5275 = vmatpush2.bf16.msra.mxu0 %v5130
    %5276 = vmatprep.subr.bf16.mxu0 0
    %5277 = vmatpush2.bf16.msra.mxu0 %v5129
    %5278 = vmatprep.subr.bf16.mxu0 0
    %5279 = vmatpush2.bf16.msra.mxu0 %v5128
    %5280 = vmatprep.mubr.bf16.mxu0 %v4722
    %5281 = vmatmul.mubr.bf16.gmra.mxu0 %v4721
    %v5282 = vpop.f32.mrf.mxu0
    %v5283 = vadd.f32 %v4862, %v5282
    %v5284 = vpop.f32.mrf.mxu0
    %v5285 = vpop.f32.mrf.mxu0
    %v5286 = vpop.f32.mrf.mxu0
    %5287 = vdwg.mxu0
    %5288 = vmatprep.subr.bf16.mxu0 0
    %5289 = vmatpush1.bf16.msra.mxu0 %v5143
    %5290 = vmatprep.subr.bf16.mxu0 0
    %5291 = vmatpush1.bf16.msra.mxu0 %v5142
    %5292 = vmatprep.subr.bf16.mxu0 0
    %5293 = vmatpush1.bf16.msra.mxu0 %v5141
    %5294 = vmatprep.subr.bf16.mxu0 0
    %5295 = vmatpush1.bf16.msra.mxu0 %v5140
    %5296 = vmatprep.subr.bf16.mxu0 0
    %5297 = vmatpush1.bf16.msra.mxu0 %v5139
    %5298 = vmatprep.subr.bf16.mxu0 0
    %5299 = vmatpush1.bf16.msra.mxu0 %v5138
    %5300 = vmatprep.subr.bf16.mxu0 0
    %5301 = vmatpush1.bf16.msra.mxu0 %v5137
    %5302 = vmatprep.subr.bf16.mxu0 0
    %5303 = vmatpush1.bf16.msra.mxu0 %v5136
    %5304 = vmatprep.subr.bf16.mxu0 0
    %5305 = vmatpush2.bf16.msra.mxu0 %v5151
    %5306 = vmatprep.subr.bf16.mxu0 0
    %5307 = vmatpush2.bf16.msra.mxu0 %v5150
    %5308 = vmatprep.subr.bf16.mxu0 0
    %5309 = vmatpush2.bf16.msra.mxu0 %v5149
    %5310 = vmatprep.subr.bf16.mxu0 0
    %5311 = vmatpush2.bf16.msra.mxu0 %v5148
    %5312 = vmatprep.subr.bf16.mxu0 0
    %5313 = vmatpush2.bf16.msra.mxu0 %v5147
    %5314 = vmatprep.subr.bf16.mxu0 0
    %5315 = vmatpush2.bf16.msra.mxu0 %v5146
    %5316 = vmatprep.subr.bf16.mxu0 0
    %5317 = vmatpush2.bf16.msra.mxu0 %v5145
    %5318 = vmatprep.subr.bf16.mxu0 0
    %5319 = vmatpush2.bf16.msra.mxu0 %v5144
    %5320 = vmatprep.mubr.bf16.mxu0 %v4724
    %5321 = vmatmul.mubr.bf16.gmra.mxu0 %v4723
    %v5322 = vpop.f32.mrf.mxu0
    %v5323 = vadd.f32 %v5283, %v5322
    %v5324 = vpop.f32.mrf.mxu0
    %v5325 = vpop.f32.mrf.mxu0
    %v5326 = vpop.f32.mrf.mxu0
    %5327 = vdwg.mxu0
    %5328 = vmatprep.subr.bf16.mxu0 0
    %5329 = vmatpush1.bf16.msra.mxu0 %v5159
    %5330 = vmatprep.subr.bf16.mxu0 0
    %5331 = vmatpush1.bf16.msra.mxu0 %v5158
    %5332 = vmatprep.subr.bf16.mxu0 0
    %5333 = vmatpush1.bf16.msra.mxu0 %v5157
    %5334 = vmatprep.subr.bf16.mxu0 0
    %5335 = vmatpush1.bf16.msra.mxu0 %v5156
    %5336 = vmatprep.subr.bf16.mxu0 0
    %5337 = vmatpush1.bf16.msra.mxu0 %v5155
    %5338 = vmatprep.subr.bf16.mxu0 0
    %5339 = vmatpush1.bf16.msra.mxu0 %v5154
    %5340 = vmatprep.subr.bf16.mxu0 0
    %5341 = vmatpush1.bf16.msra.mxu0 %v5153
    %5342 = vmatprep.subr.bf16.mxu0 0
    %5343 = vmatpush1.bf16.msra.mxu0 %v5152
    %5344 = vmatprep.subr.bf16.mxu0 0
    %5345 = vmatpush2.bf16.msra.mxu0 %v5167
    %5346 = vmatprep.subr.bf16.mxu0 0
    %5347 = vmatpush2.bf16.msra.mxu0 %v5166
    %5348 = vmatprep.subr.bf16.mxu0 0
    %5349 = vmatpush2.bf16.msra.mxu0 %v5165
    %5350 = vmatprep.subr.bf16.mxu0 0
    %5351 = vmatpush2.bf16.msra.mxu0 %v5164
    %5352 = vmatprep.subr.bf16.mxu0 0
    %5353 = vmatpush2.bf16.msra.mxu0 %v5163
    %5354 = vmatprep.subr.bf16.mxu0 0
    %5355 = vmatpush2.bf16.msra.mxu0 %v5162
    %5356 = vmatprep.subr.bf16.mxu0 0
    %5357 = vmatpush2.bf16.msra.mxu0 %v5161
    %5358 = vmatprep.subr.bf16.mxu0 0
    %5359 = vmatpush2.bf16.msra.mxu0 %v5160
    %5360 = vmatprep.mubr.bf16.mxu0 %v4726
    %5361 = vmatmul.mubr.bf16.gmra.mxu0 %v4725
    %v5362 = vpop.f32.mrf.mxu0
    %v5363 = vadd.f32 %v5323, %v5362
    %v5364 = vpop.f32.mrf.mxu0
    %v5365 = vpop.f32.mrf.mxu0
    %v5366 = vpop.f32.mrf.mxu0
    %5367 = vdwg.mxu0
    %5368 = vmatprep.subr.bf16.mxu0 0
    %5369 = vmatpush1.bf16.msra.mxu0 %v5175
    %5370 = vmatprep.subr.bf16.mxu0 0
    %5371 = vmatpush1.bf16.msra.mxu0 %v5174
    %5372 = vmatprep.subr.bf16.mxu0 0
    %5373 = vmatpush1.bf16.msra.mxu0 %v5173
    %5374 = vmatprep.subr.bf16.mxu0 0
    %5375 = vmatpush1.bf16.msra.mxu0 %v5172
    %5376 = vmatprep.subr.bf16.mxu0 0
    %5377 = vmatpush1.bf16.msra.mxu0 %v5171
    %5378 = vmatprep.subr.bf16.mxu0 0
    %5379 = vmatpush1.bf16.msra.mxu0 %v5170
    %5380 = vmatprep.subr.bf16.mxu0 0
    %5381 = vmatpush1.bf16.msra.mxu0 %v5169
    %5382 = vmatprep.subr.bf16.mxu0 0
    %5383 = vmatpush1.bf16.msra.mxu0 %v5168
    %5384 = vmatprep.subr.bf16.mxu0 0
    %5385 = vmatpush2.bf16.msra.mxu0 %v5183
    %5386 = vmatprep.subr.bf16.mxu0 0
    %5387 = vmatpush2.bf16.msra.mxu0 %v5182
    %5388 = vmatprep.subr.bf16.mxu0 0
    %5389 = vmatpush2.bf16.msra.mxu0 %v5181
    %5390 = vmatprep.subr.bf16.mxu0 0
    %5391 = vmatpush2.bf16.msra.mxu0 %v5180
    %5392 = vmatprep.subr.bf16.mxu0 0
    %5393 = vmatpush2.bf16.msra.mxu0 %v5179
    %5394 = vmatprep.subr.bf16.mxu0 0
    %5395 = vmatpush2.bf16.msra.mxu0 %v5178
    %5396 = vmatprep.subr.bf16.mxu0 0
    %5397 = vmatpush2.bf16.msra.mxu0 %v5177
    %5398 = vmatprep.subr.bf16.mxu0 0
    %5399 = vmatpush2.bf16.msra.mxu0 %v5176
    %5400 = vmatprep.mubr.bf16.mxu0 %v4728
    %5401 = vmatmul.mubr.bf16.gmra.mxu0 %v4727
    %v5402 = vpop.f32.mrf.mxu0
    %v5403 = vadd.f32 %v5363, %v5402
    %v5404 = vpop.f32.mrf.mxu0
    %v5405 = vpop.f32.mrf.mxu0
    %v5406 = vpop.f32.mrf.mxu0
    %5407 = vdwg.mxu0
    %vm5408 = vcmask 1041408
    %v5409 = vsel %vm5408, %v5403, -inf
    %5410 = vmax.xlane.f32.xlu0 %v5409
    %v5411 = vpop.xlane.xlu0 %5410
    %v5412 = vsub.f32 %v5403, %v5411
    %v5413 = vmul.f32 %v5412, 1.442695
    %v5414 = vpow.pop %v5413
    %v5415 = vsel %vm5408, %v5414, 0.0
    %5416 = vadd.xlane.f32.xlu0 %v5415
    %v5417 = vpop.xlane.xlu0 %5416
    %v5418 = vlog2.pop %v5417
    %v5419 = vmul.f32 %v5418, 0.6931472
    %v5420 = vsub.f32 %v5412, %v5419
    %5421 = vst [vmem:[#allocation7] sm:$0x3] %v5420
    // Predicated region
    $region98: #{cnn_forward.1} parent=1 // pred_check
      _
    $region99: #{cnn_forward.1} parent=1 // pred_check_branch
      %5423 = sbr.rel (0) target = $region101
    $region100: #{cnn_forward.1} parent=1 // pred_region
      %s5425 = ssub.s32 32, 32
      %5426 = vsyncadd [#allocation8], %s5425
      %s5428 = sshll.u32 [#allocation7], 4
      %s5429 = int_to_ptr.vmem [resolvable:$true] %s5428
      %5431 = dma.vmem_to_hbm [thread:$0]  %s5429, 32, %s9, [#allocation8]
    $region101: #{cnn_forward.1} parent=1 // pred_fallthru
      _
    // Predicated region
    $region102: #{cnn_forward.1} parent=1 // pred_check
      _
    $region103: #{cnn_forward.1} parent=1 // pred_check_branch
      %5433 = sbr.rel (0) target = $region105
    $region104: #{cnn_forward.1} parent=1 // pred_region
      %5434 = dma.done [#allocation8], 32
    $region105: #{cnn_forward.1} parent=1 // pred_fallthru
      _
    %5435 = vsyncpa [#allocation8], 1
  %5436 = vsyncmov [#allocation6]
  %s5437 = vpop.sfrf %5436
  %p5438 = scmp.eq.s32.totalorder %s5437, 0
  %p5439 = pneg %p5438
  %5441 = shalt.err (%p5439)
  %s5442 = scalar_lea.sflag [#allocation6], 1
  %5443 = vsyncmov %s5442
  %s5444 = vpop.sfrf %5443
  %p5445 = scmp.eq.s32.totalorder %s5444, 0
  %p5446 = pneg %p5445
  %5448 = shalt.err (%p5446)

</llo_original>
